<compile_context>
chip_gen: v7x
topology: tpu7x:2x2x1
jax: 0.10.0
libtpu: 0.0.40
codegen_flags: <defaults>
</compile_context>

<pallas_src>
import functools

import jax
import jax.numpy as jnp
from jax.experimental import pallas as pl
from jax.experimental.pallas import tpu as pltpu


def _vmem_budget_bytes():
    """Generation-aware scoped-VMEM request (v5e/v6e: 128 MiB phys, v7x: 64 MiB)."""
    cap = 64 * 1024 * 1024                 # conservative fallback (= v7x physical)
    try:
        cap = int(pltpu.get_tpu_info().vmem_capacity_bytes) or cap
    except Exception:
        pass
    # Leave headroom for Mosaic internals; never below the common scoped default.
    return int(max(32 * 1024 * 1024, min((cap * 3) // 4, 96 * 1024 * 1024)))


def _weighted_sq_accumulate(lvT, rvT, s_ref, out_ref, acc_ref):
    """Shared tail.  lvT/rvT: (D, tb) f32 gathered vectors (batch on lanes).
    s_ref: (2, tb) packed [c; w] with c = l_bias + r_bias - logX (0 on pad rows).
    Accumulates w * (dot(l, r) + c)^2 per lane; scalar sum written on last step."""
    step = pl.program_id(0)

    @pl.when(step == 0)
    def _():
        acc_ref[...] = jnp.zeros_like(acc_ref)

    # Per-pair dot product: reduce over embed_dim (sublane axis) -> (1, tb).
    dot = jnp.sum(lvT * rvT, axis=0, keepdims=True)
    c = s_ref[0:1, :]                       # l_bias + r_bias - logX
    w = s_ref[1:2, :]                       # weightX (0 on pad rows)
    err = dot + c
    acc_ref[...] += w * (err * err)         # lane-dense vector accumulator

    @pl.when(step == pl.num_programs(0) - 1)
    def _():
        # Single cross-lane reduce, once per kernel invocation (not per step).
        out_ref[...] = jnp.sum(acc_ref[...], keepdims=True)   # (1, 1)


def _glove_fused_kernel(lT_ref, rT_ref, ii_ref, jj_ref, s_ref, out_ref, acc_ref):
    """VMEM-resident tables (D, Vp); in-kernel row gather via one-hot matmul on
    the MXU, then the shared weighted-square accumulation."""
    vocab = lT_ref.shape[1]
    tb = ii_ref.shape[1]
    vocab_iota = jax.lax.broadcasted_iota(jnp.int32, (vocab, tb), 0)
    oh_i = (vocab_iota == ii_ref[...]).astype(jnp.float32)     # (Vp, tb)
    oh_j = (vocab_iota == jj_ref[...]).astype(jnp.float32)
    lvT = jnp.dot(lT_ref[...].astype(jnp.float32), oh_i,
                  preferred_element_type=jnp.float32)          # (D, tb)
    rvT = jnp.dot(rT_ref[...].astype(jnp.float32), oh_j,
                  preferred_element_type=jnp.float32)
    _weighted_sq_accumulate(lvT, rvT, s_ref, out_ref, acc_ref)


def _glove_gathered_kernel(lvT_ref, rvT_ref, s_ref, out_ref, acc_ref):
    """Fallback for tables that do not fit VMEM: vectors gathered by XLA glue
    and streamed transposed (D, tb) so batch stays lane-dense."""
    _weighted_sq_accumulate(lvT_ref[...].astype(jnp.float32),
                            rvT_ref[...].astype(jnp.float32),
                            s_ref, out_ref, acc_ref)


def glove_loss(L_vecs, R_vecs, L_bias, R_bias, logX, weightX, i_idx, j_idx,
               *, tb=2048, vec_dtype=None, use_fused=None):
    """Pallas-accelerated GloVe batch loss.  Returns a scalar f32.

    vec_dtype: optional storage dtype for the embedding-vector stream (e.g.
      jnp.bfloat16 halves HBM bytes); dot/accumulation stay f32 in-kernel.
      Default keeps the table dtype for exact parity with the reference.
    use_fused: force/forbid the in-kernel one-hot gather; default auto-selects
      it whenever both tables fit comfortably in VMEM.
    """
    V, D = L_vecs.shape
    B = int(i_idx.shape[0])

    vdtype = jnp.dtype(vec_dtype if vec_dtype is not None else L_vecs.dtype)
    vbytes = vdtype.itemsize
    Vp = ((V + 7) // 8) * 8                     # sublane-align vocab for the one-hot

    if use_fused is None:
        use_fused = (2 * Vp * D * vbytes <= 4 * 1024 * 1024) and (Vp <= 1024)

    # ---- glue: per-pair scalars (tiny (B,) gathers), packed lane-dense as (2, B)
    lb = jnp.take(L_bias[:, 0], i_idx, axis=0)
    rb = jnp.take(R_bias[:, 0], j_idx, axis=0)
    c = (lb + rb - logX).astype(jnp.float32)
    w = weightX.astype(jnp.float32)

    # ---- batch tile: lane-dense (multiple of 128), capped by the VMEM budget
    vmem_budget = _vmem_budget_bytes()
    if use_fused:
        # in-kernel temporaries per batch column: 2 one-hot cols + lvT/rvT/prod
        per_row = 4 * (2 * Vp + 4 * D)
    else:
        # 2 streamed vec inputs x 2 pipeline buffers
        per_row = 2 * 2 * D * vbytes
    tb_cap = max(128, ((vmem_budget // 2) // per_row) // 128 * 128)
    tb = max(128, (min(tb, tb_cap) // 128) * 128)
    tb = min(tb, ((B + 127) // 128) * 128)

    nb = (B + tb - 1) // tb                     # grid steps (reduction over batch)
    b_pad = nb * tb
    pad = b_pad - B                             # pad rows carry w = 0 -> contribute 0

    s = jnp.stack([jnp.pad(c, (0, pad)), jnp.pad(w, (0, pad))], axis=0)   # (2, b_pad)

    out_spec = pl.BlockSpec((1, 1), lambda b: (0, 0))
    s_spec = pl.BlockSpec((2, tb), lambda b: (0, b))
    scratch = [pltpu.VMEM((1, tb), jnp.float32)]
    compiler_params = pltpu.CompilerParams(
        dimension_semantics=("arbitrary",),
        vmem_limit_bytes=vmem_budget,
    )

    if use_fused:
        ii = jnp.pad(i_idx.astype(jnp.int32), (0, pad)).reshape(1, b_pad)
        jj = jnp.pad(j_idx.astype(jnp.int32), (0, pad)).reshape(1, b_pad)
        # Tables transposed to (D, Vp): embed on sublanes, vocab on lanes.
        # Constant index_map -> fetched into VMEM once, resident for all steps.
        lT = jnp.pad(L_vecs.astype(vdtype).T, ((0, 0), (0, Vp - V)))
        rT = jnp.pad(R_vecs.astype(vdtype).T, ((0, 0), (0, Vp - V)))
        table_spec = pl.BlockSpec((D, Vp), lambda b: (0, 0))
        idx_spec = pl.BlockSpec((1, tb), lambda b: (0, b))
        total = pl.pallas_call(
            _glove_fused_kernel,
            out_shape=jax.ShapeDtypeStruct((1, 1), jnp.float32),
            grid_spec=pltpu.PrefetchScalarGridSpec(
                num_scalar_prefetch=0,
                grid=(nb,),
                in_specs=[table_spec, table_spec, idx_spec, idx_spec, s_spec],
                out_specs=out_spec,
                scratch_shapes=scratch),
            compiler_params=compiler_params,
        )(lT, rT, ii, jj, s)
    else:
        # TODO(synk): replace this glue gather with a scalar-prefetch +
        # pl.Element / manual-DMA row gather for tables that do not fit VMEM.
        lvT = jnp.pad(jnp.take(L_vecs, i_idx, axis=0).astype(vdtype).T,
                      ((0, 0), (0, pad)))       # (D, b_pad), batch on lanes
        rvT = jnp.pad(jnp.take(R_vecs, j_idx, axis=0).astype(vdtype).T,
                      ((0, 0), (0, pad)))
        vec_spec = pl.BlockSpec((D, tb), lambda b: (0, b))
        total = pl.pallas_call(
            _glove_gathered_kernel,
            out_shape=jax.ShapeDtypeStruct((1, 1), jnp.float32),
            grid_spec=pltpu.PrefetchScalarGridSpec(
                num_scalar_prefetch=0,
                grid=(nb,),
                in_specs=[vec_spec, vec_spec, s_spec],
                out_specs=out_spec,
                scratch_shapes=scratch),
            compiler_params=compiler_params,
        )(lvT, rvT, s)

    return total[0, 0] / jnp.float32(B)


def glove_loss_ref(L_vecs, R_vecs, L_bias, R_bias, logX, weightX, i_idx, j_idx):
    """Pure-JAX reference mirroring the PyTorch code exactly."""
    l_vecs = L_vecs[i_idx]
    r_vecs = R_vecs[j_idx]
    l_bias = L_bias[i_idx].squeeze()
    r_bias = R_bias[j_idx].squeeze()
    x = (jnp.sum(l_vecs * r_vecs, axis=1) + l_bias + r_bias - logX) ** 2
    return jnp.mean(weightX * x)


if __name__ == "__main__":
    # Deterministic synthetic parameters (no checkpoint loading).
    vocab_len = 64
    embed_dim = 128          # lane-aligned
    batch = 2000             # deliberately NOT a tile multiple -> exercises padding

    key = jax.random.PRNGKey(0)
    k1, k2, k3, k4, k5, k6, k7, k8 = jax.random.split(key, 8)

    # nn.Embedding default init is N(0, 1).
    L_vecs = jax.random.normal(k1, (vocab_len, embed_dim), dtype=jnp.float32)
    R_vecs = jax.random.normal(k2, (vocab_len, embed_dim), dtype=jnp.float32)
    L_bias = jax.random.normal(k3, (vocab_len, 1), dtype=jnp.float32)
    R_bias = jax.random.normal(k4, (vocab_len, 1), dtype=jnp.float32)

    i_idx = jax.random.randint(k5, (batch,), 0, vocab_len, dtype=jnp.int32)
    j_idx = jax.random.randint(k6, (batch,), 0, vocab_len, dtype=jnp.int32)
    logX = jax.random.uniform(k7, (batch,), dtype=jnp.float32, minval=0.1, maxval=5.0)
    weightX = jax.random.uniform(k8, (batch,), dtype=jnp.float32, minval=0.0, maxval=1.0)

    args = (L_vecs, R_vecs, L_bias, R_bias, logX, weightX, i_idx, j_idx)
    ref = jax.block_until_ready(glove_loss_ref(*args))

    # 1) fused in-kernel gather (default path; tables resident in VMEM).
    #    Slightly loose tolerance: the one-hot gather runs on the MXU, which may
    #    evaluate the f32 matmul with split-bf16 passes.
    fused = jax.block_until_ready(jax.jit(glove_loss)(*args))
    assert jnp.allclose(fused, ref, rtol=1e-2, atol=1e-3), (fused, ref)

    # 2) fused path with a small tile -> multi-step grid reduction + padding.
    fused_small = jax.block_until_ready(
        jax.jit(functools.partial(glove_loss, tb=512))(*args))
    assert jnp.allclose(fused_small, ref, rtol=1e-2, atol=1e-3), (fused_small, ref)

    # 3) glue-gather fallback (path used when tables do not fit VMEM).
    gathered = jax.block_until_ready(
        jax.jit(functools.partial(glove_loss, tb=512, use_fused=False))(*args))
    assert jnp.allclose(gathered, ref, rtol=1e-4, atol=1e-5), (gathered, ref)

    print("KERNEL_OK")
</pallas_src>

<mosaic_0001>
module attributes {stable_mosaic.version = 11 : i64} {
  func.func @_glove_fused_kernel(%arg0: i32, %arg1: memref<128x64xf32, #tpu.memory_space<vmem>>, %arg2: memref<128x64xf32, #tpu.memory_space<vmem>>, %arg3: memref<1x2048xi32, #tpu.memory_space<vmem>>, %arg4: memref<1x2048xi32, #tpu.memory_space<vmem>>, %arg5: memref<2x2048xf32, #tpu.memory_space<vmem>>, %arg6: memref<1x1xf32, #tpu.memory_space<vmem>>, %arg7: memref<1x2048xf32, #tpu.memory_space<vmem>>) attributes {dimension_semantics = [#tpu.dimension_semantics<arbitrary>], iteration_bounds = array<i64: 1>, scalar_prefetch = 0 : i64, scratch_operands = 1 : i64, tpu.core_type = #tpu.core_type<tc>, window_params = [{pipeline_mode = #tpu.pipeline_mode<synchronous>, transform_indices = @transform_0, window_bounds = array<i64: 128, 64>}, {pipeline_mode = #tpu.pipeline_mode<synchronous>, transform_indices = @transform_1, window_bounds = array<i64: 128, 64>}, {transform_indices = @transform_2, window_bounds = array<i64: 1, 2048>}, {transform_indices = @transform_3, window_bounds = array<i64: 1, 2048>}, {transform_indices = @transform_4, window_bounds = array<i64: 2, 2048>}, {pipeline_mode = #tpu.pipeline_mode<synchronous>, transform_indices = @transform_5, window_bounds = array<i64: 1, 1>}]} {
    %0 = tpu.iota {dimensions = array<i32: 0>} : vector<64x2048xi32>
    %c0 = arith.constant 0 : index
    %c0_0 = arith.constant 0 : index
    %1 = vector.load %arg3[%c0, %c0_0] : memref<1x2048xi32, #tpu.memory_space<vmem>>, vector<1x2048xi32>
    %2 = vector.broadcast %1 : vector<1x2048xi32> to vector<64x2048xi32>
    %3 = arith.cmpi eq, %0, %2 : vector<64x2048xi32>
    %4 = arith.extui %3 : vector<64x2048xi1> to vector<64x2048xi32>
    %5 = arith.sitofp %4 : vector<64x2048xi32> to vector<64x2048xf32>
    %c0_1 = arith.constant 0 : index
    %c0_2 = arith.constant 0 : index
    %6 = vector.load %arg4[%c0_1, %c0_2] : memref<1x2048xi32, #tpu.memory_space<vmem>>, vector<1x2048xi32>
    %7 = vector.broadcast %6 : vector<1x2048xi32> to vector<64x2048xi32>
    %8 = arith.cmpi eq, %0, %7 : vector<64x2048xi32>
    %9 = arith.extui %8 : vector<64x2048xi1> to vector<64x2048xi32>
    %10 = arith.sitofp %9 : vector<64x2048xi32> to vector<64x2048xf32>
    %c0_3 = arith.constant 0 : index
    %c0_4 = arith.constant 0 : index
    %11 = vector.load %arg1[%c0_3, %c0_4] : memref<128x64xf32, #tpu.memory_space<vmem>>, vector<128x64xf32>
    %cst = arith.constant dense<0.000000e+00> : vector<128x2048xf32>
    %12 = tpu.matmul %11, %5, %cst {dimension_numbers = #tpu.dot_dimension_numbers<[1], [0], [0], [1], [0, 0, 1, 1], [], []>} : vector<128x64xf32>, vector<64x2048xf32>, vector<128x2048xf32> -> vector<128x2048xf32>
    %c0_5 = arith.constant 0 : index
    %c0_6 = arith.constant 0 : index
    %13 = vector.load %arg2[%c0_5, %c0_6] : memref<128x64xf32, #tpu.memory_space<vmem>>, vector<128x64xf32>
    %cst_7 = arith.constant dense<0.000000e+00> : vector<128x2048xf32>
    %14 = tpu.matmul %13, %10, %cst_7 {dimension_numbers = #tpu.dot_dimension_numbers<[1], [0], [0], [1], [0, 0, 1, 1], [], []>} : vector<128x64xf32>, vector<64x2048xf32>, vector<128x2048xf32> -> vector<128x2048xf32>
    %c0_i32 = arith.constant 0 : i32
    %15 = arith.cmpi eq, %arg0, %c0_i32 : i32
    %16 = arith.extui %15 : i1 to i32
    %c0_i32_8 = arith.constant 0 : i32
    %17 = arith.cmpi ne, %16, %c0_i32_8 : i32
    scf.if %17 {
      %cst_19 = arith.constant 0.000000e+00 : f32
      %32 = vector.broadcast %cst_19 : f32 to vector<1x2048xf32>
      %c0_20 = arith.constant 0 : index
      %c0_21 = arith.constant 0 : index
      %33 = vector.load %arg7[%c0_20, %c0_21] : memref<1x2048xf32, #tpu.memory_space<vmem>>, vector<1x2048xf32>
      tpu.vector_store %arg7[%c0_20, %c0_21], %32 {strides = array<i32>} : memref<1x2048xf32, #tpu.memory_space<vmem>>, vector<1x2048xf32>,
    } else {
    }
    %18 = arith.mulf %12, %14 : vector<128x2048xf32>
    %cst_9 = arith.constant dense<0.000000e+00> : vector<2048xf32>
    %19 = vector.multi_reduction <add>, %18, %cst_9 [0] : vector<128x2048xf32> to vector<2048xf32>
    %20 = vector.shape_cast %19 : vector<2048xf32> to vector<1x2048xf32>
    %c0_10 = arith.constant 0 : index
    %c0_11 = arith.constant 0 : index
    %21 = vector.load %arg5[%c0_10, %c0_11] : memref<2x2048xf32, #tpu.memory_space<vmem>>, vector<1x2048xf32>
    %c1 = arith.constant 1 : index
    %c0_12 = arith.constant 0 : index
    %22 = vector.load %arg5[%c1, %c0_12] : memref<2x2048xf32, #tpu.memory_space<vmem>>, vector<1x2048xf32>
    %23 = arith.addf %20, %21 : vector<1x2048xf32>
    %c0_13 = arith.constant 0 : index
    %c0_14 = arith.constant 0 : index
    %24 = vector.load %arg7[%c0_13, %c0_14] : memref<1x2048xf32, #tpu.memory_space<vmem>>, vector<1x2048xf32>
    %25 = arith.mulf %23, %23 : vector<1x2048xf32>
    %26 = arith.mulf %22, %25 : vector<1x2048xf32>
    %27 = arith.addf %24, %26 : vector<1x2048xf32>
    %c0_15 = arith.constant 0 : index
    %c0_16 = arith.constant 0 : index
    %28 = vector.load %arg7[%c0_15, %c0_16] : memref<1x2048xf32, #tpu.memory_space<vmem>>, vector<1x2048xf32>
    tpu.vector_store %arg7[%c0_15, %c0_16], %27 {strides = array<i32>} : memref<1x2048xf32, #tpu.memory_space<vmem>>, vector<1x2048xf32>,
    %c0_i32_17 = arith.constant 0 : i32
    %29 = arith.cmpi eq, %arg0, %c0_i32_17 : i32
    %30 = arith.extui %29 : i1 to i32
    %c0_i32_18 = arith.constant 0 : i32
    %31 = arith.cmpi ne, %30, %c0_i32_18 : i32
    scf.if %31 {
      %c0_19 = arith.constant 0 : index
      %c0_20 = arith.constant 0 : index
      %32 = vector.load %arg7[%c0_19, %c0_20] : memref<1x2048xf32, #tpu.memory_space<vmem>>, vector<1x2048xf32>
      %33 = vector.shape_cast %32 : vector<1x2048xf32> to vector<1x1x2048xf32>
      %cst_21 = arith.constant dense<0.000000e+00> : vector<1xf32>
      %34 = vector.multi_reduction <add>, %33, %cst_21 [1, 2] : vector<1x1x2048xf32> to vector<1xf32>
      %35 = vector.shape_cast %34 : vector<1xf32> to vector<1x1x1xf32>
      %36 = vector.extract %35[0, 0, 0] : f32 from vector<1x1x1xf32>
      %37 = vector.broadcast %36 : f32 to vector<1x1xf32>
      %c0_22 = arith.constant 0 : index
      %c0_23 = arith.constant 0 : index
      %38 = vector.load %arg6[%c0_22, %c0_23] : memref<1x1xf32, #tpu.memory_space<vmem>>, vector<1x1xf32>
      tpu.vector_store %arg6[%c0_22, %c0_23], %37 {strides = array<i32>} : memref<1x1xf32, #tpu.memory_space<vmem>>, vector<1x1xf32>,
    } else {
    }
    return
  }
  func.func @transform_0(%arg0: i32) -> (i32, i32) {
    %c0_i32 = arith.constant 0 : i32
    %c0_i32_0 = arith.constant 0 : i32
    %c0_i32_1 = arith.constant 0 : i32
    return %c0_i32, %c0_i32_0 : i32, i32
  }
  func.func @transform_1(%arg0: i32) -> (i32, i32) {
    %c0_i32 = arith.constant 0 : i32
    %c0_i32_0 = arith.constant 0 : i32
    %c0_i32_1 = arith.constant 0 : i32
    return %c0_i32, %c0_i32_0 : i32, i32
  }
  func.func @transform_2(%arg0: i32) -> (i32, i32) {
    %c0_i32 = arith.constant 0 : i32
    %c0_i32_0 = arith.constant 0 : i32
    return %c0_i32, %arg0 : i32, i32
  }
  func.func @transform_3(%arg0: i32) -> (i32, i32) {
    %c0_i32 = arith.constant 0 : i32
    %c0_i32_0 = arith.constant 0 : i32
    return %c0_i32, %arg0 : i32, i32
  }
  func.func @transform_4(%arg0: i32) -> (i32, i32) {
    %c0_i32 = arith.constant 0 : i32
    %c0_i32_0 = arith.constant 0 : i32
    return %c0_i32, %arg0 : i32, i32
  }
  func.func @transform_5(%arg0: i32) -> (i32, i32) {
    %c0_i32 = arith.constant 0 : i32
    %c0_i32_0 = arith.constant 0 : i32
    %c0_i32_1 = arith.constant 0 : i32
    return %c0_i32, %c0_i32_0 : i32, i32
  }
}

</mosaic_0001>

<llo_original>
// kernel: glove_loss.1
$region0: #{glove_loss.1}
  #allocation0 [shape = 'u32[]', space=smem, size = 0x4, offset = 0x4, fixed_abs, tag = 'smem constant byte address 0x4 - core index']
  #allocation1 [shape = 'u32[144,128]{1,0:T(1,128)}', space=vmem, size = 0x12000, scoped, tag = 'internal scratch']
  #allocation2 [shape = 'f32[1,2048]{1,0:T(1,128)}', space=vmem, size = 0x2000, scoped, tag = 'scratch operand']
  %s0 = inlined_call_operand.vmem [shape: f32[128,64], index: 0, kind: input, shape index: {}]
  %s1 = inlined_call_operand.vmem [shape: f32[128,64], index: 1, kind: input, shape index: {}]
  %s2 = inlined_call_operand.vmem [shape: s32[1,2048], index: 2, kind: input, shape index: {}]
  %s3 = inlined_call_operand.vmem [shape: s32[1,2048], index: 3, kind: input, shape index: {}]
  %s4 = inlined_call_operand.vmem [shape: f32[2,2048], index: 4, kind: input, shape index: {}]
  %s5 = inlined_call_operand.hbm [shape: f32[1,1], index: 5, kind: output, shape index: {}]
  %s6 = sld [smem:[#allocation0]]
  $region38: #{glove_loss.1} parent=0
    _
  %s8 = ssub.s32 1, %s6
  %s9 = scalar_select 0, %s8, %s6
  $region1: #{glove_loss.1} parent=0
    #allocation3 [shape = 'u8[512]{0}', space=vmem, size = 0x400, scoped, tag = 'output window, operand 0, single buffered']
    #allocation4 [shape = 's32[1]{0}', space=sflag, size = 0x4, scoped, tag = 'scoped memory for glove_loss.1']
    %10 = vsyncpa [#allocation4], 0
    // Predicated region
    $region2: #{glove_loss.1} parent=1 // pred_check
      _
    $region3: #{glove_loss.1} parent=1 // pred_check_branch
      %12 = sbr.rel (0) target = $region5
    $region4: #{glove_loss.1} parent=1 // pred_region
      _
    $region5: #{glove_loss.1} parent=1 // pred_fallthru
      _
    // Predicated region
    $region6: #{glove_loss.1} parent=1 // pred_check
      _
    $region7: #{glove_loss.1} parent=1 // pred_check_branch
      %14 = sbr.rel (0) target = $region9
    $region8: #{glove_loss.1} parent=1 // pred_region
      _
    $region9: #{glove_loss.1} parent=1 // pred_fallthru
      _
    // Predicated region
    $region10: #{glove_loss.1} parent=1 // pred_check
      _
    $region11: #{glove_loss.1} parent=1 // pred_check_branch
      %16 = sbr.rel (0) target = $region13
    $region12: #{glove_loss.1} parent=1 // pred_region
      _
    $region13: #{glove_loss.1} parent=1 // pred_fallthru
      _
    // Predicated region
    $region14: #{glove_loss.1} parent=1 // pred_check
      _
    $region15: #{glove_loss.1} parent=1 // pred_check_branch
      %18 = sbr.rel (0) target = $region17
    $region16: #{glove_loss.1} parent=1 // pred_region
      _
    $region17: #{glove_loss.1} parent=1 // pred_fallthru
      _
    // Predicated region
    $region18: #{glove_loss.1} parent=1 // pred_check
      _
    $region19: #{glove_loss.1} parent=1 // pred_check_branch
      %20 = sbr.rel (0) target = $region21
    $region20: #{glove_loss.1} parent=1 // pred_region
      _
    $region21: #{glove_loss.1} parent=1 // pred_fallthru
      _
    %v21 = vlaneseq
    %v22 = vshrl.u32 %v21, 7
    %v23 = vadd.s32 %v22, 8
    %v24 = vadd.s32 %v22, 16
    %v25 = vadd.s32 %v22, 24
    %v26 = vadd.s32 %v22, 32
    %v27 = vadd.s32 %v22, 40
    %v28 = vadd.s32 %v22, 48
    %v29 = vadd.s32 %v22, 56
    %v30 = vld [vmem:[%s2] sm:$0xff]
    %v31 = vld [vmem:[%s2 + $0x8] sm:$0xff]
    %v32 = vlaneseq
    %v33 = vshrl.u32 %v32, 7
    %v34 = vsub.s32 0, %v33
    %v35 = vrot.slane %v30, %v34
    %v36 = vlaneseq
    %v37 = vshrl.u32 %v36, 7
    %v38 = vsub.s32 1, %v37
    %v39 = vrot.slane %v30, %v38
    %v40 = vlaneseq
    %v41 = vshrl.u32 %v40, 7
    %v42 = vsub.s32 2, %v41
    %v43 = vrot.slane %v30, %v42
    %v44 = vlaneseq
    %v45 = vshrl.u32 %v44, 7
    %v46 = vsub.s32 3, %v45
    %v47 = vrot.slane %v30, %v46
    %v48 = vlaneseq
    %v49 = vshrl.u32 %v48, 7
    %v50 = vsub.s32 4, %v49
    %v51 = vrot.slane %v30, %v50
    %v52 = vlaneseq
    %v53 = vshrl.u32 %v52, 7
    %v54 = vsub.s32 5, %v53
    %v55 = vrot.slane %v30, %v54
    %v56 = vlaneseq
    %v57 = vshrl.u32 %v56, 7
    %v58 = vsub.s32 6, %v57
    %v59 = vrot.slane %v30, %v58
    %v60 = vlaneseq
    %v61 = vshrl.u32 %v60, 7
    %v62 = vsub.s32 7, %v61
    %v63 = vrot.slane %v30, %v62
    %v64 = vlaneseq
    %v65 = vshrl.u32 %v64, 7
    %v66 = vsub.s32 0, %v65
    %v67 = vrot.slane %v31, %v66
    %v68 = vlaneseq
    %v69 = vshrl.u32 %v68, 7
    %v70 = vsub.s32 1, %v69
    %v71 = vrot.slane %v31, %v70
    %v72 = vlaneseq
    %v73 = vshrl.u32 %v72, 7
    %v74 = vsub.s32 2, %v73
    %v75 = vrot.slane %v31, %v74
    %v76 = vlaneseq
    %v77 = vshrl.u32 %v76, 7
    %v78 = vsub.s32 3, %v77
    %v79 = vrot.slane %v31, %v78
    %v80 = vlaneseq
    %v81 = vshrl.u32 %v80, 7
    %v82 = vsub.s32 4, %v81
    %v83 = vrot.slane %v31, %v82
    %v84 = vlaneseq
    %v85 = vshrl.u32 %v84, 7
    %v86 = vsub.s32 5, %v85
    %v87 = vrot.slane %v31, %v86
    %v88 = vlaneseq
    %v89 = vshrl.u32 %v88, 7
    %v90 = vsub.s32 6, %v89
    %v91 = vrot.slane %v31, %v90
    %v92 = vlaneseq
    %v93 = vshrl.u32 %v92, 7
    %v94 = vsub.s32 7, %v93
    %v95 = vrot.slane %v31, %v94
    %vm96 = vcmp.eq.s32.totalorder %v22, %v35
    %vm97 = vcmp.eq.s32.totalorder %v22, %v39
    %vm98 = vcmp.eq.s32.totalorder %v22, %v43
    %vm99 = vcmp.eq.s32.totalorder %v22, %v47
    %vm100 = vcmp.eq.s32.totalorder %v22, %v51
    %vm101 = vcmp.eq.s32.totalorder %v22, %v55
    %vm102 = vcmp.eq.s32.totalorder %v22, %v59
    %vm103 = vcmp.eq.s32.totalorder %v22, %v63
    %vm104 = vcmp.eq.s32.totalorder %v22, %v67
    %vm105 = vcmp.eq.s32.totalorder %v22, %v71
    %vm106 = vcmp.eq.s32.totalorder %v22, %v75
    %vm107 = vcmp.eq.s32.totalorder %v22, %v79
    %vm108 = vcmp.eq.s32.totalorder %v22, %v83
    %vm109 = vcmp.eq.s32.totalorder %v22, %v87
    %vm110 = vcmp.eq.s32.totalorder %v22, %v91
    %vm111 = vcmp.eq.s32.totalorder %v22, %v95
    %vm112 = vcmp.eq.s32.totalorder %v23, %v35
    %vm113 = vcmp.eq.s32.totalorder %v23, %v39
    %vm114 = vcmp.eq.s32.totalorder %v23, %v43
    %vm115 = vcmp.eq.s32.totalorder %v23, %v47
    %vm116 = vcmp.eq.s32.totalorder %v23, %v51
    %vm117 = vcmp.eq.s32.totalorder %v23, %v55
    %vm118 = vcmp.eq.s32.totalorder %v23, %v59
    %vm119 = vcmp.eq.s32.totalorder %v23, %v63
    %vm120 = vcmp.eq.s32.totalorder %v23, %v67
    %vm121 = vcmp.eq.s32.totalorder %v23, %v71
    %vm122 = vcmp.eq.s32.totalorder %v23, %v75
    %vm123 = vcmp.eq.s32.totalorder %v23, %v79
    %vm124 = vcmp.eq.s32.totalorder %v23, %v83
    %vm125 = vcmp.eq.s32.totalorder %v23, %v87
    %vm126 = vcmp.eq.s32.totalorder %v23, %v91
    %vm127 = vcmp.eq.s32.totalorder %v23, %v95
    %vm128 = vcmp.eq.s32.totalorder %v24, %v35
    %vm129 = vcmp.eq.s32.totalorder %v24, %v39
    %vm130 = vcmp.eq.s32.totalorder %v24, %v43
    %vm131 = vcmp.eq.s32.totalorder %v24, %v47
    %vm132 = vcmp.eq.s32.totalorder %v24, %v51
    %vm133 = vcmp.eq.s32.totalorder %v24, %v55
    %vm134 = vcmp.eq.s32.totalorder %v24, %v59
    %vm135 = vcmp.eq.s32.totalorder %v24, %v63
    %vm136 = vcmp.eq.s32.totalorder %v24, %v67
    %vm137 = vcmp.eq.s32.totalorder %v24, %v71
    %vm138 = vcmp.eq.s32.totalorder %v24, %v75
    %vm139 = vcmp.eq.s32.totalorder %v24, %v79
    %vm140 = vcmp.eq.s32.totalorder %v24, %v83
    %vm141 = vcmp.eq.s32.totalorder %v24, %v87
    %vm142 = vcmp.eq.s32.totalorder %v24, %v91
    %vm143 = vcmp.eq.s32.totalorder %v24, %v95
    %vm144 = vcmp.eq.s32.totalorder %v25, %v35
    %vm145 = vcmp.eq.s32.totalorder %v25, %v39
    %vm146 = vcmp.eq.s32.totalorder %v25, %v43
    %vm147 = vcmp.eq.s32.totalorder %v25, %v47
    %vm148 = vcmp.eq.s32.totalorder %v25, %v51
    %vm149 = vcmp.eq.s32.totalorder %v25, %v55
    %vm150 = vcmp.eq.s32.totalorder %v25, %v59
    %vm151 = vcmp.eq.s32.totalorder %v25, %v63
    %vm152 = vcmp.eq.s32.totalorder %v25, %v67
    %vm153 = vcmp.eq.s32.totalorder %v25, %v71
    %vm154 = vcmp.eq.s32.totalorder %v25, %v75
    %vm155 = vcmp.eq.s32.totalorder %v25, %v79
    %vm156 = vcmp.eq.s32.totalorder %v25, %v83
    %vm157 = vcmp.eq.s32.totalorder %v25, %v87
    %vm158 = vcmp.eq.s32.totalorder %v25, %v91
    %vm159 = vcmp.eq.s32.totalorder %v25, %v95
    %vm160 = vcmp.eq.s32.totalorder %v26, %v35
    %vm161 = vcmp.eq.s32.totalorder %v26, %v39
    %vm162 = vcmp.eq.s32.totalorder %v26, %v43
    %vm163 = vcmp.eq.s32.totalorder %v26, %v47
    %vm164 = vcmp.eq.s32.totalorder %v26, %v51
    %vm165 = vcmp.eq.s32.totalorder %v26, %v55
    %vm166 = vcmp.eq.s32.totalorder %v26, %v59
    %vm167 = vcmp.eq.s32.totalorder %v26, %v63
    %vm168 = vcmp.eq.s32.totalorder %v26, %v67
    %vm169 = vcmp.eq.s32.totalorder %v26, %v71
    %vm170 = vcmp.eq.s32.totalorder %v26, %v75
    %vm171 = vcmp.eq.s32.totalorder %v26, %v79
    %vm172 = vcmp.eq.s32.totalorder %v26, %v83
    %vm173 = vcmp.eq.s32.totalorder %v26, %v87
    %vm174 = vcmp.eq.s32.totalorder %v26, %v91
    %vm175 = vcmp.eq.s32.totalorder %v26, %v95
    %vm176 = vcmp.eq.s32.totalorder %v27, %v35
    %vm177 = vcmp.eq.s32.totalorder %v27, %v39
    %vm178 = vcmp.eq.s32.totalorder %v27, %v43
    %vm179 = vcmp.eq.s32.totalorder %v27, %v47
    %vm180 = vcmp.eq.s32.totalorder %v27, %v51
    %vm181 = vcmp.eq.s32.totalorder %v27, %v55
    %vm182 = vcmp.eq.s32.totalorder %v27, %v59
    %vm183 = vcmp.eq.s32.totalorder %v27, %v63
    %vm184 = vcmp.eq.s32.totalorder %v27, %v67
    %vm185 = vcmp.eq.s32.totalorder %v27, %v71
    %vm186 = vcmp.eq.s32.totalorder %v27, %v75
    %vm187 = vcmp.eq.s32.totalorder %v27, %v79
    %vm188 = vcmp.eq.s32.totalorder %v27, %v83
    %vm189 = vcmp.eq.s32.totalorder %v27, %v87
    %vm190 = vcmp.eq.s32.totalorder %v27, %v91
    %vm191 = vcmp.eq.s32.totalorder %v27, %v95
    %vm192 = vcmp.eq.s32.totalorder %v28, %v35
    %vm193 = vcmp.eq.s32.totalorder %v28, %v39
    %vm194 = vcmp.eq.s32.totalorder %v28, %v43
    %vm195 = vcmp.eq.s32.totalorder %v28, %v47
    %vm196 = vcmp.eq.s32.totalorder %v28, %v51
    %vm197 = vcmp.eq.s32.totalorder %v28, %v55
    %vm198 = vcmp.eq.s32.totalorder %v28, %v59
    %vm199 = vcmp.eq.s32.totalorder %v28, %v63
    %vm200 = vcmp.eq.s32.totalorder %v28, %v67
    %vm201 = vcmp.eq.s32.totalorder %v28, %v71
    %vm202 = vcmp.eq.s32.totalorder %v28, %v75
    %vm203 = vcmp.eq.s32.totalorder %v28, %v79
    %vm204 = vcmp.eq.s32.totalorder %v28, %v83
    %vm205 = vcmp.eq.s32.totalorder %v28, %v87
    %vm206 = vcmp.eq.s32.totalorder %v28, %v91
    %vm207 = vcmp.eq.s32.totalorder %v28, %v95
    %vm208 = vcmp.eq.s32.totalorder %v29, %v35
    %vm209 = vcmp.eq.s32.totalorder %v29, %v39
    %vm210 = vcmp.eq.s32.totalorder %v29, %v43
    %vm211 = vcmp.eq.s32.totalorder %v29, %v47
    %vm212 = vcmp.eq.s32.totalorder %v29, %v51
    %vm213 = vcmp.eq.s32.totalorder %v29, %v55
    %vm214 = vcmp.eq.s32.totalorder %v29, %v59
    %vm215 = vcmp.eq.s32.totalorder %v29, %v63
    %vm216 = vcmp.eq.s32.totalorder %v29, %v67
    %vm217 = vcmp.eq.s32.totalorder %v29, %v71
    %vm218 = vcmp.eq.s32.totalorder %v29, %v75
    %vm219 = vcmp.eq.s32.totalorder %v29, %v79
    %vm220 = vcmp.eq.s32.totalorder %v29, %v83
    %vm221 = vcmp.eq.s32.totalorder %v29, %v87
    %vm222 = vcmp.eq.s32.totalorder %v29, %v91
    %vm223 = vcmp.eq.s32.totalorder %v29, %v95
    %v224 = vsel %vm96, 1, 0
    %v225 = vsel %vm97, 1, 0
    %v226 = vsel %vm98, 1, 0
    %v227 = vsel %vm99, 1, 0
    %v228 = vsel %vm100, 1, 0
    %v229 = vsel %vm101, 1, 0
    %v230 = vsel %vm102, 1, 0
    %v231 = vsel %vm103, 1, 0
    %v232 = vsel %vm104, 1, 0
    %v233 = vsel %vm105, 1, 0
    %v234 = vsel %vm106, 1, 0
    %v235 = vsel %vm107, 1, 0
    %v236 = vsel %vm108, 1, 0
    %v237 = vsel %vm109, 1, 0
    %v238 = vsel %vm110, 1, 0
    %v239 = vsel %vm111, 1, 0
    %v240 = vsel %vm112, 1, 0
    %v241 = vsel %vm113, 1, 0
    %v242 = vsel %vm114, 1, 0
    %v243 = vsel %vm115, 1, 0
    %v244 = vsel %vm116, 1, 0
    %v245 = vsel %vm117, 1, 0
    %v246 = vsel %vm118, 1, 0
    %v247 = vsel %vm119, 1, 0
    %v248 = vsel %vm120, 1, 0
    %v249 = vsel %vm121, 1, 0
    %v250 = vsel %vm122, 1, 0
    %v251 = vsel %vm123, 1, 0
    %v252 = vsel %vm124, 1, 0
    %v253 = vsel %vm125, 1, 0
    %v254 = vsel %vm126, 1, 0
    %v255 = vsel %vm127, 1, 0
    %v256 = vsel %vm128, 1, 0
    %v257 = vsel %vm129, 1, 0
    %v258 = vsel %vm130, 1, 0
    %v259 = vsel %vm131, 1, 0
    %v260 = vsel %vm132, 1, 0
    %v261 = vsel %vm133, 1, 0
    %v262 = vsel %vm134, 1, 0
    %v263 = vsel %vm135, 1, 0
    %v264 = vsel %vm136, 1, 0
    %v265 = vsel %vm137, 1, 0
    %v266 = vsel %vm138, 1, 0
    %v267 = vsel %vm139, 1, 0
    %v268 = vsel %vm140, 1, 0
    %v269 = vsel %vm141, 1, 0
    %v270 = vsel %vm142, 1, 0
    %v271 = vsel %vm143, 1, 0
    %v272 = vsel %vm144, 1, 0
    %v273 = vsel %vm145, 1, 0
    %v274 = vsel %vm146, 1, 0
    %v275 = vsel %vm147, 1, 0
    %v276 = vsel %vm148, 1, 0
    %v277 = vsel %vm149, 1, 0
    %v278 = vsel %vm150, 1, 0
    %v279 = vsel %vm151, 1, 0
    %v280 = vsel %vm152, 1, 0
    %v281 = vsel %vm153, 1, 0
    %v282 = vsel %vm154, 1, 0
    %v283 = vsel %vm155, 1, 0
    %v284 = vsel %vm156, 1, 0
    %v285 = vsel %vm157, 1, 0
    %v286 = vsel %vm158, 1, 0
    %v287 = vsel %vm159, 1, 0
    %v288 = vsel %vm160, 1, 0
    %v289 = vsel %vm161, 1, 0
    %v290 = vsel %vm162, 1, 0
    %v291 = vsel %vm163, 1, 0
    %v292 = vsel %vm164, 1, 0
    %v293 = vsel %vm165, 1, 0
    %v294 = vsel %vm166, 1, 0
    %v295 = vsel %vm167, 1, 0
    %v296 = vsel %vm168, 1, 0
    %v297 = vsel %vm169, 1, 0
    %v298 = vsel %vm170, 1, 0
    %v299 = vsel %vm171, 1, 0
    %v300 = vsel %vm172, 1, 0
    %v301 = vsel %vm173, 1, 0
    %v302 = vsel %vm174, 1, 0
    %v303 = vsel %vm175, 1, 0
    %v304 = vsel %vm176, 1, 0
    %v305 = vsel %vm177, 1, 0
    %v306 = vsel %vm178, 1, 0
    %v307 = vsel %vm179, 1, 0
    %v308 = vsel %vm180, 1, 0
    %v309 = vsel %vm181, 1, 0
    %v310 = vsel %vm182, 1, 0
    %v311 = vsel %vm183, 1, 0
    %v312 = vsel %vm184, 1, 0
    %v313 = vsel %vm185, 1, 0
    %v314 = vsel %vm186, 1, 0
    %v315 = vsel %vm187, 1, 0
    %v316 = vsel %vm188, 1, 0
    %v317 = vsel %vm189, 1, 0
    %v318 = vsel %vm190, 1, 0
    %v319 = vsel %vm191, 1, 0
    %v320 = vsel %vm192, 1, 0
    %v321 = vsel %vm193, 1, 0
    %v322 = vsel %vm194, 1, 0
    %v323 = vsel %vm195, 1, 0
    %v324 = vsel %vm196, 1, 0
    %v325 = vsel %vm197, 1, 0
    %v326 = vsel %vm198, 1, 0
    %v327 = vsel %vm199, 1, 0
    %v328 = vsel %vm200, 1, 0
    %v329 = vsel %vm201, 1, 0
    %v330 = vsel %vm202, 1, 0
    %v331 = vsel %vm203, 1, 0
    %v332 = vsel %vm204, 1, 0
    %v333 = vsel %vm205, 1, 0
    %v334 = vsel %vm206, 1, 0
    %v335 = vsel %vm207, 1, 0
    %v336 = vsel %vm208, 1, 0
    %v337 = vsel %vm209, 1, 0
    %v338 = vsel %vm210, 1, 0
    %v339 = vsel %vm211, 1, 0
    %v340 = vsel %vm212, 1, 0
    %v341 = vsel %vm213, 1, 0
    %v342 = vsel %vm214, 1, 0
    %v343 = vsel %vm215, 1, 0
    %v344 = vsel %vm216, 1, 0
    %v345 = vsel %vm217, 1, 0
    %v346 = vsel %vm218, 1, 0
    %v347 = vsel %vm219, 1, 0
    %v348 = vsel %vm220, 1, 0
    %v349 = vsel %vm221, 1, 0
    %v350 = vsel %vm222, 1, 0
    %v351 = vsel %vm223, 1, 0
    %v352 = vcvt.s32.f32 %v224
    %v353 = vcvt.s32.f32 %v225
    %v354 = vcvt.s32.f32 %v226
    %v355 = vcvt.s32.f32 %v227
    %v356 = vcvt.s32.f32 %v228
    %v357 = vcvt.s32.f32 %v229
    %v358 = vcvt.s32.f32 %v230
    %v359 = vcvt.s32.f32 %v231
    %v360 = vcvt.s32.f32 %v232
    %v361 = vcvt.s32.f32 %v233
    %v362 = vcvt.s32.f32 %v234
    %v363 = vcvt.s32.f32 %v235
    %v364 = vcvt.s32.f32 %v236
    %v365 = vcvt.s32.f32 %v237
    %v366 = vcvt.s32.f32 %v238
    %v367 = vcvt.s32.f32 %v239
    %v368 = vcvt.s32.f32 %v240
    %v369 = vcvt.s32.f32 %v241
    %v370 = vcvt.s32.f32 %v242
    %v371 = vcvt.s32.f32 %v243
    %v372 = vcvt.s32.f32 %v244
    %v373 = vcvt.s32.f32 %v245
    %v374 = vcvt.s32.f32 %v246
    %v375 = vcvt.s32.f32 %v247
    %v376 = vcvt.s32.f32 %v248
    %v377 = vcvt.s32.f32 %v249
    %v378 = vcvt.s32.f32 %v250
    %v379 = vcvt.s32.f32 %v251
    %v380 = vcvt.s32.f32 %v252
    %v381 = vcvt.s32.f32 %v253
    %v382 = vcvt.s32.f32 %v254
    %v383 = vcvt.s32.f32 %v255
    %v384 = vcvt.s32.f32 %v256
    %v385 = vcvt.s32.f32 %v257
    %v386 = vcvt.s32.f32 %v258
    %v387 = vcvt.s32.f32 %v259
    %v388 = vcvt.s32.f32 %v260
    %v389 = vcvt.s32.f32 %v261
    %v390 = vcvt.s32.f32 %v262
    %v391 = vcvt.s32.f32 %v263
    %v392 = vcvt.s32.f32 %v264
    %v393 = vcvt.s32.f32 %v265
    %v394 = vcvt.s32.f32 %v266
    %v395 = vcvt.s32.f32 %v267
    %v396 = vcvt.s32.f32 %v268
    %v397 = vcvt.s32.f32 %v269
    %v398 = vcvt.s32.f32 %v270
    %v399 = vcvt.s32.f32 %v271
    %v400 = vcvt.s32.f32 %v272
    %v401 = vcvt.s32.f32 %v273
    %v402 = vcvt.s32.f32 %v274
    %v403 = vcvt.s32.f32 %v275
    %v404 = vcvt.s32.f32 %v276
    %v405 = vcvt.s32.f32 %v277
    %v406 = vcvt.s32.f32 %v278
    %v407 = vcvt.s32.f32 %v279
    %v408 = vcvt.s32.f32 %v280
    %v409 = vcvt.s32.f32 %v281
    %v410 = vcvt.s32.f32 %v282
    %v411 = vcvt.s32.f32 %v283
    %v412 = vcvt.s32.f32 %v284
    %v413 = vcvt.s32.f32 %v285
    %v414 = vcvt.s32.f32 %v286
    %v415 = vcvt.s32.f32 %v287
    %v416 = vcvt.s32.f32 %v288
    %v417 = vcvt.s32.f32 %v289
    %v418 = vcvt.s32.f32 %v290
    %v419 = vcvt.s32.f32 %v291
    %v420 = vcvt.s32.f32 %v292
    %v421 = vcvt.s32.f32 %v293
    %v422 = vcvt.s32.f32 %v294
    %v423 = vcvt.s32.f32 %v295
    %v424 = vcvt.s32.f32 %v296
    %v425 = vcvt.s32.f32 %v297
    %v426 = vcvt.s32.f32 %v298
    %v427 = vcvt.s32.f32 %v299
    %v428 = vcvt.s32.f32 %v300
    %v429 = vcvt.s32.f32 %v301
    %v430 = vcvt.s32.f32 %v302
    %v431 = vcvt.s32.f32 %v303
    %v432 = vcvt.s32.f32 %v304
    %v433 = vcvt.s32.f32 %v305
    %v434 = vcvt.s32.f32 %v306
    %v435 = vcvt.s32.f32 %v307
    %v436 = vcvt.s32.f32 %v308
    %v437 = vcvt.s32.f32 %v309
    %v438 = vcvt.s32.f32 %v310
    %v439 = vcvt.s32.f32 %v311
    %v440 = vcvt.s32.f32 %v312
    %v441 = vcvt.s32.f32 %v313
    %v442 = vcvt.s32.f32 %v314
    %v443 = vcvt.s32.f32 %v315
    %v444 = vcvt.s32.f32 %v316
    %v445 = vcvt.s32.f32 %v317
    %v446 = vcvt.s32.f32 %v318
    %v447 = vcvt.s32.f32 %v319
    %v448 = vcvt.s32.f32 %v320
    %v449 = vcvt.s32.f32 %v321
    %v450 = vcvt.s32.f32 %v322
    %v451 = vcvt.s32.f32 %v323
    %v452 = vcvt.s32.f32 %v324
    %v453 = vcvt.s32.f32 %v325
    %v454 = vcvt.s32.f32 %v326
    %v455 = vcvt.s32.f32 %v327
    %v456 = vcvt.s32.f32 %v328
    %v457 = vcvt.s32.f32 %v329
    %v458 = vcvt.s32.f32 %v330
    %v459 = vcvt.s32.f32 %v331
    %v460 = vcvt.s32.f32 %v332
    %v461 = vcvt.s32.f32 %v333
    %v462 = vcvt.s32.f32 %v334
    %v463 = vcvt.s32.f32 %v335
    %v464 = vcvt.s32.f32 %v336
    %v465 = vcvt.s32.f32 %v337
    %v466 = vcvt.s32.f32 %v338
    %v467 = vcvt.s32.f32 %v339
    %v468 = vcvt.s32.f32 %v340
    %v469 = vcvt.s32.f32 %v341
    %v470 = vcvt.s32.f32 %v342
    %v471 = vcvt.s32.f32 %v343
    %v472 = vcvt.s32.f32 %v344
    %v473 = vcvt.s32.f32 %v345
    %v474 = vcvt.s32.f32 %v346
    %v475 = vcvt.s32.f32 %v347
    %v476 = vcvt.s32.f32 %v348
    %v477 = vcvt.s32.f32 %v349
    %v478 = vcvt.s32.f32 %v350
    %v479 = vcvt.s32.f32 %v351
    %v480 = vld [vmem:[%s3] sm:$0xff]
    %v481 = vld [vmem:[%s3 + $0x8] sm:$0xff]
    %v482 = vlaneseq
    %v483 = vshrl.u32 %v482, 7
    %v484 = vsub.s32 0, %v483
    %v485 = vrot.slane %v480, %v484
    %v486 = vlaneseq
    %v487 = vshrl.u32 %v486, 7
    %v488 = vsub.s32 1, %v487
    %v489 = vrot.slane %v480, %v488
    %v490 = vlaneseq
    %v491 = vshrl.u32 %v490, 7
    %v492 = vsub.s32 2, %v491
    %v493 = vrot.slane %v480, %v492
    %v494 = vlaneseq
    %v495 = vshrl.u32 %v494, 7
    %v496 = vsub.s32 3, %v495
    %v497 = vrot.slane %v480, %v496
    %v498 = vlaneseq
    %v499 = vshrl.u32 %v498, 7
    %v500 = vsub.s32 4, %v499
    %v501 = vrot.slane %v480, %v500
    %v502 = vlaneseq
    %v503 = vshrl.u32 %v502, 7
    %v504 = vsub.s32 5, %v503
    %v505 = vrot.slane %v480, %v504
    %v506 = vlaneseq
    %v507 = vshrl.u32 %v506, 7
    %v508 = vsub.s32 6, %v507
    %v509 = vrot.slane %v480, %v508
    %v510 = vlaneseq
    %v511 = vshrl.u32 %v510, 7
    %v512 = vsub.s32 7, %v511
    %v513 = vrot.slane %v480, %v512
    %v514 = vlaneseq
    %v515 = vshrl.u32 %v514, 7
    %v516 = vsub.s32 0, %v515
    %v517 = vrot.slane %v481, %v516
    %v518 = vlaneseq
    %v519 = vshrl.u32 %v518, 7
    %v520 = vsub.s32 1, %v519
    %v521 = vrot.slane %v481, %v520
    %v522 = vlaneseq
    %v523 = vshrl.u32 %v522, 7
    %v524 = vsub.s32 2, %v523
    %v525 = vrot.slane %v481, %v524
    %v526 = vlaneseq
    %v527 = vshrl.u32 %v526, 7
    %v528 = vsub.s32 3, %v527
    %v529 = vrot.slane %v481, %v528
    %v530 = vlaneseq
    %v531 = vshrl.u32 %v530, 7
    %v532 = vsub.s32 4, %v531
    %v533 = vrot.slane %v481, %v532
    %v534 = vlaneseq
    %v535 = vshrl.u32 %v534, 7
    %v536 = vsub.s32 5, %v535
    %v537 = vrot.slane %v481, %v536
    %v538 = vlaneseq
    %v539 = vshrl.u32 %v538, 7
    %v540 = vsub.s32 6, %v539
    %v541 = vrot.slane %v481, %v540
    %v542 = vlaneseq
    %v543 = vshrl.u32 %v542, 7
    %v544 = vsub.s32 7, %v543
    %v545 = vrot.slane %v481, %v544
    %vm546 = vcmp.eq.s32.totalorder %v22, %v485
    %vm547 = vcmp.eq.s32.totalorder %v22, %v489
    %vm548 = vcmp.eq.s32.totalorder %v22, %v493
    %vm549 = vcmp.eq.s32.totalorder %v22, %v497
    %vm550 = vcmp.eq.s32.totalorder %v22, %v501
    %vm551 = vcmp.eq.s32.totalorder %v22, %v505
    %vm552 = vcmp.eq.s32.totalorder %v22, %v509
    %vm553 = vcmp.eq.s32.totalorder %v22, %v513
    %vm554 = vcmp.eq.s32.totalorder %v22, %v517
    %vm555 = vcmp.eq.s32.totalorder %v22, %v521
    %vm556 = vcmp.eq.s32.totalorder %v22, %v525
    %vm557 = vcmp.eq.s32.totalorder %v22, %v529
    %vm558 = vcmp.eq.s32.totalorder %v22, %v533
    %vm559 = vcmp.eq.s32.totalorder %v22, %v537
    %vm560 = vcmp.eq.s32.totalorder %v22, %v541
    %vm561 = vcmp.eq.s32.totalorder %v22, %v545
    %vm562 = vcmp.eq.s32.totalorder %v23, %v485
    %vm563 = vcmp.eq.s32.totalorder %v23, %v489
    %vm564 = vcmp.eq.s32.totalorder %v23, %v493
    %vm565 = vcmp.eq.s32.totalorder %v23, %v497
    %vm566 = vcmp.eq.s32.totalorder %v23, %v501
    %vm567 = vcmp.eq.s32.totalorder %v23, %v505
    %vm568 = vcmp.eq.s32.totalorder %v23, %v509
    %vm569 = vcmp.eq.s32.totalorder %v23, %v513
    %vm570 = vcmp.eq.s32.totalorder %v23, %v517
    %vm571 = vcmp.eq.s32.totalorder %v23, %v521
    %vm572 = vcmp.eq.s32.totalorder %v23, %v525
    %vm573 = vcmp.eq.s32.totalorder %v23, %v529
    %vm574 = vcmp.eq.s32.totalorder %v23, %v533
    %vm575 = vcmp.eq.s32.totalorder %v23, %v537
    %vm576 = vcmp.eq.s32.totalorder %v23, %v541
    %vm577 = vcmp.eq.s32.totalorder %v23, %v545
    %vm578 = vcmp.eq.s32.totalorder %v24, %v485
    %vm579 = vcmp.eq.s32.totalorder %v24, %v489
    %vm580 = vcmp.eq.s32.totalorder %v24, %v493
    %vm581 = vcmp.eq.s32.totalorder %v24, %v497
    %vm582 = vcmp.eq.s32.totalorder %v24, %v501
    %vm583 = vcmp.eq.s32.totalorder %v24, %v505
    %vm584 = vcmp.eq.s32.totalorder %v24, %v509
    %vm585 = vcmp.eq.s32.totalorder %v24, %v513
    %vm586 = vcmp.eq.s32.totalorder %v24, %v517
    %vm587 = vcmp.eq.s32.totalorder %v24, %v521
    %vm588 = vcmp.eq.s32.totalorder %v24, %v525
    %vm589 = vcmp.eq.s32.totalorder %v24, %v529
    %vm590 = vcmp.eq.s32.totalorder %v24, %v533
    %vm591 = vcmp.eq.s32.totalorder %v24, %v537
    %vm592 = vcmp.eq.s32.totalorder %v24, %v541
    %vm593 = vcmp.eq.s32.totalorder %v24, %v545
    %vm594 = vcmp.eq.s32.totalorder %v25, %v485
    %vm595 = vcmp.eq.s32.totalorder %v25, %v489
    %vm596 = vcmp.eq.s32.totalorder %v25, %v493
    %vm597 = vcmp.eq.s32.totalorder %v25, %v497
    %vm598 = vcmp.eq.s32.totalorder %v25, %v501
    %vm599 = vcmp.eq.s32.totalorder %v25, %v505
    %vm600 = vcmp.eq.s32.totalorder %v25, %v509
    %vm601 = vcmp.eq.s32.totalorder %v25, %v513
    %vm602 = vcmp.eq.s32.totalorder %v25, %v517
    %vm603 = vcmp.eq.s32.totalorder %v25, %v521
    %vm604 = vcmp.eq.s32.totalorder %v25, %v525
    %vm605 = vcmp.eq.s32.totalorder %v25, %v529
    %vm606 = vcmp.eq.s32.totalorder %v25, %v533
    %vm607 = vcmp.eq.s32.totalorder %v25, %v537
    %vm608 = vcmp.eq.s32.totalorder %v25, %v541
    %vm609 = vcmp.eq.s32.totalorder %v25, %v545
    %vm610 = vcmp.eq.s32.totalorder %v26, %v485
    %vm611 = vcmp.eq.s32.totalorder %v26, %v489
    %vm612 = vcmp.eq.s32.totalorder %v26, %v493
    %vm613 = vcmp.eq.s32.totalorder %v26, %v497
    %vm614 = vcmp.eq.s32.totalorder %v26, %v501
    %vm615 = vcmp.eq.s32.totalorder %v26, %v505
    %vm616 = vcmp.eq.s32.totalorder %v26, %v509
    %vm617 = vcmp.eq.s32.totalorder %v26, %v513
    %vm618 = vcmp.eq.s32.totalorder %v26, %v517
    %vm619 = vcmp.eq.s32.totalorder %v26, %v521
    %vm620 = vcmp.eq.s32.totalorder %v26, %v525
    %vm621 = vcmp.eq.s32.totalorder %v26, %v529
    %vm622 = vcmp.eq.s32.totalorder %v26, %v533
    %vm623 = vcmp.eq.s32.totalorder %v26, %v537
    %vm624 = vcmp.eq.s32.totalorder %v26, %v541
    %vm625 = vcmp.eq.s32.totalorder %v26, %v545
    %vm626 = vcmp.eq.s32.totalorder %v27, %v485
    %vm627 = vcmp.eq.s32.totalorder %v27, %v489
    %vm628 = vcmp.eq.s32.totalorder %v27, %v493
    %vm629 = vcmp.eq.s32.totalorder %v27, %v497
    %vm630 = vcmp.eq.s32.totalorder %v27, %v501
    %vm631 = vcmp.eq.s32.totalorder %v27, %v505
    %vm632 = vcmp.eq.s32.totalorder %v27, %v509
    %vm633 = vcmp.eq.s32.totalorder %v27, %v513
    %vm634 = vcmp.eq.s32.totalorder %v27, %v517
    %vm635 = vcmp.eq.s32.totalorder %v27, %v521
    %vm636 = vcmp.eq.s32.totalorder %v27, %v525
    %vm637 = vcmp.eq.s32.totalorder %v27, %v529
    %vm638 = vcmp.eq.s32.totalorder %v27, %v533
    %vm639 = vcmp.eq.s32.totalorder %v27, %v537
    %vm640 = vcmp.eq.s32.totalorder %v27, %v541
    %vm641 = vcmp.eq.s32.totalorder %v27, %v545
    %vm642 = vcmp.eq.s32.totalorder %v28, %v485
    %vm643 = vcmp.eq.s32.totalorder %v28, %v489
    %vm644 = vcmp.eq.s32.totalorder %v28, %v493
    %vm645 = vcmp.eq.s32.totalorder %v28, %v497
    %vm646 = vcmp.eq.s32.totalorder %v28, %v501
    %vm647 = vcmp.eq.s32.totalorder %v28, %v505
    %vm648 = vcmp.eq.s32.totalorder %v28, %v509
    %vm649 = vcmp.eq.s32.totalorder %v28, %v513
    %vm650 = vcmp.eq.s32.totalorder %v28, %v517
    %vm651 = vcmp.eq.s32.totalorder %v28, %v521
    %vm652 = vcmp.eq.s32.totalorder %v28, %v525
    %vm653 = vcmp.eq.s32.totalorder %v28, %v529
    %vm654 = vcmp.eq.s32.totalorder %v28, %v533
    %vm655 = vcmp.eq.s32.totalorder %v28, %v537
    %vm656 = vcmp.eq.s32.totalorder %v28, %v541
    %vm657 = vcmp.eq.s32.totalorder %v28, %v545
    %vm658 = vcmp.eq.s32.totalorder %v29, %v485
    %vm659 = vcmp.eq.s32.totalorder %v29, %v489
    %vm660 = vcmp.eq.s32.totalorder %v29, %v493
    %vm661 = vcmp.eq.s32.totalorder %v29, %v497
    %vm662 = vcmp.eq.s32.totalorder %v29, %v501
    %vm663 = vcmp.eq.s32.totalorder %v29, %v505
    %vm664 = vcmp.eq.s32.totalorder %v29, %v509
    %vm665 = vcmp.eq.s32.totalorder %v29, %v513
    %vm666 = vcmp.eq.s32.totalorder %v29, %v517
    %vm667 = vcmp.eq.s32.totalorder %v29, %v521
    %vm668 = vcmp.eq.s32.totalorder %v29, %v525
    %vm669 = vcmp.eq.s32.totalorder %v29, %v529
    %vm670 = vcmp.eq.s32.totalorder %v29, %v533
    %vm671 = vcmp.eq.s32.totalorder %v29, %v537
    %vm672 = vcmp.eq.s32.totalorder %v29, %v541
    %vm673 = vcmp.eq.s32.totalorder %v29, %v545
    %v674 = vsel %vm546, 1, 0
    %v675 = vsel %vm547, 1, 0
    %v676 = vsel %vm548, 1, 0
    %v677 = vsel %vm549, 1, 0
    %v678 = vsel %vm550, 1, 0
    %v679 = vsel %vm551, 1, 0
    %v680 = vsel %vm552, 1, 0
    %v681 = vsel %vm553, 1, 0
    %v682 = vsel %vm554, 1, 0
    %v683 = vsel %vm555, 1, 0
    %v684 = vsel %vm556, 1, 0
    %v685 = vsel %vm557, 1, 0
    %v686 = vsel %vm558, 1, 0
    %v687 = vsel %vm559, 1, 0
    %v688 = vsel %vm560, 1, 0
    %v689 = vsel %vm561, 1, 0
    %v690 = vsel %vm562, 1, 0
    %v691 = vsel %vm563, 1, 0
    %v692 = vsel %vm564, 1, 0
    %v693 = vsel %vm565, 1, 0
    %v694 = vsel %vm566, 1, 0
    %v695 = vsel %vm567, 1, 0
    %v696 = vsel %vm568, 1, 0
    %v697 = vsel %vm569, 1, 0
    %v698 = vsel %vm570, 1, 0
    %v699 = vsel %vm571, 1, 0
    %v700 = vsel %vm572, 1, 0
    %v701 = vsel %vm573, 1, 0
    %v702 = vsel %vm574, 1, 0
    %v703 = vsel %vm575, 1, 0
    %v704 = vsel %vm576, 1, 0
    %v705 = vsel %vm577, 1, 0
    %v706 = vsel %vm578, 1, 0
    %v707 = vsel %vm579, 1, 0
    %v708 = vsel %vm580, 1, 0
    %v709 = vsel %vm581, 1, 0
    %v710 = vsel %vm582, 1, 0
    %v711 = vsel %vm583, 1, 0
    %v712 = vsel %vm584, 1, 0
    %v713 = vsel %vm585, 1, 0
    %v714 = vsel %vm586, 1, 0
    %v715 = vsel %vm587, 1, 0
    %v716 = vsel %vm588, 1, 0
    %v717 = vsel %vm589, 1, 0
    %v718 = vsel %vm590, 1, 0
    %v719 = vsel %vm591, 1, 0
    %v720 = vsel %vm592, 1, 0
    %v721 = vsel %vm593, 1, 0
    %v722 = vsel %vm594, 1, 0
    %v723 = vsel %vm595, 1, 0
    %v724 = vsel %vm596, 1, 0
    %v725 = vsel %vm597, 1, 0
    %v726 = vsel %vm598, 1, 0
    %v727 = vsel %vm599, 1, 0
    %v728 = vsel %vm600, 1, 0
    %v729 = vsel %vm601, 1, 0
    %v730 = vsel %vm602, 1, 0
    %v731 = vsel %vm603, 1, 0
    %v732 = vsel %vm604, 1, 0
    %v733 = vsel %vm605, 1, 0
    %v734 = vsel %vm606, 1, 0
    %v735 = vsel %vm607, 1, 0
    %v736 = vsel %vm608, 1, 0
    %v737 = vsel %vm609, 1, 0
    %v738 = vsel %vm610, 1, 0
    %v739 = vsel %vm611, 1, 0
    %v740 = vsel %vm612, 1, 0
    %v741 = vsel %vm613, 1, 0
    %v742 = vsel %vm614, 1, 0
    %v743 = vsel %vm615, 1, 0
    %v744 = vsel %vm616, 1, 0
    %v745 = vsel %vm617, 1, 0
    %v746 = vsel %vm618, 1, 0
    %v747 = vsel %vm619, 1, 0
    %v748 = vsel %vm620, 1, 0
    %v749 = vsel %vm621, 1, 0
    %v750 = vsel %vm622, 1, 0
    %v751 = vsel %vm623, 1, 0
    %v752 = vsel %vm624, 1, 0
    %v753 = vsel %vm625, 1, 0
    %v754 = vsel %vm626, 1, 0
    %v755 = vsel %vm627, 1, 0
    %v756 = vsel %vm628, 1, 0
    %v757 = vsel %vm629, 1, 0
    %v758 = vsel %vm630, 1, 0
    %v759 = vsel %vm631, 1, 0
    %v760 = vsel %vm632, 1, 0
    %v761 = vsel %vm633, 1, 0
    %v762 = vsel %vm634, 1, 0
    %v763 = vsel %vm635, 1, 0
    %v764 = vsel %vm636, 1, 0
    %v765 = vsel %vm637, 1, 0
    %v766 = vsel %vm638, 1, 0
    %v767 = vsel %vm639, 1, 0
    %v768 = vsel %vm640, 1, 0
    %v769 = vsel %vm641, 1, 0
    %v770 = vsel %vm642, 1, 0
    %v771 = vsel %vm643, 1, 0
    %v772 = vsel %vm644, 1, 0
    %v773 = vsel %vm645, 1, 0
    %v774 = vsel %vm646, 1, 0
    %v775 = vsel %vm647, 1, 0
    %v776 = vsel %vm648, 1, 0
    %v777 = vsel %vm649, 1, 0
    %v778 = vsel %vm650, 1, 0
    %v779 = vsel %vm651, 1, 0
    %v780 = vsel %vm652, 1, 0
    %v781 = vsel %vm653, 1, 0
    %v782 = vsel %vm654, 1, 0
    %v783 = vsel %vm655, 1, 0
    %v784 = vsel %vm656, 1, 0
    %v785 = vsel %vm657, 1, 0
    %v786 = vsel %vm658, 1, 0
    %v787 = vsel %vm659, 1, 0
    %v788 = vsel %vm660, 1, 0
    %v789 = vsel %vm661, 1, 0
    %v790 = vsel %vm662, 1, 0
    %v791 = vsel %vm663, 1, 0
    %v792 = vsel %vm664, 1, 0
    %v793 = vsel %vm665, 1, 0
    %v794 = vsel %vm666, 1, 0
    %v795 = vsel %vm667, 1, 0
    %v796 = vsel %vm668, 1, 0
    %v797 = vsel %vm669, 1, 0
    %v798 = vsel %vm670, 1, 0
    %v799 = vsel %vm671, 1, 0
    %v800 = vsel %vm672, 1, 0
    %v801 = vsel %vm673, 1, 0
    %v802 = vcvt.s32.f32 %v674
    %v803 = vcvt.s32.f32 %v675
    %v804 = vcvt.s32.f32 %v676
    %v805 = vcvt.s32.f32 %v677
    %v806 = vcvt.s32.f32 %v678
    %v807 = vcvt.s32.f32 %v679
    %v808 = vcvt.s32.f32 %v680
    %v809 = vcvt.s32.f32 %v681
    %v810 = vcvt.s32.f32 %v682
    %v811 = vcvt.s32.f32 %v683
    %v812 = vcvt.s32.f32 %v684
    %v813 = vcvt.s32.f32 %v685
    %v814 = vcvt.s32.f32 %v686
    %v815 = vcvt.s32.f32 %v687
    %v816 = vcvt.s32.f32 %v688
    %v817 = vcvt.s32.f32 %v689
    %v818 = vcvt.s32.f32 %v690
    %v819 = vcvt.s32.f32 %v691
    %v820 = vcvt.s32.f32 %v692
    %v821 = vcvt.s32.f32 %v693
    %v822 = vcvt.s32.f32 %v694
    %v823 = vcvt.s32.f32 %v695
    %v824 = vcvt.s32.f32 %v696
    %v825 = vcvt.s32.f32 %v697
    %v826 = vcvt.s32.f32 %v698
    %v827 = vcvt.s32.f32 %v699
    %v828 = vcvt.s32.f32 %v700
    %v829 = vcvt.s32.f32 %v701
    %v830 = vcvt.s32.f32 %v702
    %v831 = vcvt.s32.f32 %v703
    %v832 = vcvt.s32.f32 %v704
    %v833 = vcvt.s32.f32 %v705
    %v834 = vcvt.s32.f32 %v706
    %v835 = vcvt.s32.f32 %v707
    %v836 = vcvt.s32.f32 %v708
    %v837 = vcvt.s32.f32 %v709
    %v838 = vcvt.s32.f32 %v710
    %v839 = vcvt.s32.f32 %v711
    %v840 = vcvt.s32.f32 %v712
    %v841 = vcvt.s32.f32 %v713
    %v842 = vcvt.s32.f32 %v714
    %v843 = vcvt.s32.f32 %v715
    %v844 = vcvt.s32.f32 %v716
    %v845 = vcvt.s32.f32 %v717
    %v846 = vcvt.s32.f32 %v718
    %v847 = vcvt.s32.f32 %v719
    %v848 = vcvt.s32.f32 %v720
    %v849 = vcvt.s32.f32 %v721
    %v850 = vcvt.s32.f32 %v722
    %v851 = vcvt.s32.f32 %v723
    %v852 = vcvt.s32.f32 %v724
    %v853 = vcvt.s32.f32 %v725
    %v854 = vcvt.s32.f32 %v726
    %v855 = vcvt.s32.f32 %v727
    %v856 = vcvt.s32.f32 %v728
    %v857 = vcvt.s32.f32 %v729
    %v858 = vcvt.s32.f32 %v730
    %v859 = vcvt.s32.f32 %v731
    %v860 = vcvt.s32.f32 %v732
    %v861 = vcvt.s32.f32 %v733
    %v862 = vcvt.s32.f32 %v734
    %v863 = vcvt.s32.f32 %v735
    %v864 = vcvt.s32.f32 %v736
    %v865 = vcvt.s32.f32 %v737
    %v866 = vcvt.s32.f32 %v738
    %v867 = vcvt.s32.f32 %v739
    %v868 = vcvt.s32.f32 %v740
    %v869 = vcvt.s32.f32 %v741
    %v870 = vcvt.s32.f32 %v742
    %v871 = vcvt.s32.f32 %v743
    %v872 = vcvt.s32.f32 %v744
    %v873 = vcvt.s32.f32 %v745
    %v874 = vcvt.s32.f32 %v746
    %v875 = vcvt.s32.f32 %v747
    %v876 = vcvt.s32.f32 %v748
    %v877 = vcvt.s32.f32 %v749
    %v878 = vcvt.s32.f32 %v750
    %v879 = vcvt.s32.f32 %v751
    %v880 = vcvt.s32.f32 %v752
    %v881 = vcvt.s32.f32 %v753
    %v882 = vcvt.s32.f32 %v754
    %v883 = vcvt.s32.f32 %v755
    %v884 = vcvt.s32.f32 %v756
    %v885 = vcvt.s32.f32 %v757
    %v886 = vcvt.s32.f32 %v758
    %v887 = vcvt.s32.f32 %v759
    %v888 = vcvt.s32.f32 %v760
    %v889 = vcvt.s32.f32 %v761
    %v890 = vcvt.s32.f32 %v762
    %v891 = vcvt.s32.f32 %v763
    %v892 = vcvt.s32.f32 %v764
    %v893 = vcvt.s32.f32 %v765
    %v894 = vcvt.s32.f32 %v766
    %v895 = vcvt.s32.f32 %v767
    %v896 = vcvt.s32.f32 %v768
    %v897 = vcvt.s32.f32 %v769
    %v898 = vcvt.s32.f32 %v770
    %v899 = vcvt.s32.f32 %v771
    %v900 = vcvt.s32.f32 %v772
    %v901 = vcvt.s32.f32 %v773
    %v902 = vcvt.s32.f32 %v774
    %v903 = vcvt.s32.f32 %v775
    %v904 = vcvt.s32.f32 %v776
    %v905 = vcvt.s32.f32 %v777
    %v906 = vcvt.s32.f32 %v778
    %v907 = vcvt.s32.f32 %v779
    %v908 = vcvt.s32.f32 %v780
    %v909 = vcvt.s32.f32 %v781
    %v910 = vcvt.s32.f32 %v782
    %v911 = vcvt.s32.f32 %v783
    %v912 = vcvt.s32.f32 %v784
    %v913 = vcvt.s32.f32 %v785
    %v914 = vcvt.s32.f32 %v786
    %v915 = vcvt.s32.f32 %v787
    %v916 = vcvt.s32.f32 %v788
    %v917 = vcvt.s32.f32 %v789
    %v918 = vcvt.s32.f32 %v790
    %v919 = vcvt.s32.f32 %v791
    %v920 = vcvt.s32.f32 %v792
    %v921 = vcvt.s32.f32 %v793
    %v922 = vcvt.s32.f32 %v794
    %v923 = vcvt.s32.f32 %v795
    %v924 = vcvt.s32.f32 %v796
    %v925 = vcvt.s32.f32 %v797
    %v926 = vcvt.s32.f32 %v798
    %v927 = vcvt.s32.f32 %v799
    %v928 = vcvt.s32.f32 %v800
    %v929 = vcvt.s32.f32 %v801
    %v930 = vld [vmem:[%s0] sm:$0xff]
    %v931 = vld [vmem:[%s0 + $0x8] sm:$0xff]
    %v932 = vld [vmem:[%s0 + $0x10] sm:$0xff]
    %v933 = vld [vmem:[%s0 + $0x18] sm:$0xff]
    %v934 = vld [vmem:[%s0 + $0x20] sm:$0xff]
    %v935 = vld [vmem:[%s0 + $0x28] sm:$0xff]
    %v936 = vld [vmem:[%s0 + $0x30] sm:$0xff]
    %v937 = vld [vmem:[%s0 + $0x38] sm:$0xff]
    %v938 = vld [vmem:[%s0 + $0x40] sm:$0xff]
    %v939 = vld [vmem:[%s0 + $0x48] sm:$0xff]
    %v940 = vld [vmem:[%s0 + $0x50] sm:$0xff]
    %v941 = vld [vmem:[%s0 + $0x58] sm:$0xff]
    %v942 = vld [vmem:[%s0 + $0x60] sm:$0xff]
    %v943 = vld [vmem:[%s0 + $0x68] sm:$0xff]
    %v944 = vld [vmem:[%s0 + $0x70] sm:$0xff]
    %v945 = vld [vmem:[%s0 + $0x78] sm:$0xff]
    %vm946 = vcmask 523264
    %v948 = vsel %vm946, %v930, 0
    %v951 = vsel %vm946, %v931, 0
    %v954 = vsel %vm946, %v932, 0
    %v957 = vsel %vm946, %v933, 0
    %v960 = vsel %vm946, %v934, 0
    %v963 = vsel %vm946, %v935, 0
    %v966 = vsel %vm946, %v936, 0
    %v969 = vsel %vm946, %v937, 0
    %v972 = vsel %vm946, %v938, 0
    %v975 = vsel %vm946, %v939, 0
    %v978 = vsel %vm946, %v940, 0
    %v981 = vsel %vm946, %v941, 0
    %v984 = vsel %vm946, %v942, 0
    %v987 = vsel %vm946, %v943, 0
    %v990 = vsel %vm946, %v944, 0
    %v993 = vsel %vm946, %v945, 0
    %995 = vmatprep.subr.mxu0 %v353
    %996 = vmatpush1.msra.mxu0 %v352
    %997 = vmatprep.subr.mxu0 %v369
    %998 = vmatpush1.msra.mxu0 %v368
    %999 = vmatprep.subr.mxu0 %v385
    %1000 = vmatpush1.msra.mxu0 %v384
    %1001 = vmatprep.subr.mxu0 %v401
    %1002 = vmatpush1.msra.mxu0 %v400
    %1003 = vmatprep.subr.mxu0 %v417
    %1004 = vmatpush1.msra.mxu0 %v416
    %1005 = vmatprep.subr.mxu0 %v433
    %1006 = vmatpush1.msra.mxu0 %v432
    %1007 = vmatprep.subr.mxu0 %v449
    %1008 = vmatpush1.msra.mxu0 %v448
    %1009 = vmatprep.subr.mxu0 %v465
    %1010 = vmatpush1.msra.mxu0 %v464
    %1011 = vmatprep.subr.mxu0 0.0
    %1012 = vmatpush1.msra.mxu0 0.0
    %1013 = vmatprep.subr.mxu0 0.0
    %1014 = vmatpush1.msra.mxu0 0.0
    %1015 = vmatprep.subr.mxu0 0.0
    %1016 = vmatpush1.msra.mxu0 0.0
    %1017 = vmatprep.subr.mxu0 0.0
    %1018 = vmatpush1.msra.mxu0 0.0
    %1019 = vmatprep.subr.mxu0 0.0
    %1020 = vmatpush1.msra.mxu0 0.0
    %1021 = vmatprep.subr.mxu0 0.0
    %1022 = vmatpush1.msra.mxu0 0.0
    %1023 = vmatprep.subr.mxu0 0.0
    %1024 = vmatpush1.msra.mxu0 0.0
    %1025 = vmatprep.subr.mxu0 0.0
    %1026 = vmatpush1.msra.mxu0 0.0
    %1027 = vmatprep.subr.mxu0 0.0
    %1028 = vmatpush1.msra.mxu0 0.0
    %1029 = vmatprep.subr.mxu0 0.0
    %1030 = vmatpush1.msra.mxu0 0.0
    %1031 = vmatprep.subr.mxu0 0.0
    %1032 = vmatpush1.msra.mxu0 0.0
    %1033 = vmatprep.subr.mxu0 0.0
    %1034 = vmatpush1.msra.mxu0 0.0
    %1035 = vmatprep.subr.mxu0 0.0
    %1036 = vmatpush1.msra.mxu0 0.0
    %1037 = vmatprep.subr.mxu0 0.0
    %1038 = vmatpush1.msra.mxu0 0.0
    %1039 = vmatprep.subr.mxu0 0.0
    %1040 = vmatpush1.msra.mxu0 0.0
    %1041 = vmatprep.subr.mxu0 0.0
    %1042 = vmatpush1.msra.mxu0 0.0
    %1043 = vmatprep.subr.mxu0 0.0
    %1044 = vmatpush1.msra.mxu0 0.0
    %1045 = vmatprep.subr.mxu0 0.0
    %1046 = vmatpush1.msra.mxu0 0.0
    %1047 = vmatprep.subr.mxu0 0.0
    %1048 = vmatpush1.msra.mxu0 0.0
    %1049 = vmatprep.subr.mxu0 0.0
    %1050 = vmatpush1.msra.mxu0 0.0
    %1051 = vmatprep.subr.mxu0 0.0
    %1052 = vmatpush1.msra.mxu0 0.0
    %1053 = vmatprep.subr.mxu0 0.0
    %1054 = vmatpush1.msra.mxu0 0.0
    %1055 = vmatprep.subr.mxu0 0.0
    %1056 = vmatpush1.msra.mxu0 0.0
    %1057 = vmatprep.subr.mxu0 0.0
    %1058 = vmatpush1.msra.mxu0 0.0
    %1059 = vmatprep.mubr.f32.mxu0 0.0
    %1060 = vmatmul.mubr.f32.gmra.mrb[0].mxu0 %v948
    %v1061 = vpop.f32.mrb[0].mxu0
    %v1062 = vadd.f32 0.0, %v1061
    %v1063 = vpop.f32.mrb[0].mxu0
    %v1064 = vadd.f32 0.0, %v1063
    %1065 = vmatprep.mubr.f32.mxu0 0.0
    %1066 = vmatmul.mubr.f32.gmra.mrb[0].mxu0 %v951
    %v1067 = vpop.f32.mrb[0].mxu0
    %v1068 = vadd.f32 0.0, %v1067
    %v1069 = vpop.f32.mrb[0].mxu0
    %v1070 = vadd.f32 0.0, %v1069
    %1071 = vmatprep.mubr.f32.mxu0 0.0
    %1072 = vmatmul.mubr.f32.gmra.mrb[0].mxu0 %v954
    %v1073 = vpop.f32.mrb[0].mxu0
    %v1074 = vadd.f32 0.0, %v1073
    %v1075 = vpop.f32.mrb[0].mxu0
    %v1076 = vadd.f32 0.0, %v1075
    %1077 = vmatprep.mubr.f32.mxu0 0.0
    %1078 = vmatmul.mubr.f32.gmra.mrb[0].mxu0 %v957
    %v1079 = vpop.f32.mrb[0].mxu0
    %v1080 = vadd.f32 0.0, %v1079
    %v1081 = vpop.f32.mrb[0].mxu0
    %v1082 = vadd.f32 0.0, %v1081
    %1083 = vmatprep.mubr.f32.mxu0 0.0
    %1084 = vmatmul.mubr.f32.gmra.mrb[0].mxu0 %v960
    %v1085 = vpop.f32.mrb[0].mxu0
    %v1086 = vadd.f32 0.0, %v1085
    %v1087 = vpop.f32.mrb[0].mxu0
    %v1088 = vadd.f32 0.0, %v1087
    %1089 = vmatprep.mubr.f32.mxu0 0.0
    %1090 = vmatmul.mubr.f32.gmra.mrb[0].mxu0 %v963
    %v1091 = vpop.f32.mrb[0].mxu0
    %v1092 = vadd.f32 0.0, %v1091
    %v1093 = vpop.f32.mrb[0].mxu0
    %v1094 = vadd.f32 0.0, %v1093
    %1095 = vmatprep.mubr.f32.mxu0 0.0
    %1096 = vmatmul.mubr.f32.gmra.mrb[0].mxu0 %v966
    %v1097 = vpop.f32.mrb[0].mxu0
    %v1098 = vadd.f32 0.0, %v1097
    %v1099 = vpop.f32.mrb[0].mxu0
    %v1100 = vadd.f32 0.0, %v1099
    %1101 = vmatprep.mubr.f32.mxu0 0.0
    %1102 = vmatmul.mubr.f32.gmra.mrb[0].mxu0 %v969
    %v1103 = vpop.f32.mrb[0].mxu0
    %v1104 = vadd.f32 0.0, %v1103
    %v1105 = vpop.f32.mrb[0].mxu0
    %v1106 = vadd.f32 0.0, %v1105
    %1107 = vmatprep.mubr.f32.mxu0 0.0
    %1108 = vmatmul.mubr.f32.gmra.mrb[0].mxu0 %v972
    %v1109 = vpop.f32.mrb[0].mxu0
    %v1110 = vadd.f32 0.0, %v1109
    %v1111 = vpop.f32.mrb[0].mxu0
    %v1112 = vadd.f32 0.0, %v1111
    %1113 = vmatprep.mubr.f32.mxu0 0.0
    %1114 = vmatmul.mubr.f32.gmra.mrb[0].mxu0 %v975
    %v1115 = vpop.f32.mrb[0].mxu0
    %v1116 = vadd.f32 0.0, %v1115
    %v1117 = vpop.f32.mrb[0].mxu0
    %v1118 = vadd.f32 0.0, %v1117
    %1119 = vmatprep.mubr.f32.mxu0 0.0
    %1120 = vmatmul.mubr.f32.gmra.mrb[0].mxu0 %v978
    %v1121 = vpop.f32.mrb[0].mxu0
    %v1122 = vadd.f32 0.0, %v1121
    %v1123 = vpop.f32.mrb[0].mxu0
    %v1124 = vadd.f32 0.0, %v1123
    %1125 = vmatprep.mubr.f32.mxu0 0.0
    %1126 = vmatmul.mubr.f32.gmra.mrb[0].mxu0 %v981
    %v1127 = vpop.f32.mrb[0].mxu0
    %v1128 = vadd.f32 0.0, %v1127
    %v1129 = vpop.f32.mrb[0].mxu0
    %v1130 = vadd.f32 0.0, %v1129
    %1131 = vmatprep.mubr.f32.mxu0 0.0
    %1132 = vmatmul.mubr.f32.gmra.mrb[0].mxu0 %v984
    %v1133 = vpop.f32.mrb[0].mxu0
    %v1134 = vadd.f32 0.0, %v1133
    %v1135 = vpop.f32.mrb[0].mxu0
    %v1136 = vadd.f32 0.0, %v1135
    %1137 = vmatprep.mubr.f32.mxu0 0.0
    %1138 = vmatmul.mubr.f32.gmra.mrb[0].mxu0 %v987
    %v1139 = vpop.f32.mrb[0].mxu0
    %v1140 = vadd.f32 0.0, %v1139
    %v1141 = vpop.f32.mrb[0].mxu0
    %v1142 = vadd.f32 0.0, %v1141
    %1143 = vmatprep.mubr.f32.mxu0 0.0
    %1144 = vmatmul.mubr.f32.gmra.mrb[0].mxu0 %v990
    %v1145 = vpop.f32.mrb[0].mxu0
    %v1146 = vadd.f32 0.0, %v1145
    %v1147 = vpop.f32.mrb[0].mxu0
    %v1148 = vadd.f32 0.0, %v1147
    %1149 = vmatprep.mubr.f32.mxu0 0.0
    %1150 = vmatmul.mubr.f32.gmra.mrb[0].mxu0 %v993
    %v1151 = vpop.f32.mrb[0].mxu0
    %v1152 = vadd.f32 0.0, %v1151
    %v1153 = vpop.f32.mrb[0].mxu0
    %v1154 = vadd.f32 0.0, %v1153
    %1155 = vdwg.mxu0
    %1156 = vmatprep.subr.mxu0 %v355
    %1157 = vmatpush1.msra.mxu0 %v354
    %1158 = vmatprep.subr.mxu0 %v371
    %1159 = vmatpush1.msra.mxu0 %v370
    %1160 = vmatprep.subr.mxu0 %v387
    %1161 = vmatpush1.msra.mxu0 %v386
    %1162 = vmatprep.subr.mxu0 %v403
    %1163 = vmatpush1.msra.mxu0 %v402
    %1164 = vmatprep.subr.mxu0 %v419
    %1165 = vmatpush1.msra.mxu0 %v418
    %1166 = vmatprep.subr.mxu0 %v435
    %1167 = vmatpush1.msra.mxu0 %v434
    %1168 = vmatprep.subr.mxu0 %v451
    %1169 = vmatpush1.msra.mxu0 %v450
    %1170 = vmatprep.subr.mxu0 %v467
    %1171 = vmatpush1.msra.mxu0 %v466
    %1172 = vmatprep.subr.mxu0 0.0
    %1173 = vmatpush1.msra.mxu0 0.0
    %1174 = vmatprep.subr.mxu0 0.0
    %1175 = vmatpush1.msra.mxu0 0.0
    %1176 = vmatprep.subr.mxu0 0.0
    %1177 = vmatpush1.msra.mxu0 0.0
    %1178 = vmatprep.subr.mxu0 0.0
    %1179 = vmatpush1.msra.mxu0 0.0
    %1180 = vmatprep.subr.mxu0 0.0
    %1181 = vmatpush1.msra.mxu0 0.0
    %1182 = vmatprep.subr.mxu0 0.0
    %1183 = vmatpush1.msra.mxu0 0.0
    %1184 = vmatprep.subr.mxu0 0.0
    %1185 = vmatpush1.msra.mxu0 0.0
    %1186 = vmatprep.subr.mxu0 0.0
    %1187 = vmatpush1.msra.mxu0 0.0
    %1188 = vmatprep.subr.mxu0 0.0
    %1189 = vmatpush1.msra.mxu0 0.0
    %1190 = vmatprep.subr.mxu0 0.0
    %1191 = vmatpush1.msra.mxu0 0.0
    %1192 = vmatprep.subr.mxu0 0.0
    %1193 = vmatpush1.msra.mxu0 0.0
    %1194 = vmatprep.subr.mxu0 0.0
    %1195 = vmatpush1.msra.mxu0 0.0
    %1196 = vmatprep.subr.mxu0 0.0
    %1197 = vmatpush1.msra.mxu0 0.0
    %1198 = vmatprep.subr.mxu0 0.0
    %1199 = vmatpush1.msra.mxu0 0.0
    %1200 = vmatprep.subr.mxu0 0.0
    %1201 = vmatpush1.msra.mxu0 0.0
    %1202 = vmatprep.subr.mxu0 0.0
    %1203 = vmatpush1.msra.mxu0 0.0
    %1204 = vmatprep.subr.mxu0 0.0
    %1205 = vmatpush1.msra.mxu0 0.0
    %1206 = vmatprep.subr.mxu0 0.0
    %1207 = vmatpush1.msra.mxu0 0.0
    %1208 = vmatprep.subr.mxu0 0.0
    %1209 = vmatpush1.msra.mxu0 0.0
    %1210 = vmatprep.subr.mxu0 0.0
    %1211 = vmatpush1.msra.mxu0 0.0
    %1212 = vmatprep.subr.mxu0 0.0
    %1213 = vmatpush1.msra.mxu0 0.0
    %1214 = vmatprep.subr.mxu0 0.0
    %1215 = vmatpush1.msra.mxu0 0.0
    %1216 = vmatprep.subr.mxu0 0.0
    %1217 = vmatpush1.msra.mxu0 0.0
    %1218 = vmatprep.subr.mxu0 0.0
    %1219 = vmatpush1.msra.mxu0 0.0
    %1220 = vmatprep.mubr.f32.mxu0 0.0
    %1221 = vmatmul.mubr.f32.gmra.mrb[0].mxu0 %v948
    %v1222 = vpop.f32.mrb[0].mxu0
    %v1223 = vadd.f32 0.0, %v1222
    %v1224 = vpop.f32.mrb[0].mxu0
    %v1225 = vadd.f32 0.0, %v1224
    %1226 = vmatprep.mubr.f32.mxu0 0.0
    %1227 = vmatmul.mubr.f32.gmra.mrb[0].mxu0 %v951
    %v1228 = vpop.f32.mrb[0].mxu0
    %v1229 = vadd.f32 0.0, %v1228
    %v1230 = vpop.f32.mrb[0].mxu0
    %v1231 = vadd.f32 0.0, %v1230
    %1232 = vmatprep.mubr.f32.mxu0 0.0
    %1233 = vmatmul.mubr.f32.gmra.mrb[0].mxu0 %v954
    %v1234 = vpop.f32.mrb[0].mxu0
    %v1235 = vadd.f32 0.0, %v1234
    %v1236 = vpop.f32.mrb[0].mxu0
    %v1237 = vadd.f32 0.0, %v1236
    %1238 = vmatprep.mubr.f32.mxu0 0.0
    %1239 = vmatmul.mubr.f32.gmra.mrb[0].mxu0 %v957
    %v1240 = vpop.f32.mrb[0].mxu0
    %v1241 = vadd.f32 0.0, %v1240
    %v1242 = vpop.f32.mrb[0].mxu0
    %v1243 = vadd.f32 0.0, %v1242
    %1244 = vmatprep.mubr.f32.mxu0 0.0
    %1245 = vmatmul.mubr.f32.gmra.mrb[0].mxu0 %v960
    %v1246 = vpop.f32.mrb[0].mxu0
    %v1247 = vadd.f32 0.0, %v1246
    %v1248 = vpop.f32.mrb[0].mxu0
    %v1249 = vadd.f32 0.0, %v1248
    %1250 = vmatprep.mubr.f32.mxu0 0.0
    %1251 = vmatmul.mubr.f32.gmra.mrb[0].mxu0 %v963
    %v1252 = vpop.f32.mrb[0].mxu0
    %v1253 = vadd.f32 0.0, %v1252
    %v1254 = vpop.f32.mrb[0].mxu0
    %v1255 = vadd.f32 0.0, %v1254
    %1256 = vmatprep.mubr.f32.mxu0 0.0
    %1257 = vmatmul.mubr.f32.gmra.mrb[0].mxu0 %v966
    %v1258 = vpop.f32.mrb[0].mxu0
    %v1259 = vadd.f32 0.0, %v1258
    %v1260 = vpop.f32.mrb[0].mxu0
    %v1261 = vadd.f32 0.0, %v1260
    %1262 = vmatprep.mubr.f32.mxu0 0.0
    %1263 = vmatmul.mubr.f32.gmra.mrb[0].mxu0 %v969
    %v1264 = vpop.f32.mrb[0].mxu0
    %v1265 = vadd.f32 0.0, %v1264
    %v1266 = vpop.f32.mrb[0].mxu0
    %v1267 = vadd.f32 0.0, %v1266
    %1268 = vmatprep.mubr.f32.mxu0 0.0
    %1269 = vmatmul.mubr.f32.gmra.mrb[0].mxu0 %v972
    %v1270 = vpop.f32.mrb[0].mxu0
    %v1271 = vadd.f32 0.0, %v1270
    %v1272 = vpop.f32.mrb[0].mxu0
    %v1273 = vadd.f32 0.0, %v1272
    %1274 = vmatprep.mubr.f32.mxu0 0.0
    %1275 = vmatmul.mubr.f32.gmra.mrb[0].mxu0 %v975
    %v1276 = vpop.f32.mrb[0].mxu0
    %v1277 = vadd.f32 0.0, %v1276
    %v1278 = vpop.f32.mrb[0].mxu0
    %v1279 = vadd.f32 0.0, %v1278
    %1280 = vmatprep.mubr.f32.mxu0 0.0
    %1281 = vmatmul.mubr.f32.gmra.mrb[0].mxu0 %v978
    %v1282 = vpop.f32.mrb[0].mxu0
    %v1283 = vadd.f32 0.0, %v1282
    %v1284 = vpop.f32.mrb[0].mxu0
    %v1285 = vadd.f32 0.0, %v1284
    %1286 = vmatprep.mubr.f32.mxu0 0.0
    %1287 = vmatmul.mubr.f32.gmra.mrb[0].mxu0 %v981
    %v1288 = vpop.f32.mrb[0].mxu0
    %v1289 = vadd.f32 0.0, %v1288
    %v1290 = vpop.f32.mrb[0].mxu0
    %v1291 = vadd.f32 0.0, %v1290
    %1292 = vmatprep.mubr.f32.mxu0 0.0
    %1293 = vmatmul.mubr.f32.gmra.mrb[0].mxu0 %v984
    %v1294 = vpop.f32.mrb[0].mxu0
    %v1295 = vadd.f32 0.0, %v1294
    %v1296 = vpop.f32.mrb[0].mxu0
    %v1297 = vadd.f32 0.0, %v1296
    %1298 = vmatprep.mubr.f32.mxu0 0.0
    %1299 = vmatmul.mubr.f32.gmra.mrb[0].mxu0 %v987
    %v1300 = vpop.f32.mrb[0].mxu0
    %v1301 = vadd.f32 0.0, %v1300
    %v1302 = vpop.f32.mrb[0].mxu0
    %v1303 = vadd.f32 0.0, %v1302
    %1304 = vmatprep.mubr.f32.mxu0 0.0
    %1305 = vmatmul.mubr.f32.gmra.mrb[0].mxu0 %v990
    %v1306 = vpop.f32.mrb[0].mxu0
    %v1307 = vadd.f32 0.0, %v1306
    %v1308 = vpop.f32.mrb[0].mxu0
    %v1309 = vadd.f32 0.0, %v1308
    %1310 = vmatprep.mubr.f32.mxu0 0.0
    %1311 = vmatmul.mubr.f32.gmra.mrb[0].mxu0 %v993
    %v1312 = vpop.f32.mrb[0].mxu0
    %v1313 = vadd.f32 0.0, %v1312
    %v1314 = vpop.f32.mrb[0].mxu0
    %v1315 = vadd.f32 0.0, %v1314
    %1316 = vdwg.mxu0
    %1317 = vmatprep.subr.mxu0 %v357
    %1318 = vmatpush1.msra.mxu0 %v356
    %1319 = vmatprep.subr.mxu0 %v373
    %1320 = vmatpush1.msra.mxu0 %v372
    %1321 = vmatprep.subr.mxu0 %v389
    %1322 = vmatpush1.msra.mxu0 %v388
    %1323 = vmatprep.subr.mxu0 %v405
    %1324 = vmatpush1.msra.mxu0 %v404
    %1325 = vmatprep.subr.mxu0 %v421
    %1326 = vmatpush1.msra.mxu0 %v420
    %1327 = vmatprep.subr.mxu0 %v437
    %1328 = vmatpush1.msra.mxu0 %v436
    %1329 = vmatprep.subr.mxu0 %v453
    %1330 = vmatpush1.msra.mxu0 %v452
    %1331 = vmatprep.subr.mxu0 %v469
    %1332 = vmatpush1.msra.mxu0 %v468
    %1333 = vmatprep.subr.mxu0 0.0
    %1334 = vmatpush1.msra.mxu0 0.0
    %1335 = vmatprep.subr.mxu0 0.0
    %1336 = vmatpush1.msra.mxu0 0.0
    %1337 = vmatprep.subr.mxu0 0.0
    %1338 = vmatpush1.msra.mxu0 0.0
    %1339 = vmatprep.subr.mxu0 0.0
    %1340 = vmatpush1.msra.mxu0 0.0
    %1341 = vmatprep.subr.mxu0 0.0
    %1342 = vmatpush1.msra.mxu0 0.0
    %1343 = vmatprep.subr.mxu0 0.0
    %1344 = vmatpush1.msra.mxu0 0.0
    %1345 = vmatprep.subr.mxu0 0.0
    %1346 = vmatpush1.msra.mxu0 0.0
    %1347 = vmatprep.subr.mxu0 0.0
    %1348 = vmatpush1.msra.mxu0 0.0
    %1349 = vmatprep.subr.mxu0 0.0
    %1350 = vmatpush1.msra.mxu0 0.0
    %1351 = vmatprep.subr.mxu0 0.0
    %1352 = vmatpush1.msra.mxu0 0.0
    %1353 = vmatprep.subr.mxu0 0.0
    %1354 = vmatpush1.msra.mxu0 0.0
    %1355 = vmatprep.subr.mxu0 0.0
    %1356 = vmatpush1.msra.mxu0 0.0
    %1357 = vmatprep.subr.mxu0 0.0
    %1358 = vmatpush1.msra.mxu0 0.0
    %1359 = vmatprep.subr.mxu0 0.0
    %1360 = vmatpush1.msra.mxu0 0.0
    %1361 = vmatprep.subr.mxu0 0.0
    %1362 = vmatpush1.msra.mxu0 0.0
    %1363 = vmatprep.subr.mxu0 0.0
    %1364 = vmatpush1.msra.mxu0 0.0
    %1365 = vmatprep.subr.mxu0 0.0
    %1366 = vmatpush1.msra.mxu0 0.0
    %1367 = vmatprep.subr.mxu0 0.0
    %1368 = vmatpush1.msra.mxu0 0.0
    %1369 = vmatprep.subr.mxu0 0.0
    %1370 = vmatpush1.msra.mxu0 0.0
    %1371 = vmatprep.subr.mxu0 0.0
    %1372 = vmatpush1.msra.mxu0 0.0
    %1373 = vmatprep.subr.mxu0 0.0
    %1374 = vmatpush1.msra.mxu0 0.0
    %1375 = vmatprep.subr.mxu0 0.0
    %1376 = vmatpush1.msra.mxu0 0.0
    %1377 = vmatprep.subr.mxu0 0.0
    %1378 = vmatpush1.msra.mxu0 0.0
    %1379 = vmatprep.subr.mxu0 0.0
    %1380 = vmatpush1.msra.mxu0 0.0
    %1381 = vmatprep.mubr.f32.mxu0 0.0
    %1382 = vmatmul.mubr.f32.gmra.mrb[0].mxu0 %v948
    %v1383 = vpop.f32.mrb[0].mxu0
    %v1384 = vadd.f32 0.0, %v1383
    %v1385 = vpop.f32.mrb[0].mxu0
    %v1386 = vadd.f32 0.0, %v1385
    %1387 = vmatprep.mubr.f32.mxu0 0.0
    %1388 = vmatmul.mubr.f32.gmra.mrb[0].mxu0 %v951
    %v1389 = vpop.f32.mrb[0].mxu0
    %v1390 = vadd.f32 0.0, %v1389
    %v1391 = vpop.f32.mrb[0].mxu0
    %v1392 = vadd.f32 0.0, %v1391
    %1393 = vmatprep.mubr.f32.mxu0 0.0
    %1394 = vmatmul.mubr.f32.gmra.mrb[0].mxu0 %v954
    %v1395 = vpop.f32.mrb[0].mxu0
    %v1396 = vadd.f32 0.0, %v1395
    %v1397 = vpop.f32.mrb[0].mxu0
    %v1398 = vadd.f32 0.0, %v1397
    %1399 = vmatprep.mubr.f32.mxu0 0.0
    %1400 = vmatmul.mubr.f32.gmra.mrb[0].mxu0 %v957
    %v1401 = vpop.f32.mrb[0].mxu0
    %v1402 = vadd.f32 0.0, %v1401
    %v1403 = vpop.f32.mrb[0].mxu0
    %v1404 = vadd.f32 0.0, %v1403
    %1405 = vmatprep.mubr.f32.mxu0 0.0
    %1406 = vmatmul.mubr.f32.gmra.mrb[0].mxu0 %v960
    %v1407 = vpop.f32.mrb[0].mxu0
    %v1408 = vadd.f32 0.0, %v1407
    %v1409 = vpop.f32.mrb[0].mxu0
    %v1410 = vadd.f32 0.0, %v1409
    %1411 = vmatprep.mubr.f32.mxu0 0.0
    %1412 = vmatmul.mubr.f32.gmra.mrb[0].mxu0 %v963
    %v1413 = vpop.f32.mrb[0].mxu0
    %v1414 = vadd.f32 0.0, %v1413
    %v1415 = vpop.f32.mrb[0].mxu0
    %v1416 = vadd.f32 0.0, %v1415
    %1417 = vmatprep.mubr.f32.mxu0 0.0
    %1418 = vmatmul.mubr.f32.gmra.mrb[0].mxu0 %v966
    %v1419 = vpop.f32.mrb[0].mxu0
    %v1420 = vadd.f32 0.0, %v1419
    %v1421 = vpop.f32.mrb[0].mxu0
    %v1422 = vadd.f32 0.0, %v1421
    %1423 = vmatprep.mubr.f32.mxu0 0.0
    %1424 = vmatmul.mubr.f32.gmra.mrb[0].mxu0 %v969
    %v1425 = vpop.f32.mrb[0].mxu0
    %v1426 = vadd.f32 0.0, %v1425
    %v1427 = vpop.f32.mrb[0].mxu0
    %v1428 = vadd.f32 0.0, %v1427
    %1429 = vmatprep.mubr.f32.mxu0 0.0
    %1430 = vmatmul.mubr.f32.gmra.mrb[0].mxu0 %v972
    %v1431 = vpop.f32.mrb[0].mxu0
    %v1432 = vadd.f32 0.0, %v1431
    %v1433 = vpop.f32.mrb[0].mxu0
    %v1434 = vadd.f32 0.0, %v1433
    %1435 = vmatprep.mubr.f32.mxu0 0.0
    %1436 = vmatmul.mubr.f32.gmra.mrb[0].mxu0 %v975
    %v1437 = vpop.f32.mrb[0].mxu0
    %v1438 = vadd.f32 0.0, %v1437
    %v1439 = vpop.f32.mrb[0].mxu0
    %v1440 = vadd.f32 0.0, %v1439
    %1441 = vmatprep.mubr.f32.mxu0 0.0
    %1442 = vmatmul.mubr.f32.gmra.mrb[0].mxu0 %v978
    %v1443 = vpop.f32.mrb[0].mxu0
    %v1444 = vadd.f32 0.0, %v1443
    %v1445 = vpop.f32.mrb[0].mxu0
    %v1446 = vadd.f32 0.0, %v1445
    %1447 = vmatprep.mubr.f32.mxu0 0.0
    %1448 = vmatmul.mubr.f32.gmra.mrb[0].mxu0 %v981
    %v1449 = vpop.f32.mrb[0].mxu0
    %v1450 = vadd.f32 0.0, %v1449
    %v1451 = vpop.f32.mrb[0].mxu0
    %v1452 = vadd.f32 0.0, %v1451
    %1453 = vmatprep.mubr.f32.mxu0 0.0
    %1454 = vmatmul.mubr.f32.gmra.mrb[0].mxu0 %v984
    %v1455 = vpop.f32.mrb[0].mxu0
    %v1456 = vadd.f32 0.0, %v1455
    %v1457 = vpop.f32.mrb[0].mxu0
    %v1458 = vadd.f32 0.0, %v1457
    %1459 = vmatprep.mubr.f32.mxu0 0.0
    %1460 = vmatmul.mubr.f32.gmra.mrb[0].mxu0 %v987
    %v1461 = vpop.f32.mrb[0].mxu0
    %v1462 = vadd.f32 0.0, %v1461
    %v1463 = vpop.f32.mrb[0].mxu0
    %v1464 = vadd.f32 0.0, %v1463
    %1465 = vmatprep.mubr.f32.mxu0 0.0
    %1466 = vmatmul.mubr.f32.gmra.mrb[0].mxu0 %v990
    %v1467 = vpop.f32.mrb[0].mxu0
    %v1468 = vadd.f32 0.0, %v1467
    %v1469 = vpop.f32.mrb[0].mxu0
    %v1470 = vadd.f32 0.0, %v1469
    %1471 = vmatprep.mubr.f32.mxu0 0.0
    %1472 = vmatmul.mubr.f32.gmra.mrb[0].mxu0 %v993
    %v1473 = vpop.f32.mrb[0].mxu0
    %v1474 = vadd.f32 0.0, %v1473
    %v1475 = vpop.f32.mrb[0].mxu0
    %v1476 = vadd.f32 0.0, %v1475
    %1477 = vdwg.mxu0
    %1478 = vmatprep.subr.mxu0 %v359
    %1479 = vmatpush1.msra.mxu0 %v358
    %1480 = vmatprep.subr.mxu0 %v375
    %1481 = vmatpush1.msra.mxu0 %v374
    %1482 = vmatprep.subr.mxu0 %v391
    %1483 = vmatpush1.msra.mxu0 %v390
    %1484 = vmatprep.subr.mxu0 %v407
    %1485 = vmatpush1.msra.mxu0 %v406
    %1486 = vmatprep.subr.mxu0 %v423
    %1487 = vmatpush1.msra.mxu0 %v422
    %1488 = vmatprep.subr.mxu0 %v439
    %1489 = vmatpush1.msra.mxu0 %v438
    %1490 = vmatprep.subr.mxu0 %v455
    %1491 = vmatpush1.msra.mxu0 %v454
    %1492 = vmatprep.subr.mxu0 %v471
    %1493 = vmatpush1.msra.mxu0 %v470
    %1494 = vmatprep.subr.mxu0 0.0
    %1495 = vmatpush1.msra.mxu0 0.0
    %1496 = vmatprep.subr.mxu0 0.0
    %1497 = vmatpush1.msra.mxu0 0.0
    %1498 = vmatprep.subr.mxu0 0.0
    %1499 = vmatpush1.msra.mxu0 0.0
    %1500 = vmatprep.subr.mxu0 0.0
    %1501 = vmatpush1.msra.mxu0 0.0
    %1502 = vmatprep.subr.mxu0 0.0
    %1503 = vmatpush1.msra.mxu0 0.0
    %1504 = vmatprep.subr.mxu0 0.0
    %1505 = vmatpush1.msra.mxu0 0.0
    %1506 = vmatprep.subr.mxu0 0.0
    %1507 = vmatpush1.msra.mxu0 0.0
    %1508 = vmatprep.subr.mxu0 0.0
    %1509 = vmatpush1.msra.mxu0 0.0
    %1510 = vmatprep.subr.mxu0 0.0
    %1511 = vmatpush1.msra.mxu0 0.0
    %1512 = vmatprep.subr.mxu0 0.0
    %1513 = vmatpush1.msra.mxu0 0.0
    %1514 = vmatprep.subr.mxu0 0.0
    %1515 = vmatpush1.msra.mxu0 0.0
    %1516 = vmatprep.subr.mxu0 0.0
    %1517 = vmatpush1.msra.mxu0 0.0
    %1518 = vmatprep.subr.mxu0 0.0
    %1519 = vmatpush1.msra.mxu0 0.0
    %1520 = vmatprep.subr.mxu0 0.0
    %1521 = vmatpush1.msra.mxu0 0.0
    %1522 = vmatprep.subr.mxu0 0.0
    %1523 = vmatpush1.msra.mxu0 0.0
    %1524 = vmatprep.subr.mxu0 0.0
    %1525 = vmatpush1.msra.mxu0 0.0
    %1526 = vmatprep.subr.mxu0 0.0
    %1527 = vmatpush1.msra.mxu0 0.0
    %1528 = vmatprep.subr.mxu0 0.0
    %1529 = vmatpush1.msra.mxu0 0.0
    %1530 = vmatprep.subr.mxu0 0.0
    %1531 = vmatpush1.msra.mxu0 0.0
    %1532 = vmatprep.subr.mxu0 0.0
    %1533 = vmatpush1.msra.mxu0 0.0
    %1534 = vmatprep.subr.mxu0 0.0
    %1535 = vmatpush1.msra.mxu0 0.0
    %1536 = vmatprep.subr.mxu0 0.0
    %1537 = vmatpush1.msra.mxu0 0.0
    %1538 = vmatprep.subr.mxu0 0.0
    %1539 = vmatpush1.msra.mxu0 0.0
    %1540 = vmatprep.subr.mxu0 0.0
    %1541 = vmatpush1.msra.mxu0 0.0
    %1542 = vmatprep.mubr.f32.mxu0 0.0
    %1543 = vmatmul.mubr.f32.gmra.mrb[0].mxu0 %v948
    %v1544 = vpop.f32.mrb[0].mxu0
    %v1545 = vadd.f32 0.0, %v1544
    %v1546 = vpop.f32.mrb[0].mxu0
    %v1547 = vadd.f32 0.0, %v1546
    %1548 = vmatprep.mubr.f32.mxu0 0.0
    %1549 = vmatmul.mubr.f32.gmra.mrb[0].mxu0 %v951
    %v1550 = vpop.f32.mrb[0].mxu0
    %v1551 = vadd.f32 0.0, %v1550
    %v1552 = vpop.f32.mrb[0].mxu0
    %v1553 = vadd.f32 0.0, %v1552
    %1554 = vmatprep.mubr.f32.mxu0 0.0
    %1555 = vmatmul.mubr.f32.gmra.mrb[0].mxu0 %v954
    %v1556 = vpop.f32.mrb[0].mxu0
    %v1557 = vadd.f32 0.0, %v1556
    %v1558 = vpop.f32.mrb[0].mxu0
    %v1559 = vadd.f32 0.0, %v1558
    %1560 = vmatprep.mubr.f32.mxu0 0.0
    %1561 = vmatmul.mubr.f32.gmra.mrb[0].mxu0 %v957
    %v1562 = vpop.f32.mrb[0].mxu0
    %v1563 = vadd.f32 0.0, %v1562
    %v1564 = vpop.f32.mrb[0].mxu0
    %v1565 = vadd.f32 0.0, %v1564
    %1566 = vmatprep.mubr.f32.mxu0 0.0
    %1567 = vmatmul.mubr.f32.gmra.mrb[0].mxu0 %v960
    %v1568 = vpop.f32.mrb[0].mxu0
    %v1569 = vadd.f32 0.0, %v1568
    %v1570 = vpop.f32.mrb[0].mxu0
    %v1571 = vadd.f32 0.0, %v1570
    %1572 = vmatprep.mubr.f32.mxu0 0.0
    %1573 = vmatmul.mubr.f32.gmra.mrb[0].mxu0 %v963
    %v1574 = vpop.f32.mrb[0].mxu0
    %v1575 = vadd.f32 0.0, %v1574
    %v1576 = vpop.f32.mrb[0].mxu0
    %v1577 = vadd.f32 0.0, %v1576
    %1578 = vmatprep.mubr.f32.mxu0 0.0
    %1579 = vmatmul.mubr.f32.gmra.mrb[0].mxu0 %v966
    %v1580 = vpop.f32.mrb[0].mxu0
    %v1581 = vadd.f32 0.0, %v1580
    %v1582 = vpop.f32.mrb[0].mxu0
    %v1583 = vadd.f32 0.0, %v1582
    %1584 = vmatprep.mubr.f32.mxu0 0.0
    %1585 = vmatmul.mubr.f32.gmra.mrb[0].mxu0 %v969
    %v1586 = vpop.f32.mrb[0].mxu0
    %v1587 = vadd.f32 0.0, %v1586
    %v1588 = vpop.f32.mrb[0].mxu0
    %v1589 = vadd.f32 0.0, %v1588
    %1590 = vmatprep.mubr.f32.mxu0 0.0
    %1591 = vmatmul.mubr.f32.gmra.mrb[0].mxu0 %v972
    %v1592 = vpop.f32.mrb[0].mxu0
    %v1593 = vadd.f32 0.0, %v1592
    %v1594 = vpop.f32.mrb[0].mxu0
    %v1595 = vadd.f32 0.0, %v1594
    %1596 = vmatprep.mubr.f32.mxu0 0.0
    %1597 = vmatmul.mubr.f32.gmra.mrb[0].mxu0 %v975
    %v1598 = vpop.f32.mrb[0].mxu0
    %v1599 = vadd.f32 0.0, %v1598
    %v1600 = vpop.f32.mrb[0].mxu0
    %v1601 = vadd.f32 0.0, %v1600
    %1602 = vmatprep.mubr.f32.mxu0 0.0
    %1603 = vmatmul.mubr.f32.gmra.mrb[0].mxu0 %v978
    %v1604 = vpop.f32.mrb[0].mxu0
    %v1605 = vadd.f32 0.0, %v1604
    %v1606 = vpop.f32.mrb[0].mxu0
    %v1607 = vadd.f32 0.0, %v1606
    %1608 = vmatprep.mubr.f32.mxu0 0.0
    %1609 = vmatmul.mubr.f32.gmra.mrb[0].mxu0 %v981
    %v1610 = vpop.f32.mrb[0].mxu0
    %v1611 = vadd.f32 0.0, %v1610
    %v1612 = vpop.f32.mrb[0].mxu0
    %v1613 = vadd.f32 0.0, %v1612
    %1614 = vmatprep.mubr.f32.mxu0 0.0
    %1615 = vmatmul.mubr.f32.gmra.mrb[0].mxu0 %v984
    %v1616 = vpop.f32.mrb[0].mxu0
    %v1617 = vadd.f32 0.0, %v1616
    %v1618 = vpop.f32.mrb[0].mxu0
    %v1619 = vadd.f32 0.0, %v1618
    %1620 = vmatprep.mubr.f32.mxu0 0.0
    %1621 = vmatmul.mubr.f32.gmra.mrb[0].mxu0 %v987
    %v1622 = vpop.f32.mrb[0].mxu0
    %v1623 = vadd.f32 0.0, %v1622
    %v1624 = vpop.f32.mrb[0].mxu0
    %v1625 = vadd.f32 0.0, %v1624
    %1626 = vmatprep.mubr.f32.mxu0 0.0
    %1627 = vmatmul.mubr.f32.gmra.mrb[0].mxu0 %v990
    %v1628 = vpop.f32.mrb[0].mxu0
    %v1629 = vadd.f32 0.0, %v1628
    %v1630 = vpop.f32.mrb[0].mxu0
    %v1631 = vadd.f32 0.0, %v1630
    %1632 = vmatprep.mubr.f32.mxu0 0.0
    %1633 = vmatmul.mubr.f32.gmra.mrb[0].mxu0 %v993
    %v1634 = vpop.f32.mrb[0].mxu0
    %v1635 = vadd.f32 0.0, %v1634
    %v1636 = vpop.f32.mrb[0].mxu0
    %v1637 = vadd.f32 0.0, %v1636
    %1638 = vdwg.mxu0
    %1639 = vmatprep.subr.mxu0 %v361
    %1640 = vmatpush1.msra.mxu0 %v360
    %1641 = vmatprep.subr.mxu0 %v377
    %1642 = vmatpush1.msra.mxu0 %v376
    %1643 = vmatprep.subr.mxu0 %v393
    %1644 = vmatpush1.msra.mxu0 %v392
    %1645 = vmatprep.subr.mxu0 %v409
    %1646 = vmatpush1.msra.mxu0 %v408
    %1647 = vmatprep.subr.mxu0 %v425
    %1648 = vmatpush1.msra.mxu0 %v424
    %1649 = vmatprep.subr.mxu0 %v441
    %1650 = vmatpush1.msra.mxu0 %v440
    %1651 = vmatprep.subr.mxu0 %v457
    %1652 = vmatpush1.msra.mxu0 %v456
    %1653 = vmatprep.subr.mxu0 %v473
    %1654 = vmatpush1.msra.mxu0 %v472
    %1655 = vmatprep.subr.mxu0 0.0
    %1656 = vmatpush1.msra.mxu0 0.0
    %1657 = vmatprep.subr.mxu0 0.0
    %1658 = vmatpush1.msra.mxu0 0.0
    %1659 = vmatprep.subr.mxu0 0.0
    %1660 = vmatpush1.msra.mxu0 0.0
    %1661 = vmatprep.subr.mxu0 0.0
    %1662 = vmatpush1.msra.mxu0 0.0
    %1663 = vmatprep.subr.mxu0 0.0
    %1664 = vmatpush1.msra.mxu0 0.0
    %1665 = vmatprep.subr.mxu0 0.0
    %1666 = vmatpush1.msra.mxu0 0.0
    %1667 = vmatprep.subr.mxu0 0.0
    %1668 = vmatpush1.msra.mxu0 0.0
    %1669 = vmatprep.subr.mxu0 0.0
    %1670 = vmatpush1.msra.mxu0 0.0
    %1671 = vmatprep.subr.mxu0 0.0
    %1672 = vmatpush1.msra.mxu0 0.0
    %1673 = vmatprep.subr.mxu0 0.0
    %1674 = vmatpush1.msra.mxu0 0.0
    %1675 = vmatprep.subr.mxu0 0.0
    %1676 = vmatpush1.msra.mxu0 0.0
    %1677 = vmatprep.subr.mxu0 0.0
    %1678 = vmatpush1.msra.mxu0 0.0
    %1679 = vmatprep.subr.mxu0 0.0
    %1680 = vmatpush1.msra.mxu0 0.0
    %1681 = vmatprep.subr.mxu0 0.0
    %1682 = vmatpush1.msra.mxu0 0.0
    %1683 = vmatprep.subr.mxu0 0.0
    %1684 = vmatpush1.msra.mxu0 0.0
    %1685 = vmatprep.subr.mxu0 0.0
    %1686 = vmatpush1.msra.mxu0 0.0
    %1687 = vmatprep.subr.mxu0 0.0
    %1688 = vmatpush1.msra.mxu0 0.0
    %1689 = vmatprep.subr.mxu0 0.0
    %1690 = vmatpush1.msra.mxu0 0.0
    %1691 = vmatprep.subr.mxu0 0.0
    %1692 = vmatpush1.msra.mxu0 0.0
    %1693 = vmatprep.subr.mxu0 0.0
    %1694 = vmatpush1.msra.mxu0 0.0
    %1695 = vmatprep.subr.mxu0 0.0
    %1696 = vmatpush1.msra.mxu0 0.0
    %1697 = vmatprep.subr.mxu0 0.0
    %1698 = vmatpush1.msra.mxu0 0.0
    %1699 = vmatprep.subr.mxu0 0.0
    %1700 = vmatpush1.msra.mxu0 0.0
    %1701 = vmatprep.subr.mxu0 0.0
    %1702 = vmatpush1.msra.mxu0 0.0
    %1703 = vmatprep.mubr.f32.mxu0 0.0
    %1704 = vmatmul.mubr.f32.gmra.mrb[0].mxu0 %v948
    %v1705 = vpop.f32.mrb[0].mxu0
    %v1706 = vadd.f32 0.0, %v1705
    %v1707 = vpop.f32.mrb[0].mxu0
    %v1708 = vadd.f32 0.0, %v1707
    %1709 = vmatprep.mubr.f32.mxu0 0.0
    %1710 = vmatmul.mubr.f32.gmra.mrb[0].mxu0 %v951
    %v1711 = vpop.f32.mrb[0].mxu0
    %v1712 = vadd.f32 0.0, %v1711
    %v1713 = vpop.f32.mrb[0].mxu0
    %v1714 = vadd.f32 0.0, %v1713
    %1715 = vmatprep.mubr.f32.mxu0 0.0
    %1716 = vmatmul.mubr.f32.gmra.mrb[0].mxu0 %v954
    %v1717 = vpop.f32.mrb[0].mxu0
    %v1718 = vadd.f32 0.0, %v1717
    %v1719 = vpop.f32.mrb[0].mxu0
    %v1720 = vadd.f32 0.0, %v1719
    %1721 = vmatprep.mubr.f32.mxu0 0.0
    %1722 = vmatmul.mubr.f32.gmra.mrb[0].mxu0 %v957
    %v1723 = vpop.f32.mrb[0].mxu0
    %v1724 = vadd.f32 0.0, %v1723
    %v1725 = vpop.f32.mrb[0].mxu0
    %v1726 = vadd.f32 0.0, %v1725
    %1727 = vmatprep.mubr.f32.mxu0 0.0
    %1728 = vmatmul.mubr.f32.gmra.mrb[0].mxu0 %v960
    %v1729 = vpop.f32.mrb[0].mxu0
    %v1730 = vadd.f32 0.0, %v1729
    %v1731 = vpop.f32.mrb[0].mxu0
    %v1732 = vadd.f32 0.0, %v1731
    %1733 = vmatprep.mubr.f32.mxu0 0.0
    %1734 = vmatmul.mubr.f32.gmra.mrb[0].mxu0 %v963
    %v1735 = vpop.f32.mrb[0].mxu0
    %v1736 = vadd.f32 0.0, %v1735
    %v1737 = vpop.f32.mrb[0].mxu0
    %v1738 = vadd.f32 0.0, %v1737
    %1739 = vmatprep.mubr.f32.mxu0 0.0
    %1740 = vmatmul.mubr.f32.gmra.mrb[0].mxu0 %v966
    %v1741 = vpop.f32.mrb[0].mxu0
    %v1742 = vadd.f32 0.0, %v1741
    %v1743 = vpop.f32.mrb[0].mxu0
    %v1744 = vadd.f32 0.0, %v1743
    %1745 = vmatprep.mubr.f32.mxu0 0.0
    %1746 = vmatmul.mubr.f32.gmra.mrb[0].mxu0 %v969
    %v1747 = vpop.f32.mrb[0].mxu0
    %v1748 = vadd.f32 0.0, %v1747
    %v1749 = vpop.f32.mrb[0].mxu0
    %v1750 = vadd.f32 0.0, %v1749
    %1751 = vmatprep.mubr.f32.mxu0 0.0
    %1752 = vmatmul.mubr.f32.gmra.mrb[0].mxu0 %v972
    %v1753 = vpop.f32.mrb[0].mxu0
    %v1754 = vadd.f32 0.0, %v1753
    %v1755 = vpop.f32.mrb[0].mxu0
    %v1756 = vadd.f32 0.0, %v1755
    %1757 = vmatprep.mubr.f32.mxu0 0.0
    %1758 = vmatmul.mubr.f32.gmra.mrb[0].mxu0 %v975
    %v1759 = vpop.f32.mrb[0].mxu0
    %v1760 = vadd.f32 0.0, %v1759
    %v1761 = vpop.f32.mrb[0].mxu0
    %v1762 = vadd.f32 0.0, %v1761
    %1763 = vmatprep.mubr.f32.mxu0 0.0
    %1764 = vmatmul.mubr.f32.gmra.mrb[0].mxu0 %v978
    %v1765 = vpop.f32.mrb[0].mxu0
    %v1766 = vadd.f32 0.0, %v1765
    %v1767 = vpop.f32.mrb[0].mxu0
    %v1768 = vadd.f32 0.0, %v1767
    %1769 = vmatprep.mubr.f32.mxu0 0.0
    %1770 = vmatmul.mubr.f32.gmra.mrb[0].mxu0 %v981
    %v1771 = vpop.f32.mrb[0].mxu0
    %v1772 = vadd.f32 0.0, %v1771
    %v1773 = vpop.f32.mrb[0].mxu0
    %v1774 = vadd.f32 0.0, %v1773
    %1775 = vmatprep.mubr.f32.mxu0 0.0
    %1776 = vmatmul.mubr.f32.gmra.mrb[0].mxu0 %v984
    %v1777 = vpop.f32.mrb[0].mxu0
    %v1778 = vadd.f32 0.0, %v1777
    %v1779 = vpop.f32.mrb[0].mxu0
    %v1780 = vadd.f32 0.0, %v1779
    %1781 = vmatprep.mubr.f32.mxu0 0.0
    %1782 = vmatmul.mubr.f32.gmra.mrb[0].mxu0 %v987
    %v1783 = vpop.f32.mrb[0].mxu0
    %v1784 = vadd.f32 0.0, %v1783
    %v1785 = vpop.f32.mrb[0].mxu0
    %v1786 = vadd.f32 0.0, %v1785
    %1787 = vmatprep.mubr.f32.mxu0 0.0
    %1788 = vmatmul.mubr.f32.gmra.mrb[0].mxu0 %v990
    %v1789 = vpop.f32.mrb[0].mxu0
    %v1790 = vadd.f32 0.0, %v1789
    %v1791 = vpop.f32.mrb[0].mxu0
    %v1792 = vadd.f32 0.0, %v1791
    %1793 = vmatprep.mubr.f32.mxu0 0.0
    %1794 = vmatmul.mubr.f32.gmra.mrb[0].mxu0 %v993
    %v1795 = vpop.f32.mrb[0].mxu0
    %v1796 = vadd.f32 0.0, %v1795
    %v1797 = vpop.f32.mrb[0].mxu0
    %v1798 = vadd.f32 0.0, %v1797
    %1799 = vdwg.mxu0
    %1800 = vmatprep.subr.mxu0 %v363
    %1801 = vmatpush1.msra.mxu0 %v362
    %1802 = vmatprep.subr.mxu0 %v379
    %1803 = vmatpush1.msra.mxu0 %v378
    %1804 = vmatprep.subr.mxu0 %v395
    %1805 = vmatpush1.msra.mxu0 %v394
    %1806 = vmatprep.subr.mxu0 %v411
    %1807 = vmatpush1.msra.mxu0 %v410
    %1808 = vmatprep.subr.mxu0 %v427
    %1809 = vmatpush1.msra.mxu0 %v426
    %1810 = vmatprep.subr.mxu0 %v443
    %1811 = vmatpush1.msra.mxu0 %v442
    %1812 = vmatprep.subr.mxu0 %v459
    %1813 = vmatpush1.msra.mxu0 %v458
    %1814 = vmatprep.subr.mxu0 %v475
    %1815 = vmatpush1.msra.mxu0 %v474
    %1816 = vmatprep.subr.mxu0 0.0
    %1817 = vmatpush1.msra.mxu0 0.0
    %1818 = vmatprep.subr.mxu0 0.0
    %1819 = vmatpush1.msra.mxu0 0.0
    %1820 = vmatprep.subr.mxu0 0.0
    %1821 = vmatpush1.msra.mxu0 0.0
    %1822 = vmatprep.subr.mxu0 0.0
    %1823 = vmatpush1.msra.mxu0 0.0
    %1824 = vmatprep.subr.mxu0 0.0
    %1825 = vmatpush1.msra.mxu0 0.0
    %1826 = vmatprep.subr.mxu0 0.0
    %1827 = vmatpush1.msra.mxu0 0.0
    %1828 = vmatprep.subr.mxu0 0.0
    %1829 = vmatpush1.msra.mxu0 0.0
    %1830 = vmatprep.subr.mxu0 0.0
    %1831 = vmatpush1.msra.mxu0 0.0
    %1832 = vmatprep.subr.mxu0 0.0
    %1833 = vmatpush1.msra.mxu0 0.0
    %1834 = vmatprep.subr.mxu0 0.0
    %1835 = vmatpush1.msra.mxu0 0.0
    %1836 = vmatprep.subr.mxu0 0.0
    %1837 = vmatpush1.msra.mxu0 0.0
    %1838 = vmatprep.subr.mxu0 0.0
    %1839 = vmatpush1.msra.mxu0 0.0
    %1840 = vmatprep.subr.mxu0 0.0
    %1841 = vmatpush1.msra.mxu0 0.0
    %1842 = vmatprep.subr.mxu0 0.0
    %1843 = vmatpush1.msra.mxu0 0.0
    %1844 = vmatprep.subr.mxu0 0.0
    %1845 = vmatpush1.msra.mxu0 0.0
    %1846 = vmatprep.subr.mxu0 0.0
    %1847 = vmatpush1.msra.mxu0 0.0
    %1848 = vmatprep.subr.mxu0 0.0
    %1849 = vmatpush1.msra.mxu0 0.0
    %1850 = vmatprep.subr.mxu0 0.0
    %1851 = vmatpush1.msra.mxu0 0.0
    %1852 = vmatprep.subr.mxu0 0.0
    %1853 = vmatpush1.msra.mxu0 0.0
    %1854 = vmatprep.subr.mxu0 0.0
    %1855 = vmatpush1.msra.mxu0 0.0
    %1856 = vmatprep.subr.mxu0 0.0
    %1857 = vmatpush1.msra.mxu0 0.0
    %1858 = vmatprep.subr.mxu0 0.0
    %1859 = vmatpush1.msra.mxu0 0.0
    %1860 = vmatprep.subr.mxu0 0.0
    %1861 = vmatpush1.msra.mxu0 0.0
    %1862 = vmatprep.subr.mxu0 0.0
    %1863 = vmatpush1.msra.mxu0 0.0
    %1864 = vmatprep.mubr.f32.mxu0 0.0
    %1865 = vmatmul.mubr.f32.gmra.mrb[0].mxu0 %v948
    %v1866 = vpop.f32.mrb[0].mxu0
    %v1867 = vadd.f32 0.0, %v1866
    %v1868 = vpop.f32.mrb[0].mxu0
    %v1869 = vadd.f32 0.0, %v1868
    %1870 = vmatprep.mubr.f32.mxu0 0.0
    %1871 = vmatmul.mubr.f32.gmra.mrb[0].mxu0 %v951
    %v1872 = vpop.f32.mrb[0].mxu0
    %v1873 = vadd.f32 0.0, %v1872
    %v1874 = vpop.f32.mrb[0].mxu0
    %v1875 = vadd.f32 0.0, %v1874
    %1876 = vmatprep.mubr.f32.mxu0 0.0
    %1877 = vmatmul.mubr.f32.gmra.mrb[0].mxu0 %v954
    %v1878 = vpop.f32.mrb[0].mxu0
    %v1879 = vadd.f32 0.0, %v1878
    %v1880 = vpop.f32.mrb[0].mxu0
    %v1881 = vadd.f32 0.0, %v1880
    %1882 = vmatprep.mubr.f32.mxu0 0.0
    %1883 = vmatmul.mubr.f32.gmra.mrb[0].mxu0 %v957
    %v1884 = vpop.f32.mrb[0].mxu0
    %v1885 = vadd.f32 0.0, %v1884
    %v1886 = vpop.f32.mrb[0].mxu0
    %v1887 = vadd.f32 0.0, %v1886
    %1888 = vmatprep.mubr.f32.mxu0 0.0
    %1889 = vmatmul.mubr.f32.gmra.mrb[0].mxu0 %v960
    %v1890 = vpop.f32.mrb[0].mxu0
    %v1891 = vadd.f32 0.0, %v1890
    %v1892 = vpop.f32.mrb[0].mxu0
    %v1893 = vadd.f32 0.0, %v1892
    %1894 = vmatprep.mubr.f32.mxu0 0.0
    %1895 = vmatmul.mubr.f32.gmra.mrb[0].mxu0 %v963
    %v1896 = vpop.f32.mrb[0].mxu0
    %v1897 = vadd.f32 0.0, %v1896
    %v1898 = vpop.f32.mrb[0].mxu0
    %v1899 = vadd.f32 0.0, %v1898
    %1900 = vmatprep.mubr.f32.mxu0 0.0
    %1901 = vmatmul.mubr.f32.gmra.mrb[0].mxu0 %v966
    %v1902 = vpop.f32.mrb[0].mxu0
    %v1903 = vadd.f32 0.0, %v1902
    %v1904 = vpop.f32.mrb[0].mxu0
    %v1905 = vadd.f32 0.0, %v1904
    %1906 = vmatprep.mubr.f32.mxu0 0.0
    %1907 = vmatmul.mubr.f32.gmra.mrb[0].mxu0 %v969
    %v1908 = vpop.f32.mrb[0].mxu0
    %v1909 = vadd.f32 0.0, %v1908
    %v1910 = vpop.f32.mrb[0].mxu0
    %v1911 = vadd.f32 0.0, %v1910
    %1912 = vmatprep.mubr.f32.mxu0 0.0
    %1913 = vmatmul.mubr.f32.gmra.mrb[0].mxu0 %v972
    %v1914 = vpop.f32.mrb[0].mxu0
    %v1915 = vadd.f32 0.0, %v1914
    %v1916 = vpop.f32.mrb[0].mxu0
    %v1917 = vadd.f32 0.0, %v1916
    %1918 = vmatprep.mubr.f32.mxu0 0.0
    %1919 = vmatmul.mubr.f32.gmra.mrb[0].mxu0 %v975
    %v1920 = vpop.f32.mrb[0].mxu0
    %v1921 = vadd.f32 0.0, %v1920
    %v1922 = vpop.f32.mrb[0].mxu0
    %v1923 = vadd.f32 0.0, %v1922
    %1924 = vmatprep.mubr.f32.mxu0 0.0
    %1925 = vmatmul.mubr.f32.gmra.mrb[0].mxu0 %v978
    %v1926 = vpop.f32.mrb[0].mxu0
    %v1927 = vadd.f32 0.0, %v1926
    %v1928 = vpop.f32.mrb[0].mxu0
    %v1929 = vadd.f32 0.0, %v1928
    %1930 = vmatprep.mubr.f32.mxu0 0.0
    %1931 = vmatmul.mubr.f32.gmra.mrb[0].mxu0 %v981
    %v1932 = vpop.f32.mrb[0].mxu0
    %v1933 = vadd.f32 0.0, %v1932
    %v1934 = vpop.f32.mrb[0].mxu0
    %v1935 = vadd.f32 0.0, %v1934
    %1936 = vmatprep.mubr.f32.mxu0 0.0
    %1937 = vmatmul.mubr.f32.gmra.mrb[0].mxu0 %v984
    %v1938 = vpop.f32.mrb[0].mxu0
    %v1939 = vadd.f32 0.0, %v1938
    %v1940 = vpop.f32.mrb[0].mxu0
    %v1941 = vadd.f32 0.0, %v1940
    %1942 = vmatprep.mubr.f32.mxu0 0.0
    %1943 = vmatmul.mubr.f32.gmra.mrb[0].mxu0 %v987
    %v1944 = vpop.f32.mrb[0].mxu0
    %v1945 = vadd.f32 0.0, %v1944
    %v1946 = vpop.f32.mrb[0].mxu0
    %v1947 = vadd.f32 0.0, %v1946
    %1948 = vmatprep.mubr.f32.mxu0 0.0
    %1949 = vmatmul.mubr.f32.gmra.mrb[0].mxu0 %v990
    %v1950 = vpop.f32.mrb[0].mxu0
    %v1951 = vadd.f32 0.0, %v1950
    %v1952 = vpop.f32.mrb[0].mxu0
    %v1953 = vadd.f32 0.0, %v1952
    %1954 = vmatprep.mubr.f32.mxu0 0.0
    %1955 = vmatmul.mubr.f32.gmra.mrb[0].mxu0 %v993
    %v1956 = vpop.f32.mrb[0].mxu0
    %v1957 = vadd.f32 0.0, %v1956
    %v1958 = vpop.f32.mrb[0].mxu0
    %v1959 = vadd.f32 0.0, %v1958
    %1960 = vdwg.mxu0
    %1961 = vmatprep.subr.mxu0 %v365
    %1962 = vmatpush1.msra.mxu0 %v364
    %1963 = vmatprep.subr.mxu0 %v381
    %1964 = vmatpush1.msra.mxu0 %v380
    %1965 = vmatprep.subr.mxu0 %v397
    %1966 = vmatpush1.msra.mxu0 %v396
    %1967 = vmatprep.subr.mxu0 %v413
    %1968 = vmatpush1.msra.mxu0 %v412
    %1969 = vmatprep.subr.mxu0 %v429
    %1970 = vmatpush1.msra.mxu0 %v428
    %1971 = vmatprep.subr.mxu0 %v445
    %1972 = vmatpush1.msra.mxu0 %v444
    %1973 = vmatprep.subr.mxu0 %v461
    %1974 = vmatpush1.msra.mxu0 %v460
    %1975 = vmatprep.subr.mxu0 %v477
    %1976 = vmatpush1.msra.mxu0 %v476
    %1977 = vmatprep.subr.mxu0 0.0
    %1978 = vmatpush1.msra.mxu0 0.0
    %1979 = vmatprep.subr.mxu0 0.0
    %1980 = vmatpush1.msra.mxu0 0.0
    %1981 = vmatprep.subr.mxu0 0.0
    %1982 = vmatpush1.msra.mxu0 0.0
    %1983 = vmatprep.subr.mxu0 0.0
    %1984 = vmatpush1.msra.mxu0 0.0
    %1985 = vmatprep.subr.mxu0 0.0
    %1986 = vmatpush1.msra.mxu0 0.0
    %1987 = vmatprep.subr.mxu0 0.0
    %1988 = vmatpush1.msra.mxu0 0.0
    %1989 = vmatprep.subr.mxu0 0.0
    %1990 = vmatpush1.msra.mxu0 0.0
    %1991 = vmatprep.subr.mxu0 0.0
    %1992 = vmatpush1.msra.mxu0 0.0
    %1993 = vmatprep.subr.mxu0 0.0
    %1994 = vmatpush1.msra.mxu0 0.0
    %1995 = vmatprep.subr.mxu0 0.0
    %1996 = vmatpush1.msra.mxu0 0.0
    %1997 = vmatprep.subr.mxu0 0.0
    %1998 = vmatpush1.msra.mxu0 0.0
    %1999 = vmatprep.subr.mxu0 0.0
    %2000 = vmatpush1.msra.mxu0 0.0
    %2001 = vmatprep.subr.mxu0 0.0
    %2002 = vmatpush1.msra.mxu0 0.0
    %2003 = vmatprep.subr.mxu0 0.0
    %2004 = vmatpush1.msra.mxu0 0.0
    %2005 = vmatprep.subr.mxu0 0.0
    %2006 = vmatpush1.msra.mxu0 0.0
    %2007 = vmatprep.subr.mxu0 0.0
    %2008 = vmatpush1.msra.mxu0 0.0
    %2009 = vmatprep.subr.mxu0 0.0
    %2010 = vmatpush1.msra.mxu0 0.0
    %2011 = vmatprep.subr.mxu0 0.0
    %2012 = vmatpush1.msra.mxu0 0.0
    %2013 = vmatprep.subr.mxu0 0.0
    %2014 = vmatpush1.msra.mxu0 0.0
    %2015 = vmatprep.subr.mxu0 0.0
    %2016 = vmatpush1.msra.mxu0 0.0
    %2017 = vmatprep.subr.mxu0 0.0
    %2018 = vmatpush1.msra.mxu0 0.0
    %2019 = vmatprep.subr.mxu0 0.0
    %2020 = vmatpush1.msra.mxu0 0.0
    %2021 = vmatprep.subr.mxu0 0.0
    %2022 = vmatpush1.msra.mxu0 0.0
    %2023 = vmatprep.subr.mxu0 0.0
    %2024 = vmatpush1.msra.mxu0 0.0
    %2025 = vmatprep.mubr.f32.mxu0 0.0
    %2026 = vmatmul.mubr.f32.gmra.mrb[0].mxu0 %v948
    %v2027 = vpop.f32.mrb[0].mxu0
    %v2028 = vadd.f32 0.0, %v2027
    %v2029 = vpop.f32.mrb[0].mxu0
    %v2030 = vadd.f32 0.0, %v2029
    %2031 = vmatprep.mubr.f32.mxu0 0.0
    %2032 = vmatmul.mubr.f32.gmra.mrb[0].mxu0 %v951
    %v2033 = vpop.f32.mrb[0].mxu0
    %v2034 = vadd.f32 0.0, %v2033
    %v2035 = vpop.f32.mrb[0].mxu0
    %v2036 = vadd.f32 0.0, %v2035
    %2037 = vmatprep.mubr.f32.mxu0 0.0
    %2038 = vmatmul.mubr.f32.gmra.mrb[0].mxu0 %v954
    %v2039 = vpop.f32.mrb[0].mxu0
    %v2040 = vadd.f32 0.0, %v2039
    %v2041 = vpop.f32.mrb[0].mxu0
    %v2042 = vadd.f32 0.0, %v2041
    %2043 = vmatprep.mubr.f32.mxu0 0.0
    %2044 = vmatmul.mubr.f32.gmra.mrb[0].mxu0 %v957
    %v2045 = vpop.f32.mrb[0].mxu0
    %v2046 = vadd.f32 0.0, %v2045
    %v2047 = vpop.f32.mrb[0].mxu0
    %v2048 = vadd.f32 0.0, %v2047
    %2049 = vmatprep.mubr.f32.mxu0 0.0
    %2050 = vmatmul.mubr.f32.gmra.mrb[0].mxu0 %v960
    %v2051 = vpop.f32.mrb[0].mxu0
    %v2052 = vadd.f32 0.0, %v2051
    %v2053 = vpop.f32.mrb[0].mxu0
    %v2054 = vadd.f32 0.0, %v2053
    %2055 = vmatprep.mubr.f32.mxu0 0.0
    %2056 = vmatmul.mubr.f32.gmra.mrb[0].mxu0 %v963
    %v2057 = vpop.f32.mrb[0].mxu0
    %v2058 = vadd.f32 0.0, %v2057
    %v2059 = vpop.f32.mrb[0].mxu0
    %v2060 = vadd.f32 0.0, %v2059
    %2061 = vmatprep.mubr.f32.mxu0 0.0
    %2062 = vmatmul.mubr.f32.gmra.mrb[0].mxu0 %v966
    %v2063 = vpop.f32.mrb[0].mxu0
    %v2064 = vadd.f32 0.0, %v2063
    %v2065 = vpop.f32.mrb[0].mxu0
    %v2066 = vadd.f32 0.0, %v2065
    %2067 = vmatprep.mubr.f32.mxu0 0.0
    %2068 = vmatmul.mubr.f32.gmra.mrb[0].mxu0 %v969
    %v2069 = vpop.f32.mrb[0].mxu0
    %v2070 = vadd.f32 0.0, %v2069
    %v2071 = vpop.f32.mrb[0].mxu0
    %v2072 = vadd.f32 0.0, %v2071
    %2073 = vmatprep.mubr.f32.mxu0 0.0
    %2074 = vmatmul.mubr.f32.gmra.mrb[0].mxu0 %v972
    %v2075 = vpop.f32.mrb[0].mxu0
    %v2076 = vadd.f32 0.0, %v2075
    %v2077 = vpop.f32.mrb[0].mxu0
    %v2078 = vadd.f32 0.0, %v2077
    %2079 = vmatprep.mubr.f32.mxu0 0.0
    %2080 = vmatmul.mubr.f32.gmra.mrb[0].mxu0 %v975
    %v2081 = vpop.f32.mrb[0].mxu0
    %v2082 = vadd.f32 0.0, %v2081
    %v2083 = vpop.f32.mrb[0].mxu0
    %v2084 = vadd.f32 0.0, %v2083
    %2085 = vmatprep.mubr.f32.mxu0 0.0
    %2086 = vmatmul.mubr.f32.gmra.mrb[0].mxu0 %v978
    %v2087 = vpop.f32.mrb[0].mxu0
    %v2088 = vadd.f32 0.0, %v2087
    %v2089 = vpop.f32.mrb[0].mxu0
    %v2090 = vadd.f32 0.0, %v2089
    %2091 = vmatprep.mubr.f32.mxu0 0.0
    %2092 = vmatmul.mubr.f32.gmra.mrb[0].mxu0 %v981
    %v2093 = vpop.f32.mrb[0].mxu0
    %v2094 = vadd.f32 0.0, %v2093
    %v2095 = vpop.f32.mrb[0].mxu0
    %v2096 = vadd.f32 0.0, %v2095
    %2097 = vmatprep.mubr.f32.mxu0 0.0
    %2098 = vmatmul.mubr.f32.gmra.mrb[0].mxu0 %v984
    %v2099 = vpop.f32.mrb[0].mxu0
    %v2100 = vadd.f32 0.0, %v2099
    %v2101 = vpop.f32.mrb[0].mxu0
    %v2102 = vadd.f32 0.0, %v2101
    %2103 = vmatprep.mubr.f32.mxu0 0.0
    %2104 = vmatmul.mubr.f32.gmra.mrb[0].mxu0 %v987
    %v2105 = vpop.f32.mrb[0].mxu0
    %v2106 = vadd.f32 0.0, %v2105
    %v2107 = vpop.f32.mrb[0].mxu0
    %v2108 = vadd.f32 0.0, %v2107
    %2109 = vmatprep.mubr.f32.mxu0 0.0
    %2110 = vmatmul.mubr.f32.gmra.mrb[0].mxu0 %v990
    %v2111 = vpop.f32.mrb[0].mxu0
    %v2112 = vadd.f32 0.0, %v2111
    %v2113 = vpop.f32.mrb[0].mxu0
    %v2114 = vadd.f32 0.0, %v2113
    %2115 = vmatprep.mubr.f32.mxu0 0.0
    %2116 = vmatmul.mubr.f32.gmra.mrb[0].mxu0 %v993
    %v2117 = vpop.f32.mrb[0].mxu0
    %v2118 = vadd.f32 0.0, %v2117
    %v2119 = vpop.f32.mrb[0].mxu0
    %v2120 = vadd.f32 0.0, %v2119
    %2121 = vdwg.mxu0
    %2122 = vmatprep.subr.mxu0 %v367
    %2123 = vmatpush1.msra.mxu0 %v366
    %2124 = vmatprep.subr.mxu0 %v383
    %2125 = vmatpush1.msra.mxu0 %v382
    %2126 = vmatprep.subr.mxu0 %v399
    %2127 = vmatpush1.msra.mxu0 %v398
    %2128 = vmatprep.subr.mxu0 %v415
    %2129 = vmatpush1.msra.mxu0 %v414
    %2130 = vmatprep.subr.mxu0 %v431
    %2131 = vmatpush1.msra.mxu0 %v430
    %2132 = vmatprep.subr.mxu0 %v447
    %2133 = vmatpush1.msra.mxu0 %v446
    %2134 = vmatprep.subr.mxu0 %v463
    %2135 = vmatpush1.msra.mxu0 %v462
    %2136 = vmatprep.subr.mxu0 %v479
    %2137 = vmatpush1.msra.mxu0 %v478
    %2138 = vmatprep.subr.mxu0 0.0
    %2139 = vmatpush1.msra.mxu0 0.0
    %2140 = vmatprep.subr.mxu0 0.0
    %2141 = vmatpush1.msra.mxu0 0.0
    %2142 = vmatprep.subr.mxu0 0.0
    %2143 = vmatpush1.msra.mxu0 0.0
    %2144 = vmatprep.subr.mxu0 0.0
    %2145 = vmatpush1.msra.mxu0 0.0
    %2146 = vmatprep.subr.mxu0 0.0
    %2147 = vmatpush1.msra.mxu0 0.0
    %2148 = vmatprep.subr.mxu0 0.0
    %2149 = vmatpush1.msra.mxu0 0.0
    %2150 = vmatprep.subr.mxu0 0.0
    %2151 = vmatpush1.msra.mxu0 0.0
    %2152 = vmatprep.subr.mxu0 0.0
    %2153 = vmatpush1.msra.mxu0 0.0
    %2154 = vmatprep.subr.mxu0 0.0
    %2155 = vmatpush1.msra.mxu0 0.0
    %2156 = vmatprep.subr.mxu0 0.0
    %2157 = vmatpush1.msra.mxu0 0.0
    %2158 = vmatprep.subr.mxu0 0.0
    %2159 = vmatpush1.msra.mxu0 0.0
    %2160 = vmatprep.subr.mxu0 0.0
    %2161 = vmatpush1.msra.mxu0 0.0
    %2162 = vmatprep.subr.mxu0 0.0
    %2163 = vmatpush1.msra.mxu0 0.0
    %2164 = vmatprep.subr.mxu0 0.0
    %2165 = vmatpush1.msra.mxu0 0.0
    %2166 = vmatprep.subr.mxu0 0.0
    %2167 = vmatpush1.msra.mxu0 0.0
    %2168 = vmatprep.subr.mxu0 0.0
    %2169 = vmatpush1.msra.mxu0 0.0
    %2170 = vmatprep.subr.mxu0 0.0
    %2171 = vmatpush1.msra.mxu0 0.0
    %2172 = vmatprep.subr.mxu0 0.0
    %2173 = vmatpush1.msra.mxu0 0.0
    %2174 = vmatprep.subr.mxu0 0.0
    %2175 = vmatpush1.msra.mxu0 0.0
    %2176 = vmatprep.subr.mxu0 0.0
    %2177 = vmatpush1.msra.mxu0 0.0
    %2178 = vmatprep.subr.mxu0 0.0
    %2179 = vmatpush1.msra.mxu0 0.0
    %2180 = vmatprep.subr.mxu0 0.0
    %2181 = vmatpush1.msra.mxu0 0.0
    %2182 = vmatprep.subr.mxu0 0.0
    %2183 = vmatpush1.msra.mxu0 0.0
    %2184 = vmatprep.subr.mxu0 0.0
    %2185 = vmatpush1.msra.mxu0 0.0
    %2186 = vmatprep.mubr.f32.mxu0 0.0
    %2187 = vmatmul.mubr.f32.gmra.mrb[0].mxu0 %v948
    %v2188 = vpop.f32.mrb[0].mxu0
    %v2189 = vadd.f32 0.0, %v2188
    %v2190 = vpop.f32.mrb[0].mxu0
    %v2191 = vadd.f32 0.0, %v2190
    %2192 = vmatprep.mubr.f32.mxu0 0.0
    %2193 = vmatmul.mubr.f32.gmra.mrb[0].mxu0 %v951
    %v2194 = vpop.f32.mrb[0].mxu0
    %v2195 = vadd.f32 0.0, %v2194
    %v2196 = vpop.f32.mrb[0].mxu0
    %v2197 = vadd.f32 0.0, %v2196
    %2198 = vmatprep.mubr.f32.mxu0 0.0
    %2199 = vmatmul.mubr.f32.gmra.mrb[0].mxu0 %v954
    %v2200 = vpop.f32.mrb[0].mxu0
    %v2201 = vadd.f32 0.0, %v2200
    %v2202 = vpop.f32.mrb[0].mxu0
    %v2203 = vadd.f32 0.0, %v2202
    %2204 = vmatprep.mubr.f32.mxu0 0.0
    %2205 = vmatmul.mubr.f32.gmra.mrb[0].mxu0 %v957
    %v2206 = vpop.f32.mrb[0].mxu0
    %v2207 = vadd.f32 0.0, %v2206
    %v2208 = vpop.f32.mrb[0].mxu0
    %v2209 = vadd.f32 0.0, %v2208
    %2210 = vmatprep.mubr.f32.mxu0 0.0
    %2211 = vmatmul.mubr.f32.gmra.mrb[0].mxu0 %v960
    %v2212 = vpop.f32.mrb[0].mxu0
    %v2213 = vadd.f32 0.0, %v2212
    %v2214 = vpop.f32.mrb[0].mxu0
    %v2215 = vadd.f32 0.0, %v2214
    %2216 = vmatprep.mubr.f32.mxu0 0.0
    %2217 = vmatmul.mubr.f32.gmra.mrb[0].mxu0 %v963
    %v2218 = vpop.f32.mrb[0].mxu0
    %v2219 = vadd.f32 0.0, %v2218
    %v2220 = vpop.f32.mrb[0].mxu0
    %v2221 = vadd.f32 0.0, %v2220
    %2222 = vmatprep.mubr.f32.mxu0 0.0
    %2223 = vmatmul.mubr.f32.gmra.mrb[0].mxu0 %v966
    %v2224 = vpop.f32.mrb[0].mxu0
    %v2225 = vadd.f32 0.0, %v2224
    %v2226 = vpop.f32.mrb[0].mxu0
    %v2227 = vadd.f32 0.0, %v2226
    %2228 = vmatprep.mubr.f32.mxu0 0.0
    %2229 = vmatmul.mubr.f32.gmra.mrb[0].mxu0 %v969
    %v2230 = vpop.f32.mrb[0].mxu0
    %v2231 = vadd.f32 0.0, %v2230
    %v2232 = vpop.f32.mrb[0].mxu0
    %v2233 = vadd.f32 0.0, %v2232
    %2234 = vmatprep.mubr.f32.mxu0 0.0
    %2235 = vmatmul.mubr.f32.gmra.mrb[0].mxu0 %v972
    %v2236 = vpop.f32.mrb[0].mxu0
    %v2237 = vadd.f32 0.0, %v2236
    %v2238 = vpop.f32.mrb[0].mxu0
    %v2239 = vadd.f32 0.0, %v2238
    %2240 = vmatprep.mubr.f32.mxu0 0.0
    %2241 = vmatmul.mubr.f32.gmra.mrb[0].mxu0 %v975
    %v2242 = vpop.f32.mrb[0].mxu0
    %v2243 = vadd.f32 0.0, %v2242
    %v2244 = vpop.f32.mrb[0].mxu0
    %v2245 = vadd.f32 0.0, %v2244
    %2246 = vmatprep.mubr.f32.mxu0 0.0
    %2247 = vmatmul.mubr.f32.gmra.mrb[0].mxu0 %v978
    %v2248 = vpop.f32.mrb[0].mxu0
    %v2249 = vadd.f32 0.0, %v2248
    %v2250 = vpop.f32.mrb[0].mxu0
    %v2251 = vadd.f32 0.0, %v2250
    %2252 = vmatprep.mubr.f32.mxu0 0.0
    %2253 = vmatmul.mubr.f32.gmra.mrb[0].mxu0 %v981
    %v2254 = vpop.f32.mrb[0].mxu0
    %v2255 = vadd.f32 0.0, %v2254
    %v2256 = vpop.f32.mrb[0].mxu0
    %v2257 = vadd.f32 0.0, %v2256
    %2258 = vmatprep.mubr.f32.mxu0 0.0
    %2259 = vmatmul.mubr.f32.gmra.mrb[0].mxu0 %v984
    %v2260 = vpop.f32.mrb[0].mxu0
    %v2261 = vadd.f32 0.0, %v2260
    %v2262 = vpop.f32.mrb[0].mxu0
    %v2263 = vadd.f32 0.0, %v2262
    %2264 = vmatprep.mubr.f32.mxu0 0.0
    %2265 = vmatmul.mubr.f32.gmra.mrb[0].mxu0 %v987
    %v2266 = vpop.f32.mrb[0].mxu0
    %v2267 = vadd.f32 0.0, %v2266
    %v2268 = vpop.f32.mrb[0].mxu0
    %v2269 = vadd.f32 0.0, %v2268
    %2270 = vmatprep.mubr.f32.mxu0 0.0
    %2271 = vmatmul.mubr.f32.gmra.mrb[0].mxu0 %v990
    %v2272 = vpop.f32.mrb[0].mxu0
    %v2273 = vadd.f32 0.0, %v2272
    %v2274 = vpop.f32.mrb[0].mxu0
    %v2275 = vadd.f32 0.0, %v2274
    %2276 = vmatprep.mubr.f32.mxu0 0.0
    %2277 = vmatmul.mubr.f32.gmra.mrb[0].mxu0 %v993
    %v2278 = vpop.f32.mrb[0].mxu0
    %v2279 = vadd.f32 0.0, %v2278
    %v2280 = vpop.f32.mrb[0].mxu0
    %v2281 = vadd.f32 0.0, %v2280
    %2282 = vdwg.mxu0
    %v2283 = vld [vmem:[%s1] sm:$0xff]
    %v2284 = vld [vmem:[%s1 + $0x8] sm:$0xff]
    %v2285 = vld [vmem:[%s1 + $0x10] sm:$0xff]
    %v2286 = vld [vmem:[%s1 + $0x18] sm:$0xff]
    %v2287 = vld [vmem:[%s1 + $0x20] sm:$0xff]
    %v2288 = vld [vmem:[%s1 + $0x28] sm:$0xff]
    %v2289 = vld [vmem:[%s1 + $0x30] sm:$0xff]
    %v2290 = vld [vmem:[%s1 + $0x38] sm:$0xff]
    %v2291 = vld [vmem:[%s1 + $0x40] sm:$0xff]
    %v2292 = vld [vmem:[%s1 + $0x48] sm:$0xff]
    %v2293 = vld [vmem:[%s1 + $0x50] sm:$0xff]
    %v2294 = vld [vmem:[%s1 + $0x58] sm:$0xff]
    %v2295 = vld [vmem:[%s1 + $0x60] sm:$0xff]
    %v2296 = vld [vmem:[%s1 + $0x68] sm:$0xff]
    %v2297 = vld [vmem:[%s1 + $0x70] sm:$0xff]
    %v2298 = vld [vmem:[%s1 + $0x78] sm:$0xff]
    %v2300 = vsel %vm946, %v2283, 0
    %v2303 = vsel %vm946, %v2284, 0
    %v2306 = vsel %vm946, %v2285, 0
    %v2309 = vsel %vm946, %v2286, 0
    %v2312 = vsel %vm946, %v2287, 0
    %v2315 = vsel %vm946, %v2288, 0
    %v2318 = vsel %vm946, %v2289, 0
    %v2321 = vsel %vm946, %v2290, 0
    %v2324 = vsel %vm946, %v2291, 0
    %v2327 = vsel %vm946, %v2292, 0
    %v2330 = vsel %vm946, %v2293, 0
    %v2333 = vsel %vm946, %v2294, 0
    %v2336 = vsel %vm946, %v2295, 0
    %v2339 = vsel %vm946, %v2296, 0
    %v2342 = vsel %vm946, %v2297, 0
    %v2345 = vsel %vm946, %v2298, 0
    %2347 = vmatprep.subr.mxu0 %v803
    %2348 = vmatpush1.msra.mxu0 %v802
    %2349 = vmatprep.subr.mxu0 %v819
    %2350 = vmatpush1.msra.mxu0 %v818
    %2351 = vmatprep.subr.mxu0 %v835
    %2352 = vmatpush1.msra.mxu0 %v834
    %2353 = vmatprep.subr.mxu0 %v851
    %2354 = vmatpush1.msra.mxu0 %v850
    %2355 = vmatprep.subr.mxu0 %v867
    %2356 = vmatpush1.msra.mxu0 %v866
    %2357 = vmatprep.subr.mxu0 %v883
    %2358 = vmatpush1.msra.mxu0 %v882
    %2359 = vmatprep.subr.mxu0 %v899
    %2360 = vmatpush1.msra.mxu0 %v898
    %2361 = vmatprep.subr.mxu0 %v915
    %2362 = vmatpush1.msra.mxu0 %v914
    %2363 = vmatprep.subr.mxu0 0.0
    %2364 = vmatpush1.msra.mxu0 0.0
    %2365 = vmatprep.subr.mxu0 0.0
    %2366 = vmatpush1.msra.mxu0 0.0
    %2367 = vmatprep.subr.mxu0 0.0
    %2368 = vmatpush1.msra.mxu0 0.0
    %2369 = vmatprep.subr.mxu0 0.0
    %2370 = vmatpush1.msra.mxu0 0.0
    %2371 = vmatprep.subr.mxu0 0.0
    %2372 = vmatpush1.msra.mxu0 0.0
    %2373 = vmatprep.subr.mxu0 0.0
    %2374 = vmatpush1.msra.mxu0 0.0
    %2375 = vmatprep.subr.mxu0 0.0
    %2376 = vmatpush1.msra.mxu0 0.0
    %2377 = vmatprep.subr.mxu0 0.0
    %2378 = vmatpush1.msra.mxu0 0.0
    %2379 = vmatprep.subr.mxu0 0.0
    %2380 = vmatpush1.msra.mxu0 0.0
    %2381 = vmatprep.subr.mxu0 0.0
    %2382 = vmatpush1.msra.mxu0 0.0
    %2383 = vmatprep.subr.mxu0 0.0
    %2384 = vmatpush1.msra.mxu0 0.0
    %2385 = vmatprep.subr.mxu0 0.0
    %2386 = vmatpush1.msra.mxu0 0.0
    %2387 = vmatprep.subr.mxu0 0.0
    %2388 = vmatpush1.msra.mxu0 0.0
    %2389 = vmatprep.subr.mxu0 0.0
    %2390 = vmatpush1.msra.mxu0 0.0
    %2391 = vmatprep.subr.mxu0 0.0
    %2392 = vmatpush1.msra.mxu0 0.0
    %2393 = vmatprep.subr.mxu0 0.0
    %2394 = vmatpush1.msra.mxu0 0.0
    %2395 = vmatprep.subr.mxu0 0.0
    %2396 = vmatpush1.msra.mxu0 0.0
    %2397 = vmatprep.subr.mxu0 0.0
    %2398 = vmatpush1.msra.mxu0 0.0
    %2399 = vmatprep.subr.mxu0 0.0
    %2400 = vmatpush1.msra.mxu0 0.0
    %2401 = vmatprep.subr.mxu0 0.0
    %2402 = vmatpush1.msra.mxu0 0.0
    %2403 = vmatprep.subr.mxu0 0.0
    %2404 = vmatpush1.msra.mxu0 0.0
    %2405 = vmatprep.subr.mxu0 0.0
    %2406 = vmatpush1.msra.mxu0 0.0
    %2407 = vmatprep.subr.mxu0 0.0
    %2408 = vmatpush1.msra.mxu0 0.0
    %2409 = vmatprep.subr.mxu0 0.0
    %2410 = vmatpush1.msra.mxu0 0.0
    %2411 = vmatprep.mubr.f32.mxu0 0.0
    %2412 = vmatmul.mubr.f32.gmra.mrb[0].mxu0 %v2300
    %v2413 = vpop.f32.mrb[0].mxu0
    %v2414 = vadd.f32 0.0, %v2413
    %v2415 = vpop.f32.mrb[0].mxu0
    %v2416 = vadd.f32 0.0, %v2415
    %2417 = vmatprep.mubr.f32.mxu0 0.0
    %2418 = vmatmul.mubr.f32.gmra.mrb[0].mxu0 %v2303
    %v2419 = vpop.f32.mrb[0].mxu0
    %v2420 = vadd.f32 0.0, %v2419
    %v2421 = vpop.f32.mrb[0].mxu0
    %v2422 = vadd.f32 0.0, %v2421
    %2423 = vmatprep.mubr.f32.mxu0 0.0
    %2424 = vmatmul.mubr.f32.gmra.mrb[0].mxu0 %v2306
    %v2425 = vpop.f32.mrb[0].mxu0
    %v2426 = vadd.f32 0.0, %v2425
    %v2427 = vpop.f32.mrb[0].mxu0
    %v2428 = vadd.f32 0.0, %v2427
    %2429 = vmatprep.mubr.f32.mxu0 0.0
    %2430 = vmatmul.mubr.f32.gmra.mrb[0].mxu0 %v2309
    %v2431 = vpop.f32.mrb[0].mxu0
    %v2432 = vadd.f32 0.0, %v2431
    %v2433 = vpop.f32.mrb[0].mxu0
    %v2434 = vadd.f32 0.0, %v2433
    %2435 = vmatprep.mubr.f32.mxu0 0.0
    %2436 = vmatmul.mubr.f32.gmra.mrb[0].mxu0 %v2312
    %v2437 = vpop.f32.mrb[0].mxu0
    %v2438 = vadd.f32 0.0, %v2437
    %v2439 = vpop.f32.mrb[0].mxu0
    %v2440 = vadd.f32 0.0, %v2439
    %2441 = vmatprep.mubr.f32.mxu0 0.0
    %2442 = vmatmul.mubr.f32.gmra.mrb[0].mxu0 %v2315
    %v2443 = vpop.f32.mrb[0].mxu0
    %v2444 = vadd.f32 0.0, %v2443
    %v2445 = vpop.f32.mrb[0].mxu0
    %v2446 = vadd.f32 0.0, %v2445
    %2447 = vmatprep.mubr.f32.mxu0 0.0
    %2448 = vmatmul.mubr.f32.gmra.mrb[0].mxu0 %v2318
    %v2449 = vpop.f32.mrb[0].mxu0
    %v2450 = vadd.f32 0.0, %v2449
    %v2451 = vpop.f32.mrb[0].mxu0
    %v2452 = vadd.f32 0.0, %v2451
    %2453 = vmatprep.mubr.f32.mxu0 0.0
    %2454 = vmatmul.mubr.f32.gmra.mrb[0].mxu0 %v2321
    %v2455 = vpop.f32.mrb[0].mxu0
    %v2456 = vadd.f32 0.0, %v2455
    %v2457 = vpop.f32.mrb[0].mxu0
    %v2458 = vadd.f32 0.0, %v2457
    %2459 = vmatprep.mubr.f32.mxu0 0.0
    %2460 = vmatmul.mubr.f32.gmra.mrb[0].mxu0 %v2324
    %v2461 = vpop.f32.mrb[0].mxu0
    %v2462 = vadd.f32 0.0, %v2461
    %v2463 = vpop.f32.mrb[0].mxu0
    %v2464 = vadd.f32 0.0, %v2463
    %2465 = vmatprep.mubr.f32.mxu0 0.0
    %2466 = vmatmul.mubr.f32.gmra.mrb[0].mxu0 %v2327
    %v2467 = vpop.f32.mrb[0].mxu0
    %v2468 = vadd.f32 0.0, %v2467
    %v2469 = vpop.f32.mrb[0].mxu0
    %v2470 = vadd.f32 0.0, %v2469
    %2471 = vmatprep.mubr.f32.mxu0 0.0
    %2472 = vmatmul.mubr.f32.gmra.mrb[0].mxu0 %v2330
    %v2473 = vpop.f32.mrb[0].mxu0
    %v2474 = vadd.f32 0.0, %v2473
    %v2475 = vpop.f32.mrb[0].mxu0
    %v2476 = vadd.f32 0.0, %v2475
    %2477 = vmatprep.mubr.f32.mxu0 0.0
    %2478 = vmatmul.mubr.f32.gmra.mrb[0].mxu0 %v2333
    %v2479 = vpop.f32.mrb[0].mxu0
    %v2480 = vadd.f32 0.0, %v2479
    %v2481 = vpop.f32.mrb[0].mxu0
    %v2482 = vadd.f32 0.0, %v2481
    %2483 = vmatprep.mubr.f32.mxu0 0.0
    %2484 = vmatmul.mubr.f32.gmra.mrb[0].mxu0 %v2336
    %v2485 = vpop.f32.mrb[0].mxu0
    %v2486 = vadd.f32 0.0, %v2485
    %v2487 = vpop.f32.mrb[0].mxu0
    %v2488 = vadd.f32 0.0, %v2487
    %2489 = vmatprep.mubr.f32.mxu0 0.0
    %2490 = vmatmul.mubr.f32.gmra.mrb[0].mxu0 %v2339
    %v2491 = vpop.f32.mrb[0].mxu0
    %v2492 = vadd.f32 0.0, %v2491
    %v2493 = vpop.f32.mrb[0].mxu0
    %v2494 = vadd.f32 0.0, %v2493
    %2495 = vmatprep.mubr.f32.mxu0 0.0
    %2496 = vmatmul.mubr.f32.gmra.mrb[0].mxu0 %v2342
    %v2497 = vpop.f32.mrb[0].mxu0
    %v2498 = vadd.f32 0.0, %v2497
    %v2499 = vpop.f32.mrb[0].mxu0
    %v2500 = vadd.f32 0.0, %v2499
    %2501 = vmatprep.mubr.f32.mxu0 0.0
    %2502 = vmatmul.mubr.f32.gmra.mrb[0].mxu0 %v2345
    %v2503 = vpop.f32.mrb[0].mxu0
    %v2504 = vadd.f32 0.0, %v2503
    %v2505 = vpop.f32.mrb[0].mxu0
    %v2506 = vadd.f32 0.0, %v2505
    %2507 = vdwg.mxu0
    %2508 = vmatprep.subr.mxu0 %v805
    %2509 = vmatpush1.msra.mxu0 %v804
    %2510 = vmatprep.subr.mxu0 %v821
    %2511 = vmatpush1.msra.mxu0 %v820
    %2512 = vmatprep.subr.mxu0 %v837
    %2513 = vmatpush1.msra.mxu0 %v836
    %2514 = vmatprep.subr.mxu0 %v853
    %2515 = vmatpush1.msra.mxu0 %v852
    %2516 = vmatprep.subr.mxu0 %v869
    %2517 = vmatpush1.msra.mxu0 %v868
    %2518 = vmatprep.subr.mxu0 %v885
    %2519 = vmatpush1.msra.mxu0 %v884
    %2520 = vmatprep.subr.mxu0 %v901
    %2521 = vmatpush1.msra.mxu0 %v900
    %2522 = vmatprep.subr.mxu0 %v917
    %2523 = vmatpush1.msra.mxu0 %v916
    %2524 = vmatprep.subr.mxu0 0.0
    %2525 = vmatpush1.msra.mxu0 0.0
    %2526 = vmatprep.subr.mxu0 0.0
    %2527 = vmatpush1.msra.mxu0 0.0
    %2528 = vmatprep.subr.mxu0 0.0
    %2529 = vmatpush1.msra.mxu0 0.0
    %2530 = vmatprep.subr.mxu0 0.0
    %2531 = vmatpush1.msra.mxu0 0.0
    %2532 = vmatprep.subr.mxu0 0.0
    %2533 = vmatpush1.msra.mxu0 0.0
    %2534 = vmatprep.subr.mxu0 0.0
    %2535 = vmatpush1.msra.mxu0 0.0
    %2536 = vmatprep.subr.mxu0 0.0
    %2537 = vmatpush1.msra.mxu0 0.0
    %2538 = vmatprep.subr.mxu0 0.0
    %2539 = vmatpush1.msra.mxu0 0.0
    %2540 = vmatprep.subr.mxu0 0.0
    %2541 = vmatpush1.msra.mxu0 0.0
    %2542 = vmatprep.subr.mxu0 0.0
    %2543 = vmatpush1.msra.mxu0 0.0
    %2544 = vmatprep.subr.mxu0 0.0
    %2545 = vmatpush1.msra.mxu0 0.0
    %2546 = vmatprep.subr.mxu0 0.0
    %2547 = vmatpush1.msra.mxu0 0.0
    %2548 = vmatprep.subr.mxu0 0.0
    %2549 = vmatpush1.msra.mxu0 0.0
    %2550 = vmatprep.subr.mxu0 0.0
    %2551 = vmatpush1.msra.mxu0 0.0
    %2552 = vmatprep.subr.mxu0 0.0
    %2553 = vmatpush1.msra.mxu0 0.0
    %2554 = vmatprep.subr.mxu0 0.0
    %2555 = vmatpush1.msra.mxu0 0.0
    %2556 = vmatprep.subr.mxu0 0.0
    %2557 = vmatpush1.msra.mxu0 0.0
    %2558 = vmatprep.subr.mxu0 0.0
    %2559 = vmatpush1.msra.mxu0 0.0
    %2560 = vmatprep.subr.mxu0 0.0
    %2561 = vmatpush1.msra.mxu0 0.0
    %2562 = vmatprep.subr.mxu0 0.0
    %2563 = vmatpush1.msra.mxu0 0.0
    %2564 = vmatprep.subr.mxu0 0.0
    %2565 = vmatpush1.msra.mxu0 0.0
    %2566 = vmatprep.subr.mxu0 0.0
    %2567 = vmatpush1.msra.mxu0 0.0
    %2568 = vmatprep.subr.mxu0 0.0
    %2569 = vmatpush1.msra.mxu0 0.0
    %2570 = vmatprep.subr.mxu0 0.0
    %2571 = vmatpush1.msra.mxu0 0.0
    %2572 = vmatprep.mubr.f32.mxu0 0.0
    %2573 = vmatmul.mubr.f32.gmra.mrb[0].mxu0 %v2300
    %v2574 = vpop.f32.mrb[0].mxu0
    %v2575 = vadd.f32 0.0, %v2574
    %v2576 = vpop.f32.mrb[0].mxu0
    %v2577 = vadd.f32 0.0, %v2576
    %2578 = vmatprep.mubr.f32.mxu0 0.0
    %2579 = vmatmul.mubr.f32.gmra.mrb[0].mxu0 %v2303
    %v2580 = vpop.f32.mrb[0].mxu0
    %v2581 = vadd.f32 0.0, %v2580
    %v2582 = vpop.f32.mrb[0].mxu0
    %v2583 = vadd.f32 0.0, %v2582
    %2584 = vmatprep.mubr.f32.mxu0 0.0
    %2585 = vmatmul.mubr.f32.gmra.mrb[0].mxu0 %v2306
    %v2586 = vpop.f32.mrb[0].mxu0
    %v2587 = vadd.f32 0.0, %v2586
    %v2588 = vpop.f32.mrb[0].mxu0
    %v2589 = vadd.f32 0.0, %v2588
    %2590 = vmatprep.mubr.f32.mxu0 0.0
    %2591 = vmatmul.mubr.f32.gmra.mrb[0].mxu0 %v2309
    %v2592 = vpop.f32.mrb[0].mxu0
    %v2593 = vadd.f32 0.0, %v2592
    %v2594 = vpop.f32.mrb[0].mxu0
    %v2595 = vadd.f32 0.0, %v2594
    %2596 = vmatprep.mubr.f32.mxu0 0.0
    %2597 = vmatmul.mubr.f32.gmra.mrb[0].mxu0 %v2312
    %v2598 = vpop.f32.mrb[0].mxu0
    %v2599 = vadd.f32 0.0, %v2598
    %v2600 = vpop.f32.mrb[0].mxu0
    %v2601 = vadd.f32 0.0, %v2600
    %2602 = vmatprep.mubr.f32.mxu0 0.0
    %2603 = vmatmul.mubr.f32.gmra.mrb[0].mxu0 %v2315
    %v2604 = vpop.f32.mrb[0].mxu0
    %v2605 = vadd.f32 0.0, %v2604
    %v2606 = vpop.f32.mrb[0].mxu0
    %v2607 = vadd.f32 0.0, %v2606
    %2608 = vmatprep.mubr.f32.mxu0 0.0
    %2609 = vmatmul.mubr.f32.gmra.mrb[0].mxu0 %v2318
    %v2610 = vpop.f32.mrb[0].mxu0
    %v2611 = vadd.f32 0.0, %v2610
    %v2612 = vpop.f32.mrb[0].mxu0
    %v2613 = vadd.f32 0.0, %v2612
    %2614 = vmatprep.mubr.f32.mxu0 0.0
    %2615 = vmatmul.mubr.f32.gmra.mrb[0].mxu0 %v2321
    %v2616 = vpop.f32.mrb[0].mxu0
    %v2617 = vadd.f32 0.0, %v2616
    %v2618 = vpop.f32.mrb[0].mxu0
    %v2619 = vadd.f32 0.0, %v2618
    %2620 = vmatprep.mubr.f32.mxu0 0.0
    %2621 = vmatmul.mubr.f32.gmra.mrb[0].mxu0 %v2324
    %v2622 = vpop.f32.mrb[0].mxu0
    %v2623 = vadd.f32 0.0, %v2622
    %v2624 = vpop.f32.mrb[0].mxu0
    %v2625 = vadd.f32 0.0, %v2624
    %2626 = vmatprep.mubr.f32.mxu0 0.0
    %2627 = vmatmul.mubr.f32.gmra.mrb[0].mxu0 %v2327
    %v2628 = vpop.f32.mrb[0].mxu0
    %v2629 = vadd.f32 0.0, %v2628
    %v2630 = vpop.f32.mrb[0].mxu0
    %v2631 = vadd.f32 0.0, %v2630
    %2632 = vmatprep.mubr.f32.mxu0 0.0
    %2633 = vmatmul.mubr.f32.gmra.mrb[0].mxu0 %v2330
    %v2634 = vpop.f32.mrb[0].mxu0
    %v2635 = vadd.f32 0.0, %v2634
    %v2636 = vpop.f32.mrb[0].mxu0
    %v2637 = vadd.f32 0.0, %v2636
    %2638 = vmatprep.mubr.f32.mxu0 0.0
    %2639 = vmatmul.mubr.f32.gmra.mrb[0].mxu0 %v2333
    %v2640 = vpop.f32.mrb[0].mxu0
    %v2641 = vadd.f32 0.0, %v2640
    %v2642 = vpop.f32.mrb[0].mxu0
    %v2643 = vadd.f32 0.0, %v2642
    %2644 = vmatprep.mubr.f32.mxu0 0.0
    %2645 = vmatmul.mubr.f32.gmra.mrb[0].mxu0 %v2336
    %v2646 = vpop.f32.mrb[0].mxu0
    %v2647 = vadd.f32 0.0, %v2646
    %v2648 = vpop.f32.mrb[0].mxu0
    %v2649 = vadd.f32 0.0, %v2648
    %2650 = vmatprep.mubr.f32.mxu0 0.0
    %2651 = vmatmul.mubr.f32.gmra.mrb[0].mxu0 %v2339
    %v2652 = vpop.f32.mrb[0].mxu0
    %v2653 = vadd.f32 0.0, %v2652
    %v2654 = vpop.f32.mrb[0].mxu0
    %v2655 = vadd.f32 0.0, %v2654
    %2656 = vmatprep.mubr.f32.mxu0 0.0
    %2657 = vmatmul.mubr.f32.gmra.mrb[0].mxu0 %v2342
    %v2658 = vpop.f32.mrb[0].mxu0
    %v2659 = vadd.f32 0.0, %v2658
    %v2660 = vpop.f32.mrb[0].mxu0
    %v2661 = vadd.f32 0.0, %v2660
    %2662 = vmatprep.mubr.f32.mxu0 0.0
    %2663 = vmatmul.mubr.f32.gmra.mrb[0].mxu0 %v2345
    %v2664 = vpop.f32.mrb[0].mxu0
    %v2665 = vadd.f32 0.0, %v2664
    %v2666 = vpop.f32.mrb[0].mxu0
    %v2667 = vadd.f32 0.0, %v2666
    %2668 = vdwg.mxu0
    %2669 = vmatprep.subr.mxu0 %v807
    %2670 = vmatpush1.msra.mxu0 %v806
    %2671 = vmatprep.subr.mxu0 %v823
    %2672 = vmatpush1.msra.mxu0 %v822
    %2673 = vmatprep.subr.mxu0 %v839
    %2674 = vmatpush1.msra.mxu0 %v838
    %2675 = vmatprep.subr.mxu0 %v855
    %2676 = vmatpush1.msra.mxu0 %v854
    %2677 = vmatprep.subr.mxu0 %v871
    %2678 = vmatpush1.msra.mxu0 %v870
    %2679 = vmatprep.subr.mxu0 %v887
    %2680 = vmatpush1.msra.mxu0 %v886
    %2681 = vmatprep.subr.mxu0 %v903
    %2682 = vmatpush1.msra.mxu0 %v902
    %2683 = vmatprep.subr.mxu0 %v919
    %2684 = vmatpush1.msra.mxu0 %v918
    %2685 = vmatprep.subr.mxu0 0.0
    %2686 = vmatpush1.msra.mxu0 0.0
    %2687 = vmatprep.subr.mxu0 0.0
    %2688 = vmatpush1.msra.mxu0 0.0
    %2689 = vmatprep.subr.mxu0 0.0
    %2690 = vmatpush1.msra.mxu0 0.0
    %2691 = vmatprep.subr.mxu0 0.0
    %2692 = vmatpush1.msra.mxu0 0.0
    %2693 = vmatprep.subr.mxu0 0.0
    %2694 = vmatpush1.msra.mxu0 0.0
    %2695 = vmatprep.subr.mxu0 0.0
    %2696 = vmatpush1.msra.mxu0 0.0
    %2697 = vmatprep.subr.mxu0 0.0
    %2698 = vmatpush1.msra.mxu0 0.0
    %2699 = vmatprep.subr.mxu0 0.0
    %2700 = vmatpush1.msra.mxu0 0.0
    %2701 = vmatprep.subr.mxu0 0.0
    %2702 = vmatpush1.msra.mxu0 0.0
    %2703 = vmatprep.subr.mxu0 0.0
    %2704 = vmatpush1.msra.mxu0 0.0
    %2705 = vmatprep.subr.mxu0 0.0
    %2706 = vmatpush1.msra.mxu0 0.0
    %2707 = vmatprep.subr.mxu0 0.0
    %2708 = vmatpush1.msra.mxu0 0.0
    %2709 = vmatprep.subr.mxu0 0.0
    %2710 = vmatpush1.msra.mxu0 0.0
    %2711 = vmatprep.subr.mxu0 0.0
    %2712 = vmatpush1.msra.mxu0 0.0
    %2713 = vmatprep.subr.mxu0 0.0
    %2714 = vmatpush1.msra.mxu0 0.0
    %2715 = vmatprep.subr.mxu0 0.0
    %2716 = vmatpush1.msra.mxu0 0.0
    %2717 = vmatprep.subr.mxu0 0.0
    %2718 = vmatpush1.msra.mxu0 0.0
    %2719 = vmatprep.subr.mxu0 0.0
    %2720 = vmatpush1.msra.mxu0 0.0
    %2721 = vmatprep.subr.mxu0 0.0
    %2722 = vmatpush1.msra.mxu0 0.0
    %2723 = vmatprep.subr.mxu0 0.0
    %2724 = vmatpush1.msra.mxu0 0.0
    %2725 = vmatprep.subr.mxu0 0.0
    %2726 = vmatpush1.msra.mxu0 0.0
    %2727 = vmatprep.subr.mxu0 0.0
    %2728 = vmatpush1.msra.mxu0 0.0
    %2729 = vmatprep.subr.mxu0 0.0
    %2730 = vmatpush1.msra.mxu0 0.0
    %2731 = vmatprep.subr.mxu0 0.0
    %2732 = vmatpush1.msra.mxu0 0.0
    %2733 = vmatprep.mubr.f32.mxu0 0.0
    %2734 = vmatmul.mubr.f32.gmra.mrb[0].mxu0 %v2300
    %v2735 = vpop.f32.mrb[0].mxu0
    %v2736 = vadd.f32 0.0, %v2735
    %v2737 = vpop.f32.mrb[0].mxu0
    %v2738 = vadd.f32 0.0, %v2737
    %2739 = vmatprep.mubr.f32.mxu0 0.0
    %2740 = vmatmul.mubr.f32.gmra.mrb[0].mxu0 %v2303
    %v2741 = vpop.f32.mrb[0].mxu0
    %v2742 = vadd.f32 0.0, %v2741
    %v2743 = vpop.f32.mrb[0].mxu0
    %v2744 = vadd.f32 0.0, %v2743
    %2745 = vmatprep.mubr.f32.mxu0 0.0
    %2746 = vmatmul.mubr.f32.gmra.mrb[0].mxu0 %v2306
    %v2747 = vpop.f32.mrb[0].mxu0
    %v2748 = vadd.f32 0.0, %v2747
    %v2749 = vpop.f32.mrb[0].mxu0
    %v2750 = vadd.f32 0.0, %v2749
    %2751 = vmatprep.mubr.f32.mxu0 0.0
    %2752 = vmatmul.mubr.f32.gmra.mrb[0].mxu0 %v2309
    %v2753 = vpop.f32.mrb[0].mxu0
    %v2754 = vadd.f32 0.0, %v2753
    %v2755 = vpop.f32.mrb[0].mxu0
    %v2756 = vadd.f32 0.0, %v2755
    %2757 = vmatprep.mubr.f32.mxu0 0.0
    %2758 = vmatmul.mubr.f32.gmra.mrb[0].mxu0 %v2312
    %v2759 = vpop.f32.mrb[0].mxu0
    %v2760 = vadd.f32 0.0, %v2759
    %v2761 = vpop.f32.mrb[0].mxu0
    %v2762 = vadd.f32 0.0, %v2761
    %2763 = vmatprep.mubr.f32.mxu0 0.0
    %2764 = vmatmul.mubr.f32.gmra.mrb[0].mxu0 %v2315
    %v2765 = vpop.f32.mrb[0].mxu0
    %v2766 = vadd.f32 0.0, %v2765
    %v2767 = vpop.f32.mrb[0].mxu0
    %v2768 = vadd.f32 0.0, %v2767
    %2769 = vmatprep.mubr.f32.mxu0 0.0
    %2770 = vmatmul.mubr.f32.gmra.mrb[0].mxu0 %v2318
    %v2771 = vpop.f32.mrb[0].mxu0
    %v2772 = vadd.f32 0.0, %v2771
    %v2773 = vpop.f32.mrb[0].mxu0
    %v2774 = vadd.f32 0.0, %v2773
    %2775 = vmatprep.mubr.f32.mxu0 0.0
    %2776 = vmatmul.mubr.f32.gmra.mrb[0].mxu0 %v2321
    %v2777 = vpop.f32.mrb[0].mxu0
    %v2778 = vadd.f32 0.0, %v2777
    %v2779 = vpop.f32.mrb[0].mxu0
    %v2780 = vadd.f32 0.0, %v2779
    %2781 = vmatprep.mubr.f32.mxu0 0.0
    %2782 = vmatmul.mubr.f32.gmra.mrb[0].mxu0 %v2324
    %v2783 = vpop.f32.mrb[0].mxu0
    %v2784 = vadd.f32 0.0, %v2783
    %v2785 = vpop.f32.mrb[0].mxu0
    %v2786 = vadd.f32 0.0, %v2785
    %2787 = vmatprep.mubr.f32.mxu0 0.0
    %2788 = vmatmul.mubr.f32.gmra.mrb[0].mxu0 %v2327
    %v2789 = vpop.f32.mrb[0].mxu0
    %v2790 = vadd.f32 0.0, %v2789
    %v2791 = vpop.f32.mrb[0].mxu0
    %v2792 = vadd.f32 0.0, %v2791
    %2793 = vmatprep.mubr.f32.mxu0 0.0
    %2794 = vmatmul.mubr.f32.gmra.mrb[0].mxu0 %v2330
    %v2795 = vpop.f32.mrb[0].mxu0
    %v2796 = vadd.f32 0.0, %v2795
    %v2797 = vpop.f32.mrb[0].mxu0
    %v2798 = vadd.f32 0.0, %v2797
    %2799 = vmatprep.mubr.f32.mxu0 0.0
    %2800 = vmatmul.mubr.f32.gmra.mrb[0].mxu0 %v2333
    %v2801 = vpop.f32.mrb[0].mxu0
    %v2802 = vadd.f32 0.0, %v2801
    %v2803 = vpop.f32.mrb[0].mxu0
    %v2804 = vadd.f32 0.0, %v2803
    %2805 = vmatprep.mubr.f32.mxu0 0.0
    %2806 = vmatmul.mubr.f32.gmra.mrb[0].mxu0 %v2336
    %v2807 = vpop.f32.mrb[0].mxu0
    %v2808 = vadd.f32 0.0, %v2807
    %v2809 = vpop.f32.mrb[0].mxu0
    %v2810 = vadd.f32 0.0, %v2809
    %2811 = vmatprep.mubr.f32.mxu0 0.0
    %2812 = vmatmul.mubr.f32.gmra.mrb[0].mxu0 %v2339
    %v2813 = vpop.f32.mrb[0].mxu0
    %v2814 = vadd.f32 0.0, %v2813
    %v2815 = vpop.f32.mrb[0].mxu0
    %v2816 = vadd.f32 0.0, %v2815
    %2817 = vmatprep.mubr.f32.mxu0 0.0
    %2818 = vmatmul.mubr.f32.gmra.mrb[0].mxu0 %v2342
    %v2819 = vpop.f32.mrb[0].mxu0
    %v2820 = vadd.f32 0.0, %v2819
    %v2821 = vpop.f32.mrb[0].mxu0
    %v2822 = vadd.f32 0.0, %v2821
    %2823 = vmatprep.mubr.f32.mxu0 0.0
    %2824 = vmatmul.mubr.f32.gmra.mrb[0].mxu0 %v2345
    %v2825 = vpop.f32.mrb[0].mxu0
    %v2826 = vadd.f32 0.0, %v2825
    %v2827 = vpop.f32.mrb[0].mxu0
    %v2828 = vadd.f32 0.0, %v2827
    %2829 = vdwg.mxu0
    %2830 = vmatprep.subr.mxu0 %v809
    %2831 = vmatpush1.msra.mxu0 %v808
    %2832 = vmatprep.subr.mxu0 %v825
    %2833 = vmatpush1.msra.mxu0 %v824
    %2834 = vmatprep.subr.mxu0 %v841
    %2835 = vmatpush1.msra.mxu0 %v840
    %2836 = vmatprep.subr.mxu0 %v857
    %2837 = vmatpush1.msra.mxu0 %v856
    %2838 = vmatprep.subr.mxu0 %v873
    %2839 = vmatpush1.msra.mxu0 %v872
    %2840 = vmatprep.subr.mxu0 %v889
    %2841 = vmatpush1.msra.mxu0 %v888
    %2842 = vmatprep.subr.mxu0 %v905
    %2843 = vmatpush1.msra.mxu0 %v904
    %2844 = vmatprep.subr.mxu0 %v921
    %2845 = vmatpush1.msra.mxu0 %v920
    %2846 = vmatprep.subr.mxu0 0.0
    %2847 = vmatpush1.msra.mxu0 0.0
    %2848 = vmatprep.subr.mxu0 0.0
    %2849 = vmatpush1.msra.mxu0 0.0
    %2850 = vmatprep.subr.mxu0 0.0
    %2851 = vmatpush1.msra.mxu0 0.0
    %2852 = vmatprep.subr.mxu0 0.0
    %2853 = vmatpush1.msra.mxu0 0.0
    %2854 = vmatprep.subr.mxu0 0.0
    %2855 = vmatpush1.msra.mxu0 0.0
    %2856 = vmatprep.subr.mxu0 0.0
    %2857 = vmatpush1.msra.mxu0 0.0
    %2858 = vmatprep.subr.mxu0 0.0
    %2859 = vmatpush1.msra.mxu0 0.0
    %2860 = vmatprep.subr.mxu0 0.0
    %2861 = vmatpush1.msra.mxu0 0.0
    %2862 = vmatprep.subr.mxu0 0.0
    %2863 = vmatpush1.msra.mxu0 0.0
    %2864 = vmatprep.subr.mxu0 0.0
    %2865 = vmatpush1.msra.mxu0 0.0
    %2866 = vmatprep.subr.mxu0 0.0
    %2867 = vmatpush1.msra.mxu0 0.0
    %2868 = vmatprep.subr.mxu0 0.0
    %2869 = vmatpush1.msra.mxu0 0.0
    %2870 = vmatprep.subr.mxu0 0.0
    %2871 = vmatpush1.msra.mxu0 0.0
    %2872 = vmatprep.subr.mxu0 0.0
    %2873 = vmatpush1.msra.mxu0 0.0
    %2874 = vmatprep.subr.mxu0 0.0
    %2875 = vmatpush1.msra.mxu0 0.0
    %2876 = vmatprep.subr.mxu0 0.0
    %2877 = vmatpush1.msra.mxu0 0.0
    %2878 = vmatprep.subr.mxu0 0.0
    %2879 = vmatpush1.msra.mxu0 0.0
    %2880 = vmatprep.subr.mxu0 0.0
    %2881 = vmatpush1.msra.mxu0 0.0
    %2882 = vmatprep.subr.mxu0 0.0
    %2883 = vmatpush1.msra.mxu0 0.0
    %2884 = vmatprep.subr.mxu0 0.0
    %2885 = vmatpush1.msra.mxu0 0.0
    %2886 = vmatprep.subr.mxu0 0.0
    %2887 = vmatpush1.msra.mxu0 0.0
    %2888 = vmatprep.subr.mxu0 0.0
    %2889 = vmatpush1.msra.mxu0 0.0
    %2890 = vmatprep.subr.mxu0 0.0
    %2891 = vmatpush1.msra.mxu0 0.0
    %2892 = vmatprep.subr.mxu0 0.0
    %2893 = vmatpush1.msra.mxu0 0.0
    %2894 = vmatprep.mubr.f32.mxu0 0.0
    %2895 = vmatmul.mubr.f32.gmra.mrb[0].mxu0 %v2300
    %v2896 = vpop.f32.mrb[0].mxu0
    %v2897 = vadd.f32 0.0, %v2896
    %v2898 = vpop.f32.mrb[0].mxu0
    %v2899 = vadd.f32 0.0, %v2898
    %2900 = vmatprep.mubr.f32.mxu0 0.0
    %2901 = vmatmul.mubr.f32.gmra.mrb[0].mxu0 %v2303
    %v2902 = vpop.f32.mrb[0].mxu0
    %v2903 = vadd.f32 0.0, %v2902
    %v2904 = vpop.f32.mrb[0].mxu0
    %v2905 = vadd.f32 0.0, %v2904
    %2906 = vmatprep.mubr.f32.mxu0 0.0
    %2907 = vmatmul.mubr.f32.gmra.mrb[0].mxu0 %v2306
    %v2908 = vpop.f32.mrb[0].mxu0
    %v2909 = vadd.f32 0.0, %v2908
    %v2910 = vpop.f32.mrb[0].mxu0
    %v2911 = vadd.f32 0.0, %v2910
    %2912 = vmatprep.mubr.f32.mxu0 0.0
    %2913 = vmatmul.mubr.f32.gmra.mrb[0].mxu0 %v2309
    %v2914 = vpop.f32.mrb[0].mxu0
    %v2915 = vadd.f32 0.0, %v2914
    %v2916 = vpop.f32.mrb[0].mxu0
    %v2917 = vadd.f32 0.0, %v2916
    %2918 = vmatprep.mubr.f32.mxu0 0.0
    %2919 = vmatmul.mubr.f32.gmra.mrb[0].mxu0 %v2312
    %v2920 = vpop.f32.mrb[0].mxu0
    %v2921 = vadd.f32 0.0, %v2920
    %v2922 = vpop.f32.mrb[0].mxu0
    %v2923 = vadd.f32 0.0, %v2922
    %2924 = vmatprep.mubr.f32.mxu0 0.0
    %2925 = vmatmul.mubr.f32.gmra.mrb[0].mxu0 %v2315
    %v2926 = vpop.f32.mrb[0].mxu0
    %v2927 = vadd.f32 0.0, %v2926
    %v2928 = vpop.f32.mrb[0].mxu0
    %v2929 = vadd.f32 0.0, %v2928
    %2930 = vmatprep.mubr.f32.mxu0 0.0
    %2931 = vmatmul.mubr.f32.gmra.mrb[0].mxu0 %v2318
    %v2932 = vpop.f32.mrb[0].mxu0
    %v2933 = vadd.f32 0.0, %v2932
    %v2934 = vpop.f32.mrb[0].mxu0
    %v2935 = vadd.f32 0.0, %v2934
    %2936 = vmatprep.mubr.f32.mxu0 0.0
    %2937 = vmatmul.mubr.f32.gmra.mrb[0].mxu0 %v2321
    %v2938 = vpop.f32.mrb[0].mxu0
    %v2939 = vadd.f32 0.0, %v2938
    %v2940 = vpop.f32.mrb[0].mxu0
    %v2941 = vadd.f32 0.0, %v2940
    %2942 = vmatprep.mubr.f32.mxu0 0.0
    %2943 = vmatmul.mubr.f32.gmra.mrb[0].mxu0 %v2324
    %v2944 = vpop.f32.mrb[0].mxu0
    %v2945 = vadd.f32 0.0, %v2944
    %v2946 = vpop.f32.mrb[0].mxu0
    %v2947 = vadd.f32 0.0, %v2946
    %2948 = vmatprep.mubr.f32.mxu0 0.0
    %2949 = vmatmul.mubr.f32.gmra.mrb[0].mxu0 %v2327
    %v2950 = vpop.f32.mrb[0].mxu0
    %v2951 = vadd.f32 0.0, %v2950
    %v2952 = vpop.f32.mrb[0].mxu0
    %v2953 = vadd.f32 0.0, %v2952
    %2954 = vmatprep.mubr.f32.mxu0 0.0
    %2955 = vmatmul.mubr.f32.gmra.mrb[0].mxu0 %v2330
    %v2956 = vpop.f32.mrb[0].mxu0
    %v2957 = vadd.f32 0.0, %v2956
    %v2958 = vpop.f32.mrb[0].mxu0
    %v2959 = vadd.f32 0.0, %v2958
    %2960 = vmatprep.mubr.f32.mxu0 0.0
    %2961 = vmatmul.mubr.f32.gmra.mrb[0].mxu0 %v2333
    %v2962 = vpop.f32.mrb[0].mxu0
    %v2963 = vadd.f32 0.0, %v2962
    %v2964 = vpop.f32.mrb[0].mxu0
    %v2965 = vadd.f32 0.0, %v2964
    %2966 = vmatprep.mubr.f32.mxu0 0.0
    %2967 = vmatmul.mubr.f32.gmra.mrb[0].mxu0 %v2336
    %v2968 = vpop.f32.mrb[0].mxu0
    %v2969 = vadd.f32 0.0, %v2968
    %v2970 = vpop.f32.mrb[0].mxu0
    %v2971 = vadd.f32 0.0, %v2970
    %2972 = vmatprep.mubr.f32.mxu0 0.0
    %2973 = vmatmul.mubr.f32.gmra.mrb[0].mxu0 %v2339
    %v2974 = vpop.f32.mrb[0].mxu0
    %v2975 = vadd.f32 0.0, %v2974
    %v2976 = vpop.f32.mrb[0].mxu0
    %v2977 = vadd.f32 0.0, %v2976
    %2978 = vmatprep.mubr.f32.mxu0 0.0
    %2979 = vmatmul.mubr.f32.gmra.mrb[0].mxu0 %v2342
    %v2980 = vpop.f32.mrb[0].mxu0
    %v2981 = vadd.f32 0.0, %v2980
    %v2982 = vpop.f32.mrb[0].mxu0
    %v2983 = vadd.f32 0.0, %v2982
    %2984 = vmatprep.mubr.f32.mxu0 0.0
    %2985 = vmatmul.mubr.f32.gmra.mrb[0].mxu0 %v2345
    %v2986 = vpop.f32.mrb[0].mxu0
    %v2987 = vadd.f32 0.0, %v2986
    %v2988 = vpop.f32.mrb[0].mxu0
    %v2989 = vadd.f32 0.0, %v2988
    %2990 = vdwg.mxu0
    %2991 = vmatprep.subr.mxu0 %v811
    %2992 = vmatpush1.msra.mxu0 %v810
    %2993 = vmatprep.subr.mxu0 %v827
    %2994 = vmatpush1.msra.mxu0 %v826
    %2995 = vmatprep.subr.mxu0 %v843
    %2996 = vmatpush1.msra.mxu0 %v842
    %2997 = vmatprep.subr.mxu0 %v859
    %2998 = vmatpush1.msra.mxu0 %v858
    %2999 = vmatprep.subr.mxu0 %v875
    %3000 = vmatpush1.msra.mxu0 %v874
    %3001 = vmatprep.subr.mxu0 %v891
    %3002 = vmatpush1.msra.mxu0 %v890
    %3003 = vmatprep.subr.mxu0 %v907
    %3004 = vmatpush1.msra.mxu0 %v906
    %3005 = vmatprep.subr.mxu0 %v923
    %3006 = vmatpush1.msra.mxu0 %v922
    %3007 = vmatprep.subr.mxu0 0.0
    %3008 = vmatpush1.msra.mxu0 0.0
    %3009 = vmatprep.subr.mxu0 0.0
    %3010 = vmatpush1.msra.mxu0 0.0
    %3011 = vmatprep.subr.mxu0 0.0
    %3012 = vmatpush1.msra.mxu0 0.0
    %3013 = vmatprep.subr.mxu0 0.0
    %3014 = vmatpush1.msra.mxu0 0.0
    %3015 = vmatprep.subr.mxu0 0.0
    %3016 = vmatpush1.msra.mxu0 0.0
    %3017 = vmatprep.subr.mxu0 0.0
    %3018 = vmatpush1.msra.mxu0 0.0
    %3019 = vmatprep.subr.mxu0 0.0
    %3020 = vmatpush1.msra.mxu0 0.0
    %3021 = vmatprep.subr.mxu0 0.0
    %3022 = vmatpush1.msra.mxu0 0.0
    %3023 = vmatprep.subr.mxu0 0.0
    %3024 = vmatpush1.msra.mxu0 0.0
    %3025 = vmatprep.subr.mxu0 0.0
    %3026 = vmatpush1.msra.mxu0 0.0
    %3027 = vmatprep.subr.mxu0 0.0
    %3028 = vmatpush1.msra.mxu0 0.0
    %3029 = vmatprep.subr.mxu0 0.0
    %3030 = vmatpush1.msra.mxu0 0.0
    %3031 = vmatprep.subr.mxu0 0.0
    %3032 = vmatpush1.msra.mxu0 0.0
    %3033 = vmatprep.subr.mxu0 0.0
    %3034 = vmatpush1.msra.mxu0 0.0
    %3035 = vmatprep.subr.mxu0 0.0
    %3036 = vmatpush1.msra.mxu0 0.0
    %3037 = vmatprep.subr.mxu0 0.0
    %3038 = vmatpush1.msra.mxu0 0.0
    %3039 = vmatprep.subr.mxu0 0.0
    %3040 = vmatpush1.msra.mxu0 0.0
    %3041 = vmatprep.subr.mxu0 0.0
    %3042 = vmatpush1.msra.mxu0 0.0
    %3043 = vmatprep.subr.mxu0 0.0
    %3044 = vmatpush1.msra.mxu0 0.0
    %3045 = vmatprep.subr.mxu0 0.0
    %3046 = vmatpush1.msra.mxu0 0.0
    %3047 = vmatprep.subr.mxu0 0.0
    %3048 = vmatpush1.msra.mxu0 0.0
    %3049 = vmatprep.subr.mxu0 0.0
    %3050 = vmatpush1.msra.mxu0 0.0
    %3051 = vmatprep.subr.mxu0 0.0
    %3052 = vmatpush1.msra.mxu0 0.0
    %3053 = vmatprep.subr.mxu0 0.0
    %3054 = vmatpush1.msra.mxu0 0.0
    %3055 = vmatprep.mubr.f32.mxu0 0.0
    %3056 = vmatmul.mubr.f32.gmra.mrb[0].mxu0 %v2300
    %v3057 = vpop.f32.mrb[0].mxu0
    %v3058 = vadd.f32 0.0, %v3057
    %v3059 = vpop.f32.mrb[0].mxu0
    %v3060 = vadd.f32 0.0, %v3059
    %3061 = vmatprep.mubr.f32.mxu0 0.0
    %3062 = vmatmul.mubr.f32.gmra.mrb[0].mxu0 %v2303
    %v3063 = vpop.f32.mrb[0].mxu0
    %v3064 = vadd.f32 0.0, %v3063
    %v3065 = vpop.f32.mrb[0].mxu0
    %v3066 = vadd.f32 0.0, %v3065
    %3067 = vmatprep.mubr.f32.mxu0 0.0
    %3068 = vmatmul.mubr.f32.gmra.mrb[0].mxu0 %v2306
    %v3069 = vpop.f32.mrb[0].mxu0
    %v3070 = vadd.f32 0.0, %v3069
    %v3071 = vpop.f32.mrb[0].mxu0
    %v3072 = vadd.f32 0.0, %v3071
    %3073 = vmatprep.mubr.f32.mxu0 0.0
    %3074 = vmatmul.mubr.f32.gmra.mrb[0].mxu0 %v2309
    %v3075 = vpop.f32.mrb[0].mxu0
    %v3076 = vadd.f32 0.0, %v3075
    %v3077 = vpop.f32.mrb[0].mxu0
    %v3078 = vadd.f32 0.0, %v3077
    %3079 = vmatprep.mubr.f32.mxu0 0.0
    %3080 = vmatmul.mubr.f32.gmra.mrb[0].mxu0 %v2312
    %v3081 = vpop.f32.mrb[0].mxu0
    %v3082 = vadd.f32 0.0, %v3081
    %v3083 = vpop.f32.mrb[0].mxu0
    %v3084 = vadd.f32 0.0, %v3083
    %3085 = vmatprep.mubr.f32.mxu0 0.0
    %3086 = vmatmul.mubr.f32.gmra.mrb[0].mxu0 %v2315
    %v3087 = vpop.f32.mrb[0].mxu0
    %v3088 = vadd.f32 0.0, %v3087
    %v3089 = vpop.f32.mrb[0].mxu0
    %v3090 = vadd.f32 0.0, %v3089
    %3091 = vmatprep.mubr.f32.mxu0 0.0
    %3092 = vmatmul.mubr.f32.gmra.mrb[0].mxu0 %v2318
    %v3093 = vpop.f32.mrb[0].mxu0
    %v3094 = vadd.f32 0.0, %v3093
    %v3095 = vpop.f32.mrb[0].mxu0
    %v3096 = vadd.f32 0.0, %v3095
    %3097 = vmatprep.mubr.f32.mxu0 0.0
    %3098 = vmatmul.mubr.f32.gmra.mrb[0].mxu0 %v2321
    %v3099 = vpop.f32.mrb[0].mxu0
    %v3100 = vadd.f32 0.0, %v3099
    %v3101 = vpop.f32.mrb[0].mxu0
    %v3102 = vadd.f32 0.0, %v3101
    %3103 = vmatprep.mubr.f32.mxu0 0.0
    %3104 = vmatmul.mubr.f32.gmra.mrb[0].mxu0 %v2324
    %v3105 = vpop.f32.mrb[0].mxu0
    %v3106 = vadd.f32 0.0, %v3105
    %v3107 = vpop.f32.mrb[0].mxu0
    %v3108 = vadd.f32 0.0, %v3107
    %3109 = vmatprep.mubr.f32.mxu0 0.0
    %3110 = vmatmul.mubr.f32.gmra.mrb[0].mxu0 %v2327
    %v3111 = vpop.f32.mrb[0].mxu0
    %v3112 = vadd.f32 0.0, %v3111
    %v3113 = vpop.f32.mrb[0].mxu0
    %v3114 = vadd.f32 0.0, %v3113
    %3115 = vmatprep.mubr.f32.mxu0 0.0
    %3116 = vmatmul.mubr.f32.gmra.mrb[0].mxu0 %v2330
    %v3117 = vpop.f32.mrb[0].mxu0
    %v3118 = vadd.f32 0.0, %v3117
    %v3119 = vpop.f32.mrb[0].mxu0
    %v3120 = vadd.f32 0.0, %v3119
    %3121 = vmatprep.mubr.f32.mxu0 0.0
    %3122 = vmatmul.mubr.f32.gmra.mrb[0].mxu0 %v2333
    %v3123 = vpop.f32.mrb[0].mxu0
    %v3124 = vadd.f32 0.0, %v3123
    %v3125 = vpop.f32.mrb[0].mxu0
    %v3126 = vadd.f32 0.0, %v3125
    %3127 = vmatprep.mubr.f32.mxu0 0.0
    %3128 = vmatmul.mubr.f32.gmra.mrb[0].mxu0 %v2336
    %v3129 = vpop.f32.mrb[0].mxu0
    %v3130 = vadd.f32 0.0, %v3129
    %v3131 = vpop.f32.mrb[0].mxu0
    %v3132 = vadd.f32 0.0, %v3131
    %3133 = vmatprep.mubr.f32.mxu0 0.0
    %3134 = vmatmul.mubr.f32.gmra.mrb[0].mxu0 %v2339
    %v3135 = vpop.f32.mrb[0].mxu0
    %v3136 = vadd.f32 0.0, %v3135
    %v3137 = vpop.f32.mrb[0].mxu0
    %v3138 = vadd.f32 0.0, %v3137
    %3139 = vmatprep.mubr.f32.mxu0 0.0
    %3140 = vmatmul.mubr.f32.gmra.mrb[0].mxu0 %v2342
    %v3141 = vpop.f32.mrb[0].mxu0
    %v3142 = vadd.f32 0.0, %v3141
    %v3143 = vpop.f32.mrb[0].mxu0
    %v3144 = vadd.f32 0.0, %v3143
    %3145 = vmatprep.mubr.f32.mxu0 0.0
    %3146 = vmatmul.mubr.f32.gmra.mrb[0].mxu0 %v2345
    %v3147 = vpop.f32.mrb[0].mxu0
    %v3148 = vadd.f32 0.0, %v3147
    %v3149 = vpop.f32.mrb[0].mxu0
    %v3150 = vadd.f32 0.0, %v3149
    %3151 = vdwg.mxu0
    %3152 = vmatprep.subr.mxu0 %v813
    %3153 = vmatpush1.msra.mxu0 %v812
    %3154 = vmatprep.subr.mxu0 %v829
    %3155 = vmatpush1.msra.mxu0 %v828
    %3156 = vmatprep.subr.mxu0 %v845
    %3157 = vmatpush1.msra.mxu0 %v844
    %3158 = vmatprep.subr.mxu0 %v861
    %3159 = vmatpush1.msra.mxu0 %v860
    %3160 = vmatprep.subr.mxu0 %v877
    %3161 = vmatpush1.msra.mxu0 %v876
    %3162 = vmatprep.subr.mxu0 %v893
    %3163 = vmatpush1.msra.mxu0 %v892
    %3164 = vmatprep.subr.mxu0 %v909
    %3165 = vmatpush1.msra.mxu0 %v908
    %3166 = vmatprep.subr.mxu0 %v925
    %3167 = vmatpush1.msra.mxu0 %v924
    %3168 = vmatprep.subr.mxu0 0.0
    %3169 = vmatpush1.msra.mxu0 0.0
    %3170 = vmatprep.subr.mxu0 0.0
    %3171 = vmatpush1.msra.mxu0 0.0
    %3172 = vmatprep.subr.mxu0 0.0
    %3173 = vmatpush1.msra.mxu0 0.0
    %3174 = vmatprep.subr.mxu0 0.0
    %3175 = vmatpush1.msra.mxu0 0.0
    %3176 = vmatprep.subr.mxu0 0.0
    %3177 = vmatpush1.msra.mxu0 0.0
    %3178 = vmatprep.subr.mxu0 0.0
    %3179 = vmatpush1.msra.mxu0 0.0
    %3180 = vmatprep.subr.mxu0 0.0
    %3181 = vmatpush1.msra.mxu0 0.0
    %3182 = vmatprep.subr.mxu0 0.0
    %3183 = vmatpush1.msra.mxu0 0.0
    %3184 = vmatprep.subr.mxu0 0.0
    %3185 = vmatpush1.msra.mxu0 0.0
    %3186 = vmatprep.subr.mxu0 0.0
    %3187 = vmatpush1.msra.mxu0 0.0
    %3188 = vmatprep.subr.mxu0 0.0
    %3189 = vmatpush1.msra.mxu0 0.0
    %3190 = vmatprep.subr.mxu0 0.0
    %3191 = vmatpush1.msra.mxu0 0.0
    %3192 = vmatprep.subr.mxu0 0.0
    %3193 = vmatpush1.msra.mxu0 0.0
    %3194 = vmatprep.subr.mxu0 0.0
    %3195 = vmatpush1.msra.mxu0 0.0
    %3196 = vmatprep.subr.mxu0 0.0
    %3197 = vmatpush1.msra.mxu0 0.0
    %3198 = vmatprep.subr.mxu0 0.0
    %3199 = vmatpush1.msra.mxu0 0.0
    %3200 = vmatprep.subr.mxu0 0.0
    %3201 = vmatpush1.msra.mxu0 0.0
    %3202 = vmatprep.subr.mxu0 0.0
    %3203 = vmatpush1.msra.mxu0 0.0
    %3204 = vmatprep.subr.mxu0 0.0
    %3205 = vmatpush1.msra.mxu0 0.0
    %3206 = vmatprep.subr.mxu0 0.0
    %3207 = vmatpush1.msra.mxu0 0.0
    %3208 = vmatprep.subr.mxu0 0.0
    %3209 = vmatpush1.msra.mxu0 0.0
    %3210 = vmatprep.subr.mxu0 0.0
    %3211 = vmatpush1.msra.mxu0 0.0
    %3212 = vmatprep.subr.mxu0 0.0
    %3213 = vmatpush1.msra.mxu0 0.0
    %3214 = vmatprep.subr.mxu0 0.0
    %3215 = vmatpush1.msra.mxu0 0.0
    %3216 = vmatprep.mubr.f32.mxu0 0.0
    %3217 = vmatmul.mubr.f32.gmra.mrb[0].mxu0 %v2300
    %v3218 = vpop.f32.mrb[0].mxu0
    %v3219 = vadd.f32 0.0, %v3218
    %v3220 = vpop.f32.mrb[0].mxu0
    %v3221 = vadd.f32 0.0, %v3220
    %3222 = vmatprep.mubr.f32.mxu0 0.0
    %3223 = vmatmul.mubr.f32.gmra.mrb[0].mxu0 %v2303
    %v3224 = vpop.f32.mrb[0].mxu0
    %v3225 = vadd.f32 0.0, %v3224
    %v3226 = vpop.f32.mrb[0].mxu0
    %v3227 = vadd.f32 0.0, %v3226
    %3228 = vmatprep.mubr.f32.mxu0 0.0
    %3229 = vmatmul.mubr.f32.gmra.mrb[0].mxu0 %v2306
    %v3230 = vpop.f32.mrb[0].mxu0
    %v3231 = vadd.f32 0.0, %v3230
    %v3232 = vpop.f32.mrb[0].mxu0
    %v3233 = vadd.f32 0.0, %v3232
    %3234 = vmatprep.mubr.f32.mxu0 0.0
    %3235 = vmatmul.mubr.f32.gmra.mrb[0].mxu0 %v2309
    %v3236 = vpop.f32.mrb[0].mxu0
    %v3237 = vadd.f32 0.0, %v3236
    %v3238 = vpop.f32.mrb[0].mxu0
    %v3239 = vadd.f32 0.0, %v3238
    %3240 = vmatprep.mubr.f32.mxu0 0.0
    %3241 = vmatmul.mubr.f32.gmra.mrb[0].mxu0 %v2312
    %v3242 = vpop.f32.mrb[0].mxu0
    %v3243 = vadd.f32 0.0, %v3242
    %v3244 = vpop.f32.mrb[0].mxu0
    %v3245 = vadd.f32 0.0, %v3244
    %3246 = vmatprep.mubr.f32.mxu0 0.0
    %3247 = vmatmul.mubr.f32.gmra.mrb[0].mxu0 %v2315
    %v3248 = vpop.f32.mrb[0].mxu0
    %v3249 = vadd.f32 0.0, %v3248
    %v3250 = vpop.f32.mrb[0].mxu0
    %v3251 = vadd.f32 0.0, %v3250
    %3252 = vmatprep.mubr.f32.mxu0 0.0
    %3253 = vmatmul.mubr.f32.gmra.mrb[0].mxu0 %v2318
    %v3254 = vpop.f32.mrb[0].mxu0
    %v3255 = vadd.f32 0.0, %v3254
    %v3256 = vpop.f32.mrb[0].mxu0
    %v3257 = vadd.f32 0.0, %v3256
    %3258 = vmatprep.mubr.f32.mxu0 0.0
    %3259 = vmatmul.mubr.f32.gmra.mrb[0].mxu0 %v2321
    %v3260 = vpop.f32.mrb[0].mxu0
    %v3261 = vadd.f32 0.0, %v3260
    %v3262 = vpop.f32.mrb[0].mxu0
    %v3263 = vadd.f32 0.0, %v3262
    %3264 = vmatprep.mubr.f32.mxu0 0.0
    %3265 = vmatmul.mubr.f32.gmra.mrb[0].mxu0 %v2324
    %v3266 = vpop.f32.mrb[0].mxu0
    %v3267 = vadd.f32 0.0, %v3266
    %v3268 = vpop.f32.mrb[0].mxu0
    %v3269 = vadd.f32 0.0, %v3268
    %3270 = vmatprep.mubr.f32.mxu0 0.0
    %3271 = vmatmul.mubr.f32.gmra.mrb[0].mxu0 %v2327
    %v3272 = vpop.f32.mrb[0].mxu0
    %v3273 = vadd.f32 0.0, %v3272
    %v3274 = vpop.f32.mrb[0].mxu0
    %v3275 = vadd.f32 0.0, %v3274
    %3276 = vmatprep.mubr.f32.mxu0 0.0
    %3277 = vmatmul.mubr.f32.gmra.mrb[0].mxu0 %v2330
    %v3278 = vpop.f32.mrb[0].mxu0
    %v3279 = vadd.f32 0.0, %v3278
    %v3280 = vpop.f32.mrb[0].mxu0
    %v3281 = vadd.f32 0.0, %v3280
    %3282 = vmatprep.mubr.f32.mxu0 0.0
    %3283 = vmatmul.mubr.f32.gmra.mrb[0].mxu0 %v2333
    %v3284 = vpop.f32.mrb[0].mxu0
    %v3285 = vadd.f32 0.0, %v3284
    %v3286 = vpop.f32.mrb[0].mxu0
    %v3287 = vadd.f32 0.0, %v3286
    %3288 = vmatprep.mubr.f32.mxu0 0.0
    %3289 = vmatmul.mubr.f32.gmra.mrb[0].mxu0 %v2336
    %v3290 = vpop.f32.mrb[0].mxu0
    %v3291 = vadd.f32 0.0, %v3290
    %v3292 = vpop.f32.mrb[0].mxu0
    %v3293 = vadd.f32 0.0, %v3292
    %3294 = vmatprep.mubr.f32.mxu0 0.0
    %3295 = vmatmul.mubr.f32.gmra.mrb[0].mxu0 %v2339
    %v3296 = vpop.f32.mrb[0].mxu0
    %v3297 = vadd.f32 0.0, %v3296
    %v3298 = vpop.f32.mrb[0].mxu0
    %v3299 = vadd.f32 0.0, %v3298
    %3300 = vmatprep.mubr.f32.mxu0 0.0
    %3301 = vmatmul.mubr.f32.gmra.mrb[0].mxu0 %v2342
    %v3302 = vpop.f32.mrb[0].mxu0
    %v3303 = vadd.f32 0.0, %v3302
    %v3304 = vpop.f32.mrb[0].mxu0
    %v3305 = vadd.f32 0.0, %v3304
    %3306 = vmatprep.mubr.f32.mxu0 0.0
    %3307 = vmatmul.mubr.f32.gmra.mrb[0].mxu0 %v2345
    %v3308 = vpop.f32.mrb[0].mxu0
    %v3309 = vadd.f32 0.0, %v3308
    %v3310 = vpop.f32.mrb[0].mxu0
    %v3311 = vadd.f32 0.0, %v3310
    %3312 = vdwg.mxu0
    %3313 = vmatprep.subr.mxu0 %v815
    %3314 = vmatpush1.msra.mxu0 %v814
    %3315 = vmatprep.subr.mxu0 %v831
    %3316 = vmatpush1.msra.mxu0 %v830
    %3317 = vmatprep.subr.mxu0 %v847
    %3318 = vmatpush1.msra.mxu0 %v846
    %3319 = vmatprep.subr.mxu0 %v863
    %3320 = vmatpush1.msra.mxu0 %v862
    %3321 = vmatprep.subr.mxu0 %v879
    %3322 = vmatpush1.msra.mxu0 %v878
    %3323 = vmatprep.subr.mxu0 %v895
    %3324 = vmatpush1.msra.mxu0 %v894
    %3325 = vmatprep.subr.mxu0 %v911
    %3326 = vmatpush1.msra.mxu0 %v910
    %3327 = vmatprep.subr.mxu0 %v927
    %3328 = vmatpush1.msra.mxu0 %v926
    %3329 = vmatprep.subr.mxu0 0.0
    %3330 = vmatpush1.msra.mxu0 0.0
    %3331 = vmatprep.subr.mxu0 0.0
    %3332 = vmatpush1.msra.mxu0 0.0
    %3333 = vmatprep.subr.mxu0 0.0
    %3334 = vmatpush1.msra.mxu0 0.0
    %3335 = vmatprep.subr.mxu0 0.0
    %3336 = vmatpush1.msra.mxu0 0.0
    %3337 = vmatprep.subr.mxu0 0.0
    %3338 = vmatpush1.msra.mxu0 0.0
    %3339 = vmatprep.subr.mxu0 0.0
    %3340 = vmatpush1.msra.mxu0 0.0
    %3341 = vmatprep.subr.mxu0 0.0
    %3342 = vmatpush1.msra.mxu0 0.0
    %3343 = vmatprep.subr.mxu0 0.0
    %3344 = vmatpush1.msra.mxu0 0.0
    %3345 = vmatprep.subr.mxu0 0.0
    %3346 = vmatpush1.msra.mxu0 0.0
    %3347 = vmatprep.subr.mxu0 0.0
    %3348 = vmatpush1.msra.mxu0 0.0
    %3349 = vmatprep.subr.mxu0 0.0
    %3350 = vmatpush1.msra.mxu0 0.0
    %3351 = vmatprep.subr.mxu0 0.0
    %3352 = vmatpush1.msra.mxu0 0.0
    %3353 = vmatprep.subr.mxu0 0.0
    %3354 = vmatpush1.msra.mxu0 0.0
    %3355 = vmatprep.subr.mxu0 0.0
    %3356 = vmatpush1.msra.mxu0 0.0
    %3357 = vmatprep.subr.mxu0 0.0
    %3358 = vmatpush1.msra.mxu0 0.0
    %3359 = vmatprep.subr.mxu0 0.0
    %3360 = vmatpush1.msra.mxu0 0.0
    %3361 = vmatprep.subr.mxu0 0.0
    %3362 = vmatpush1.msra.mxu0 0.0
    %3363 = vmatprep.subr.mxu0 0.0
    %3364 = vmatpush1.msra.mxu0 0.0
    %3365 = vmatprep.subr.mxu0 0.0
    %3366 = vmatpush1.msra.mxu0 0.0
    %3367 = vmatprep.subr.mxu0 0.0
    %3368 = vmatpush1.msra.mxu0 0.0
    %3369 = vmatprep.subr.mxu0 0.0
    %3370 = vmatpush1.msra.mxu0 0.0
    %3371 = vmatprep.subr.mxu0 0.0
    %3372 = vmatpush1.msra.mxu0 0.0
    %3373 = vmatprep.subr.mxu0 0.0
    %3374 = vmatpush1.msra.mxu0 0.0
    %3375 = vmatprep.subr.mxu0 0.0
    %3376 = vmatpush1.msra.mxu0 0.0
    %3377 = vmatprep.mubr.f32.mxu0 0.0
    %3378 = vmatmul.mubr.f32.gmra.mrb[0].mxu0 %v2300
    %v3379 = vpop.f32.mrb[0].mxu0
    %v3380 = vadd.f32 0.0, %v3379
    %v3381 = vpop.f32.mrb[0].mxu0
    %v3382 = vadd.f32 0.0, %v3381
    %3383 = vmatprep.mubr.f32.mxu0 0.0
    %3384 = vmatmul.mubr.f32.gmra.mrb[0].mxu0 %v2303
    %v3385 = vpop.f32.mrb[0].mxu0
    %v3386 = vadd.f32 0.0, %v3385
    %v3387 = vpop.f32.mrb[0].mxu0
    %v3388 = vadd.f32 0.0, %v3387
    %3389 = vmatprep.mubr.f32.mxu0 0.0
    %3390 = vmatmul.mubr.f32.gmra.mrb[0].mxu0 %v2306
    %v3391 = vpop.f32.mrb[0].mxu0
    %v3392 = vadd.f32 0.0, %v3391
    %v3393 = vpop.f32.mrb[0].mxu0
    %v3394 = vadd.f32 0.0, %v3393
    %3395 = vmatprep.mubr.f32.mxu0 0.0
    %3396 = vmatmul.mubr.f32.gmra.mrb[0].mxu0 %v2309
    %v3397 = vpop.f32.mrb[0].mxu0
    %v3398 = vadd.f32 0.0, %v3397
    %v3399 = vpop.f32.mrb[0].mxu0
    %v3400 = vadd.f32 0.0, %v3399
    %3401 = vmatprep.mubr.f32.mxu0 0.0
    %3402 = vmatmul.mubr.f32.gmra.mrb[0].mxu0 %v2312
    %v3403 = vpop.f32.mrb[0].mxu0
    %v3404 = vadd.f32 0.0, %v3403
    %v3405 = vpop.f32.mrb[0].mxu0
    %v3406 = vadd.f32 0.0, %v3405
    %3407 = vmatprep.mubr.f32.mxu0 0.0
    %3408 = vmatmul.mubr.f32.gmra.mrb[0].mxu0 %v2315
    %v3409 = vpop.f32.mrb[0].mxu0
    %v3410 = vadd.f32 0.0, %v3409
    %v3411 = vpop.f32.mrb[0].mxu0
    %v3412 = vadd.f32 0.0, %v3411
    %3413 = vmatprep.mubr.f32.mxu0 0.0
    %3414 = vmatmul.mubr.f32.gmra.mrb[0].mxu0 %v2318
    %v3415 = vpop.f32.mrb[0].mxu0
    %v3416 = vadd.f32 0.0, %v3415
    %v3417 = vpop.f32.mrb[0].mxu0
    %v3418 = vadd.f32 0.0, %v3417
    %3419 = vmatprep.mubr.f32.mxu0 0.0
    %3420 = vmatmul.mubr.f32.gmra.mrb[0].mxu0 %v2321
    %v3421 = vpop.f32.mrb[0].mxu0
    %v3422 = vadd.f32 0.0, %v3421
    %v3423 = vpop.f32.mrb[0].mxu0
    %v3424 = vadd.f32 0.0, %v3423
    %3425 = vmatprep.mubr.f32.mxu0 0.0
    %3426 = vmatmul.mubr.f32.gmra.mrb[0].mxu0 %v2324
    %v3427 = vpop.f32.mrb[0].mxu0
    %v3428 = vadd.f32 0.0, %v3427
    %v3429 = vpop.f32.mrb[0].mxu0
    %v3430 = vadd.f32 0.0, %v3429
    %3431 = vmatprep.mubr.f32.mxu0 0.0
    %3432 = vmatmul.mubr.f32.gmra.mrb[0].mxu0 %v2327
    %v3433 = vpop.f32.mrb[0].mxu0
    %v3434 = vadd.f32 0.0, %v3433
    %v3435 = vpop.f32.mrb[0].mxu0
    %v3436 = vadd.f32 0.0, %v3435
    %3437 = vmatprep.mubr.f32.mxu0 0.0
    %3438 = vmatmul.mubr.f32.gmra.mrb[0].mxu0 %v2330
    %v3439 = vpop.f32.mrb[0].mxu0
    %v3440 = vadd.f32 0.0, %v3439
    %v3441 = vpop.f32.mrb[0].mxu0
    %v3442 = vadd.f32 0.0, %v3441
    %3443 = vmatprep.mubr.f32.mxu0 0.0
    %3444 = vmatmul.mubr.f32.gmra.mrb[0].mxu0 %v2333
    %v3445 = vpop.f32.mrb[0].mxu0
    %v3446 = vadd.f32 0.0, %v3445
    %v3447 = vpop.f32.mrb[0].mxu0
    %v3448 = vadd.f32 0.0, %v3447
    %3449 = vmatprep.mubr.f32.mxu0 0.0
    %3450 = vmatmul.mubr.f32.gmra.mrb[0].mxu0 %v2336
    %v3451 = vpop.f32.mrb[0].mxu0
    %v3452 = vadd.f32 0.0, %v3451
    %v3453 = vpop.f32.mrb[0].mxu0
    %v3454 = vadd.f32 0.0, %v3453
    %3455 = vmatprep.mubr.f32.mxu0 0.0
    %3456 = vmatmul.mubr.f32.gmra.mrb[0].mxu0 %v2339
    %v3457 = vpop.f32.mrb[0].mxu0
    %v3458 = vadd.f32 0.0, %v3457
    %v3459 = vpop.f32.mrb[0].mxu0
    %v3460 = vadd.f32 0.0, %v3459
    %3461 = vmatprep.mubr.f32.mxu0 0.0
    %3462 = vmatmul.mubr.f32.gmra.mrb[0].mxu0 %v2342
    %v3463 = vpop.f32.mrb[0].mxu0
    %v3464 = vadd.f32 0.0, %v3463
    %v3465 = vpop.f32.mrb[0].mxu0
    %v3466 = vadd.f32 0.0, %v3465
    %3467 = vmatprep.mubr.f32.mxu0 0.0
    %3468 = vmatmul.mubr.f32.gmra.mrb[0].mxu0 %v2345
    %v3469 = vpop.f32.mrb[0].mxu0
    %v3470 = vadd.f32 0.0, %v3469
    %v3471 = vpop.f32.mrb[0].mxu0
    %v3472 = vadd.f32 0.0, %v3471
    %3473 = vdwg.mxu0
    %3474 = vmatprep.subr.mxu0 %v817
    %3475 = vmatpush1.msra.mxu0 %v816
    %3476 = vmatprep.subr.mxu0 %v833
    %3477 = vmatpush1.msra.mxu0 %v832
    %3478 = vmatprep.subr.mxu0 %v849
    %3479 = vmatpush1.msra.mxu0 %v848
    %3480 = vmatprep.subr.mxu0 %v865
    %3481 = vmatpush1.msra.mxu0 %v864
    %3482 = vmatprep.subr.mxu0 %v881
    %3483 = vmatpush1.msra.mxu0 %v880
    %3484 = vmatprep.subr.mxu0 %v897
    %3485 = vmatpush1.msra.mxu0 %v896
    %3486 = vmatprep.subr.mxu0 %v913
    %3487 = vmatpush1.msra.mxu0 %v912
    %3488 = vmatprep.subr.mxu0 %v929
    %3489 = vmatpush1.msra.mxu0 %v928
    %3490 = vmatprep.subr.mxu0 0.0
    %3491 = vmatpush1.msra.mxu0 0.0
    %3492 = vmatprep.subr.mxu0 0.0
    %3493 = vmatpush1.msra.mxu0 0.0
    %3494 = vmatprep.subr.mxu0 0.0
    %3495 = vmatpush1.msra.mxu0 0.0
    %3496 = vmatprep.subr.mxu0 0.0
    %3497 = vmatpush1.msra.mxu0 0.0
    %3498 = vmatprep.subr.mxu0 0.0
    %3499 = vmatpush1.msra.mxu0 0.0
    %3500 = vmatprep.subr.mxu0 0.0
    %3501 = vmatpush1.msra.mxu0 0.0
    %3502 = vmatprep.subr.mxu0 0.0
    %3503 = vmatpush1.msra.mxu0 0.0
    %3504 = vmatprep.subr.mxu0 0.0
    %3505 = vmatpush1.msra.mxu0 0.0
    %3506 = vmatprep.subr.mxu0 0.0
    %3507 = vmatpush1.msra.mxu0 0.0
    %3508 = vmatprep.subr.mxu0 0.0
    %3509 = vmatpush1.msra.mxu0 0.0
    %3510 = vmatprep.subr.mxu0 0.0
    %3511 = vmatpush1.msra.mxu0 0.0
    %3512 = vmatprep.subr.mxu0 0.0
    %3513 = vmatpush1.msra.mxu0 0.0
    %3514 = vmatprep.subr.mxu0 0.0
    %3515 = vmatpush1.msra.mxu0 0.0
    %3516 = vmatprep.subr.mxu0 0.0
    %3517 = vmatpush1.msra.mxu0 0.0
    %3518 = vmatprep.subr.mxu0 0.0
    %3519 = vmatpush1.msra.mxu0 0.0
    %3520 = vmatprep.subr.mxu0 0.0
    %3521 = vmatpush1.msra.mxu0 0.0
    %3522 = vmatprep.subr.mxu0 0.0
    %3523 = vmatpush1.msra.mxu0 0.0
    %3524 = vmatprep.subr.mxu0 0.0
    %3525 = vmatpush1.msra.mxu0 0.0
    %3526 = vmatprep.subr.mxu0 0.0
    %3527 = vmatpush1.msra.mxu0 0.0
    %3528 = vmatprep.subr.mxu0 0.0
    %3529 = vmatpush1.msra.mxu0 0.0
    %3530 = vmatprep.subr.mxu0 0.0
    %3531 = vmatpush1.msra.mxu0 0.0
    %3532 = vmatprep.subr.mxu0 0.0
    %3533 = vmatpush1.msra.mxu0 0.0
    %3534 = vmatprep.subr.mxu0 0.0
    %3535 = vmatpush1.msra.mxu0 0.0
    %3536 = vmatprep.subr.mxu0 0.0
    %3537 = vmatpush1.msra.mxu0 0.0
    %3538 = vmatprep.mubr.f32.mxu0 0.0
    %3539 = vmatmul.mubr.f32.gmra.mrb[0].mxu0 %v2300
    %v3540 = vpop.f32.mrb[0].mxu0
    %v3541 = vadd.f32 0.0, %v3540
    %v3542 = vpop.f32.mrb[0].mxu0
    %v3543 = vadd.f32 0.0, %v3542
    %3544 = vmatprep.mubr.f32.mxu0 0.0
    %3545 = vmatmul.mubr.f32.gmra.mrb[0].mxu0 %v2303
    %v3546 = vpop.f32.mrb[0].mxu0
    %v3547 = vadd.f32 0.0, %v3546
    %v3548 = vpop.f32.mrb[0].mxu0
    %v3549 = vadd.f32 0.0, %v3548
    %3550 = vmatprep.mubr.f32.mxu0 0.0
    %3551 = vmatmul.mubr.f32.gmra.mrb[0].mxu0 %v2306
    %v3552 = vpop.f32.mrb[0].mxu0
    %v3553 = vadd.f32 0.0, %v3552
    %v3554 = vpop.f32.mrb[0].mxu0
    %v3555 = vadd.f32 0.0, %v3554
    %3556 = vmatprep.mubr.f32.mxu0 0.0
    %3557 = vmatmul.mubr.f32.gmra.mrb[0].mxu0 %v2309
    %v3558 = vpop.f32.mrb[0].mxu0
    %v3559 = vadd.f32 0.0, %v3558
    %v3560 = vpop.f32.mrb[0].mxu0
    %v3561 = vadd.f32 0.0, %v3560
    %3562 = vmatprep.mubr.f32.mxu0 0.0
    %3563 = vmatmul.mubr.f32.gmra.mrb[0].mxu0 %v2312
    %v3564 = vpop.f32.mrb[0].mxu0
    %v3565 = vadd.f32 0.0, %v3564
    %v3566 = vpop.f32.mrb[0].mxu0
    %v3567 = vadd.f32 0.0, %v3566
    %3568 = vmatprep.mubr.f32.mxu0 0.0
    %3569 = vmatmul.mubr.f32.gmra.mrb[0].mxu0 %v2315
    %v3570 = vpop.f32.mrb[0].mxu0
    %v3571 = vadd.f32 0.0, %v3570
    %v3572 = vpop.f32.mrb[0].mxu0
    %v3573 = vadd.f32 0.0, %v3572
    %3574 = vmatprep.mubr.f32.mxu0 0.0
    %3575 = vmatmul.mubr.f32.gmra.mrb[0].mxu0 %v2318
    %v3576 = vpop.f32.mrb[0].mxu0
    %v3577 = vadd.f32 0.0, %v3576
    %v3578 = vpop.f32.mrb[0].mxu0
    %v3579 = vadd.f32 0.0, %v3578
    %3580 = vmatprep.mubr.f32.mxu0 0.0
    %3581 = vmatmul.mubr.f32.gmra.mrb[0].mxu0 %v2321
    %v3582 = vpop.f32.mrb[0].mxu0
    %v3583 = vadd.f32 0.0, %v3582
    %v3584 = vpop.f32.mrb[0].mxu0
    %v3585 = vadd.f32 0.0, %v3584
    %3586 = vmatprep.mubr.f32.mxu0 0.0
    %3587 = vmatmul.mubr.f32.gmra.mrb[0].mxu0 %v2324
    %v3588 = vpop.f32.mrb[0].mxu0
    %v3589 = vadd.f32 0.0, %v3588
    %v3590 = vpop.f32.mrb[0].mxu0
    %v3591 = vadd.f32 0.0, %v3590
    %3592 = vmatprep.mubr.f32.mxu0 0.0
    %3593 = vmatmul.mubr.f32.gmra.mrb[0].mxu0 %v2327
    %v3594 = vpop.f32.mrb[0].mxu0
    %v3595 = vadd.f32 0.0, %v3594
    %v3596 = vpop.f32.mrb[0].mxu0
    %v3597 = vadd.f32 0.0, %v3596
    %3598 = vmatprep.mubr.f32.mxu0 0.0
    %3599 = vmatmul.mubr.f32.gmra.mrb[0].mxu0 %v2330
    %v3600 = vpop.f32.mrb[0].mxu0
    %v3601 = vadd.f32 0.0, %v3600
    %v3602 = vpop.f32.mrb[0].mxu0
    %v3603 = vadd.f32 0.0, %v3602
    %3604 = vmatprep.mubr.f32.mxu0 0.0
    %3605 = vmatmul.mubr.f32.gmra.mrb[0].mxu0 %v2333
    %v3606 = vpop.f32.mrb[0].mxu0
    %v3607 = vadd.f32 0.0, %v3606
    %v3608 = vpop.f32.mrb[0].mxu0
    %v3609 = vadd.f32 0.0, %v3608
    %3610 = vmatprep.mubr.f32.mxu0 0.0
    %3611 = vmatmul.mubr.f32.gmra.mrb[0].mxu0 %v2336
    %v3612 = vpop.f32.mrb[0].mxu0
    %v3613 = vadd.f32 0.0, %v3612
    %v3614 = vpop.f32.mrb[0].mxu0
    %v3615 = vadd.f32 0.0, %v3614
    %3616 = vmatprep.mubr.f32.mxu0 0.0
    %3617 = vmatmul.mubr.f32.gmra.mrb[0].mxu0 %v2339
    %v3618 = vpop.f32.mrb[0].mxu0
    %v3619 = vadd.f32 0.0, %v3618
    %v3620 = vpop.f32.mrb[0].mxu0
    %v3621 = vadd.f32 0.0, %v3620
    %3622 = vmatprep.mubr.f32.mxu0 0.0
    %3623 = vmatmul.mubr.f32.gmra.mrb[0].mxu0 %v2342
    %v3624 = vpop.f32.mrb[0].mxu0
    %v3625 = vadd.f32 0.0, %v3624
    %v3626 = vpop.f32.mrb[0].mxu0
    %v3627 = vadd.f32 0.0, %v3626
    %3628 = vmatprep.mubr.f32.mxu0 0.0
    %3629 = vmatmul.mubr.f32.gmra.mrb[0].mxu0 %v2345
    %v3630 = vpop.f32.mrb[0].mxu0
    %v3631 = vadd.f32 0.0, %v3630
    %v3632 = vpop.f32.mrb[0].mxu0
    %v3633 = vadd.f32 0.0, %v3632
    %3634 = vdwg.mxu0
    %p3635 = scmp.eq.s32.totalorder 0, 0
    // Predicated region
    $region22: #{glove_loss.1} parent=1 // pred_check
      %p3636 = pneg %p3635
    $region23: #{glove_loss.1} parent=1 // pred_check_branch
      %3638 = sbr.rel (%p3636) target = $region25
    $region24: #{glove_loss.1} parent=1 // pred_region
      %3639 = vst [vmem:[#allocation2] sm:$0xff] 0.0
      %3640 = vst [vmem:[#allocation2 + $0x8] sm:$0xff] 0.0
    $region25: #{glove_loss.1} parent=1 // pred_fallthru
      _
    %v3641 = vmul.f32 %v1062, %v2414
    %v3642 = vmul.f32 %v1064, %v2416
    %v3643 = vmul.f32 %v1223, %v2575
    %v3644 = vmul.f32 %v1225, %v2577
    %v3645 = vmul.f32 %v1384, %v2736
    %v3646 = vmul.f32 %v1386, %v2738
    %v3647 = vmul.f32 %v1545, %v2897
    %v3648 = vmul.f32 %v1547, %v2899
    %v3649 = vmul.f32 %v1706, %v3058
    %v3650 = vmul.f32 %v1708, %v3060
    %v3651 = vmul.f32 %v1867, %v3219
    %v3652 = vmul.f32 %v1869, %v3221
    %v3653 = vmul.f32 %v2028, %v3380
    %v3654 = vmul.f32 %v2030, %v3382
    %v3655 = vmul.f32 %v2189, %v3541
    %v3656 = vmul.f32 %v2191, %v3543
    %v3657 = vmul.f32 %v1068, %v2420
    %v3658 = vmul.f32 %v1070, %v2422
    %v3659 = vmul.f32 %v1229, %v2581
    %v3660 = vmul.f32 %v1231, %v2583
    %v3661 = vmul.f32 %v1390, %v2742
    %v3662 = vmul.f32 %v1392, %v2744
    %v3663 = vmul.f32 %v1551, %v2903
    %v3664 = vmul.f32 %v1553, %v2905
    %v3665 = vmul.f32 %v1712, %v3064
    %v3666 = vmul.f32 %v1714, %v3066
    %v3667 = vmul.f32 %v1873, %v3225
    %v3668 = vmul.f32 %v1875, %v3227
    %v3669 = vmul.f32 %v2034, %v3386
    %v3670 = vmul.f32 %v2036, %v3388
    %v3671 = vmul.f32 %v2195, %v3547
    %v3672 = vmul.f32 %v2197, %v3549
    %v3673 = vmul.f32 %v1074, %v2426
    %v3674 = vmul.f32 %v1076, %v2428
    %v3675 = vmul.f32 %v1235, %v2587
    %v3676 = vmul.f32 %v1237, %v2589
    %v3677 = vmul.f32 %v1396, %v2748
    %v3678 = vmul.f32 %v1398, %v2750
    %v3679 = vmul.f32 %v1557, %v2909
    %v3680 = vmul.f32 %v1559, %v2911
    %v3681 = vmul.f32 %v1718, %v3070
    %v3682 = vmul.f32 %v1720, %v3072
    %v3683 = vmul.f32 %v1879, %v3231
    %v3684 = vmul.f32 %v1881, %v3233
    %v3685 = vmul.f32 %v2040, %v3392
    %v3686 = vmul.f32 %v2042, %v3394
    %v3687 = vmul.f32 %v2201, %v3553
    %v3688 = vmul.f32 %v2203, %v3555
    %v3689 = vmul.f32 %v1080, %v2432
    %v3690 = vmul.f32 %v1082, %v2434
    %v3691 = vmul.f32 %v1241, %v2593
    %v3692 = vmul.f32 %v1243, %v2595
    %v3693 = vmul.f32 %v1402, %v2754
    %v3694 = vmul.f32 %v1404, %v2756
    %v3695 = vmul.f32 %v1563, %v2915
    %v3696 = vmul.f32 %v1565, %v2917
    %v3697 = vmul.f32 %v1724, %v3076
    %v3698 = vmul.f32 %v1726, %v3078
    %v3699 = vmul.f32 %v1885, %v3237
    %v3700 = vmul.f32 %v1887, %v3239
    %v3701 = vmul.f32 %v2046, %v3398
    %v3702 = vmul.f32 %v2048, %v3400
    %v3703 = vmul.f32 %v2207, %v3559
    %v3704 = vmul.f32 %v2209, %v3561
    %v3705 = vmul.f32 %v1086, %v2438
    %v3706 = vmul.f32 %v1088, %v2440
    %v3707 = vmul.f32 %v1247, %v2599
    %v3708 = vmul.f32 %v1249, %v2601
    %v3709 = vmul.f32 %v1408, %v2760
    %v3710 = vmul.f32 %v1410, %v2762
    %v3711 = vmul.f32 %v1569, %v2921
    %v3712 = vmul.f32 %v1571, %v2923
    %v3713 = vmul.f32 %v1730, %v3082
    %v3714 = vmul.f32 %v1732, %v3084
    %v3715 = vmul.f32 %v1891, %v3243
    %v3716 = vmul.f32 %v1893, %v3245
    %v3717 = vmul.f32 %v2052, %v3404
    %v3718 = vmul.f32 %v2054, %v3406
    %v3719 = vmul.f32 %v2213, %v3565
    %v3720 = vmul.f32 %v2215, %v3567
    %v3721 = vmul.f32 %v1092, %v2444
    %v3722 = vmul.f32 %v1094, %v2446
    %v3723 = vmul.f32 %v1253, %v2605
    %v3724 = vmul.f32 %v1255, %v2607
    %v3725 = vmul.f32 %v1414, %v2766
    %v3726 = vmul.f32 %v1416, %v2768
    %v3727 = vmul.f32 %v1575, %v2927
    %v3728 = vmul.f32 %v1577, %v2929
    %v3729 = vmul.f32 %v1736, %v3088
    %v3730 = vmul.f32 %v1738, %v3090
    %v3731 = vmul.f32 %v1897, %v3249
    %v3732 = vmul.f32 %v1899, %v3251
    %v3733 = vmul.f32 %v2058, %v3410
    %v3734 = vmul.f32 %v2060, %v3412
    %v3735 = vmul.f32 %v2219, %v3571
    %v3736 = vmul.f32 %v2221, %v3573
    %v3737 = vmul.f32 %v1098, %v2450
    %v3738 = vmul.f32 %v1100, %v2452
    %v3739 = vmul.f32 %v1259, %v2611
    %v3740 = vmul.f32 %v1261, %v2613
    %v3741 = vmul.f32 %v1420, %v2772
    %v3742 = vmul.f32 %v1422, %v2774
    %v3743 = vmul.f32 %v1581, %v2933
    %v3744 = vmul.f32 %v1583, %v2935
    %v3745 = vmul.f32 %v1742, %v3094
    %v3746 = vmul.f32 %v1744, %v3096
    %v3747 = vmul.f32 %v1903, %v3255
    %v3748 = vmul.f32 %v1905, %v3257
    %v3749 = vmul.f32 %v2064, %v3416
    %v3750 = vmul.f32 %v2066, %v3418
    %v3751 = vmul.f32 %v2225, %v3577
    %v3752 = vmul.f32 %v2227, %v3579
    %v3753 = vmul.f32 %v1104, %v2456
    %v3754 = vmul.f32 %v1106, %v2458
    %v3755 = vmul.f32 %v1265, %v2617
    %v3756 = vmul.f32 %v1267, %v2619
    %v3757 = vmul.f32 %v1426, %v2778
    %v3758 = vmul.f32 %v1428, %v2780
    %v3759 = vmul.f32 %v1587, %v2939
    %v3760 = vmul.f32 %v1589, %v2941
    %v3761 = vmul.f32 %v1748, %v3100
    %v3762 = vmul.f32 %v1750, %v3102
    %v3763 = vmul.f32 %v1909, %v3261
    %v3764 = vmul.f32 %v1911, %v3263
    %v3765 = vmul.f32 %v2070, %v3422
    %v3766 = vmul.f32 %v2072, %v3424
    %v3767 = vmul.f32 %v2231, %v3583
    %v3768 = vmul.f32 %v2233, %v3585
    %v3769 = vmul.f32 %v1110, %v2462
    %v3770 = vmul.f32 %v1112, %v2464
    %v3771 = vmul.f32 %v1271, %v2623
    %v3772 = vmul.f32 %v1273, %v2625
    %v3773 = vmul.f32 %v1432, %v2784
    %v3774 = vmul.f32 %v1434, %v2786
    %v3775 = vmul.f32 %v1593, %v2945
    %v3776 = vmul.f32 %v1595, %v2947
    %v3777 = vmul.f32 %v1754, %v3106
    %v3778 = vmul.f32 %v1756, %v3108
    %v3779 = vmul.f32 %v1915, %v3267
    %v3780 = vmul.f32 %v1917, %v3269
    %v3781 = vmul.f32 %v2076, %v3428
    %v3782 = vmul.f32 %v2078, %v3430
    %v3783 = vmul.f32 %v2237, %v3589
    %v3784 = vmul.f32 %v2239, %v3591
    %v3785 = vmul.f32 %v1116, %v2468
    %v3786 = vmul.f32 %v1118, %v2470
    %v3787 = vmul.f32 %v1277, %v2629
    %v3788 = vmul.f32 %v1279, %v2631
    %v3789 = vmul.f32 %v1438, %v2790
    %v3790 = vmul.f32 %v1440, %v2792
    %v3791 = vmul.f32 %v1599, %v2951
    %v3792 = vmul.f32 %v1601, %v2953
    %v3793 = vmul.f32 %v1760, %v3112
    %v3794 = vmul.f32 %v1762, %v3114
    %v3795 = vmul.f32 %v1921, %v3273
    %v3796 = vmul.f32 %v1923, %v3275
    %v3797 = vmul.f32 %v2082, %v3434
    %v3798 = vmul.f32 %v2084, %v3436
    %v3799 = vmul.f32 %v2243, %v3595
    %v3800 = vmul.f32 %v2245, %v3597
    %v3801 = vmul.f32 %v1122, %v2474
    %v3802 = vmul.f32 %v1124, %v2476
    %v3803 = vmul.f32 %v1283, %v2635
    %v3804 = vmul.f32 %v1285, %v2637
    %v3805 = vmul.f32 %v1444, %v2796
    %v3806 = vmul.f32 %v1446, %v2798
    %v3807 = vmul.f32 %v1605, %v2957
    %v3808 = vmul.f32 %v1607, %v2959
    %v3809 = vmul.f32 %v1766, %v3118
    %v3810 = vmul.f32 %v1768, %v3120
    %v3811 = vmul.f32 %v1927, %v3279
    %v3812 = vmul.f32 %v1929, %v3281
    %v3813 = vmul.f32 %v2088, %v3440
    %v3814 = vmul.f32 %v2090, %v3442
    %v3815 = vmul.f32 %v2249, %v3601
    %v3816 = vmul.f32 %v2251, %v3603
    %v3817 = vmul.f32 %v1128, %v2480
    %v3818 = vmul.f32 %v1130, %v2482
    %v3819 = vmul.f32 %v1289, %v2641
    %v3820 = vmul.f32 %v1291, %v2643
    %v3821 = vmul.f32 %v1450, %v2802
    %v3822 = vmul.f32 %v1452, %v2804
    %v3823 = vmul.f32 %v1611, %v2963
    %v3824 = vmul.f32 %v1613, %v2965
    %v3825 = vmul.f32 %v1772, %v3124
    %v3826 = vmul.f32 %v1774, %v3126
    %v3827 = vmul.f32 %v1933, %v3285
    %v3828 = vmul.f32 %v1935, %v3287
    %v3829 = vmul.f32 %v2094, %v3446
    %v3830 = vmul.f32 %v2096, %v3448
    %v3831 = vmul.f32 %v2255, %v3607
    %v3832 = vmul.f32 %v2257, %v3609
    %v3833 = vmul.f32 %v1134, %v2486
    %v3834 = vmul.f32 %v1136, %v2488
    %v3835 = vmul.f32 %v1295, %v2647
    %v3836 = vmul.f32 %v1297, %v2649
    %v3837 = vmul.f32 %v1456, %v2808
    %v3838 = vmul.f32 %v1458, %v2810
    %v3839 = vmul.f32 %v1617, %v2969
    %v3840 = vmul.f32 %v1619, %v2971
    %v3841 = vmul.f32 %v1778, %v3130
    %v3842 = vmul.f32 %v1780, %v3132
    %v3843 = vmul.f32 %v1939, %v3291
    %v3844 = vmul.f32 %v1941, %v3293
    %v3845 = vmul.f32 %v2100, %v3452
    %v3846 = vmul.f32 %v2102, %v3454
    %v3847 = vmul.f32 %v2261, %v3613
    %v3848 = vmul.f32 %v2263, %v3615
    %v3849 = vmul.f32 %v1140, %v2492
    %v3850 = vmul.f32 %v1142, %v2494
    %v3851 = vmul.f32 %v1301, %v2653
    %v3852 = vmul.f32 %v1303, %v2655
    %v3853 = vmul.f32 %v1462, %v2814
    %v3854 = vmul.f32 %v1464, %v2816
    %v3855 = vmul.f32 %v1623, %v2975
    %v3856 = vmul.f32 %v1625, %v2977
    %v3857 = vmul.f32 %v1784, %v3136
    %v3858 = vmul.f32 %v1786, %v3138
    %v3859 = vmul.f32 %v1945, %v3297
    %v3860 = vmul.f32 %v1947, %v3299
    %v3861 = vmul.f32 %v2106, %v3458
    %v3862 = vmul.f32 %v2108, %v3460
    %v3863 = vmul.f32 %v2267, %v3619
    %v3864 = vmul.f32 %v2269, %v3621
    %v3865 = vmul.f32 %v1146, %v2498
    %v3866 = vmul.f32 %v1148, %v2500
    %v3867 = vmul.f32 %v1307, %v2659
    %v3868 = vmul.f32 %v1309, %v2661
    %v3869 = vmul.f32 %v1468, %v2820
    %v3870 = vmul.f32 %v1470, %v2822
    %v3871 = vmul.f32 %v1629, %v2981
    %v3872 = vmul.f32 %v1631, %v2983
    %v3873 = vmul.f32 %v1790, %v3142
    %v3874 = vmul.f32 %v1792, %v3144
    %v3875 = vmul.f32 %v1951, %v3303
    %v3876 = vmul.f32 %v1953, %v3305
    %v3877 = vmul.f32 %v2112, %v3464
    %v3878 = vmul.f32 %v2114, %v3466
    %v3879 = vmul.f32 %v2273, %v3625
    %v3880 = vmul.f32 %v2275, %v3627
    %v3881 = vmul.f32 %v1152, %v2504
    %v3882 = vmul.f32 %v1154, %v2506
    %v3883 = vmul.f32 %v1313, %v2665
    %v3884 = vmul.f32 %v1315, %v2667
    %v3885 = vmul.f32 %v1474, %v2826
    %v3886 = vmul.f32 %v1476, %v2828
    %v3887 = vmul.f32 %v1635, %v2987
    %v3888 = vmul.f32 %v1637, %v2989
    %v3889 = vmul.f32 %v1796, %v3148
    %v3890 = vmul.f32 %v1798, %v3150
    %v3891 = vmul.f32 %v1957, %v3309
    %v3892 = vmul.f32 %v1959, %v3311
    %v3893 = vmul.f32 %v2118, %v3470
    %v3894 = vmul.f32 %v2120, %v3472
    %v3895 = vmul.f32 %v2279, %v3631
    %v3896 = vmul.f32 %v2281, %v3633
    %v3897 = vadd.f32 %v3641, %v3657
    %v3898 = vadd.f32 %v3897, %v3673
    %v3899 = vadd.f32 %v3898, %v3689
    %v3900 = vadd.f32 %v3899, %v3705
    %v3901 = vadd.f32 %v3900, %v3721
    %v3902 = vadd.f32 %v3901, %v3737
    %v3903 = vadd.f32 %v3902, %v3753
    %v3904 = vadd.f32 %v3903, %v3769
    %v3905 = vadd.f32 %v3904, %v3785
    %v3906 = vadd.f32 %v3905, %v3801
    %v3907 = vadd.f32 %v3906, %v3817
    %v3908 = vadd.f32 %v3907, %v3833
    %v3909 = vadd.f32 %v3908, %v3849
    %v3910 = vadd.f32 %v3909, %v3865
    %v3911 = vadd.f32 %v3910, %v3881
    %v3912 = vrot.slane %v3911, 4
    %v3913 = vadd.f32 %v3911, %v3912
    %v3914 = vrot.slane %v3913, 2
    %v3915 = vadd.f32 %v3913, %v3914
    %v3916 = vrot.slane %v3915, 1
    %v3917 = vadd.f32 %v3915, %v3916
    %v3918 = vadd.f32 %v3642, %v3658
    %v3919 = vadd.f32 %v3918, %v3674
    %v3920 = vadd.f32 %v3919, %v3690
    %v3921 = vadd.f32 %v3920, %v3706
    %v3922 = vadd.f32 %v3921, %v3722
    %v3923 = vadd.f32 %v3922, %v3738
    %v3924 = vadd.f32 %v3923, %v3754
    %v3925 = vadd.f32 %v3924, %v3770
    %v3926 = vadd.f32 %v3925, %v3786
    %v3927 = vadd.f32 %v3926, %v3802
    %v3928 = vadd.f32 %v3927, %v3818
    %v3929 = vadd.f32 %v3928, %v3834
    %v3930 = vadd.f32 %v3929, %v3850
    %v3931 = vadd.f32 %v3930, %v3866
    %v3932 = vadd.f32 %v3931, %v3882
    %v3933 = vrot.slane %v3932, 4
    %v3934 = vadd.f32 %v3932, %v3933
    %v3935 = vrot.slane %v3934, 2
    %v3936 = vadd.f32 %v3934, %v3935
    %v3937 = vrot.slane %v3936, 1
    %v3938 = vadd.f32 %v3936, %v3937
    %v3939 = vadd.f32 %v3643, %v3659
    %v3940 = vadd.f32 %v3939, %v3675
    %v3941 = vadd.f32 %v3940, %v3691
    %v3942 = vadd.f32 %v3941, %v3707
    %v3943 = vadd.f32 %v3942, %v3723
    %v3944 = vadd.f32 %v3943, %v3739
    %v3945 = vadd.f32 %v3944, %v3755
    %v3946 = vadd.f32 %v3945, %v3771
    %v3947 = vadd.f32 %v3946, %v3787
    %v3948 = vadd.f32 %v3947, %v3803
    %v3949 = vadd.f32 %v3948, %v3819
    %v3950 = vadd.f32 %v3949, %v3835
    %v3951 = vadd.f32 %v3950, %v3851
    %v3952 = vadd.f32 %v3951, %v3867
    %v3953 = vadd.f32 %v3952, %v3883
    %v3954 = vrot.slane %v3953, 4
    %v3955 = vadd.f32 %v3953, %v3954
    %v3956 = vrot.slane %v3955, 2
    %v3957 = vadd.f32 %v3955, %v3956
    %v3958 = vrot.slane %v3957, 1
    %v3959 = vadd.f32 %v3957, %v3958
    %v3960 = vadd.f32 %v3644, %v3660
    %v3961 = vadd.f32 %v3960, %v3676
    %v3962 = vadd.f32 %v3961, %v3692
    %v3963 = vadd.f32 %v3962, %v3708
    %v3964 = vadd.f32 %v3963, %v3724
    %v3965 = vadd.f32 %v3964, %v3740
    %v3966 = vadd.f32 %v3965, %v3756
    %v3967 = vadd.f32 %v3966, %v3772
    %v3968 = vadd.f32 %v3967, %v3788
    %v3969 = vadd.f32 %v3968, %v3804
    %v3970 = vadd.f32 %v3969, %v3820
    %v3971 = vadd.f32 %v3970, %v3836
    %v3972 = vadd.f32 %v3971, %v3852
    %v3973 = vadd.f32 %v3972, %v3868
    %v3974 = vadd.f32 %v3973, %v3884
    %v3975 = vrot.slane %v3974, 4
    %v3976 = vadd.f32 %v3974, %v3975
    %v3977 = vrot.slane %v3976, 2
    %v3978 = vadd.f32 %v3976, %v3977
    %v3979 = vrot.slane %v3978, 1
    %v3980 = vadd.f32 %v3978, %v3979
    %v3981 = vadd.f32 %v3645, %v3661
    %v3982 = vadd.f32 %v3981, %v3677
    %v3983 = vadd.f32 %v3982, %v3693
    %v3984 = vadd.f32 %v3983, %v3709
    %v3985 = vadd.f32 %v3984, %v3725
    %v3986 = vadd.f32 %v3985, %v3741
    %v3987 = vadd.f32 %v3986, %v3757
    %v3988 = vadd.f32 %v3987, %v3773
    %v3989 = vadd.f32 %v3988, %v3789
    %v3990 = vadd.f32 %v3989, %v3805
    %v3991 = vadd.f32 %v3990, %v3821
    %v3992 = vadd.f32 %v3991, %v3837
    %v3993 = vadd.f32 %v3992, %v3853
    %v3994 = vadd.f32 %v3993, %v3869
    %v3995 = vadd.f32 %v3994, %v3885
    %v3996 = vrot.slane %v3995, 4
    %v3997 = vadd.f32 %v3995, %v3996
    %v3998 = vrot.slane %v3997, 2
    %v3999 = vadd.f32 %v3997, %v3998
    %v4000 = vrot.slane %v3999, 1
    %v4001 = vadd.f32 %v3999, %v4000
    %v4002 = vadd.f32 %v3646, %v3662
    %v4003 = vadd.f32 %v4002, %v3678
    %v4004 = vadd.f32 %v4003, %v3694
    %v4005 = vadd.f32 %v4004, %v3710
    %v4006 = vadd.f32 %v4005, %v3726
    %v4007 = vadd.f32 %v4006, %v3742
    %v4008 = vadd.f32 %v4007, %v3758
    %v4009 = vadd.f32 %v4008, %v3774
    %v4010 = vadd.f32 %v4009, %v3790
    %v4011 = vadd.f32 %v4010, %v3806
    %v4012 = vadd.f32 %v4011, %v3822
    %v4013 = vadd.f32 %v4012, %v3838
    %v4014 = vadd.f32 %v4013, %v3854
    %v4015 = vadd.f32 %v4014, %v3870
    %v4016 = vadd.f32 %v4015, %v3886
    %v4017 = vrot.slane %v4016, 4
    %v4018 = vadd.f32 %v4016, %v4017
    %v4019 = vrot.slane %v4018, 2
    %v4020 = vadd.f32 %v4018, %v4019
    %v4021 = vrot.slane %v4020, 1
    %v4022 = vadd.f32 %v4020, %v4021
    %v4023 = vadd.f32 %v3647, %v3663
    %v4024 = vadd.f32 %v4023, %v3679
    %v4025 = vadd.f32 %v4024, %v3695
    %v4026 = vadd.f32 %v4025, %v3711
    %v4027 = vadd.f32 %v4026, %v3727
    %v4028 = vadd.f32 %v4027, %v3743
    %v4029 = vadd.f32 %v4028, %v3759
    %v4030 = vadd.f32 %v4029, %v3775
    %v4031 = vadd.f32 %v4030, %v3791
    %v4032 = vadd.f32 %v4031, %v3807
    %v4033 = vadd.f32 %v4032, %v3823
    %v4034 = vadd.f32 %v4033, %v3839
    %v4035 = vadd.f32 %v4034, %v3855
    %v4036 = vadd.f32 %v4035, %v3871
    %v4037 = vadd.f32 %v4036, %v3887
    %v4038 = vrot.slane %v4037, 4
    %v4039 = vadd.f32 %v4037, %v4038
    %v4040 = vrot.slane %v4039, 2
    %v4041 = vadd.f32 %v4039, %v4040
    %v4042 = vrot.slane %v4041, 1
    %v4043 = vadd.f32 %v4041, %v4042
    %v4044 = vadd.f32 %v3648, %v3664
    %v4045 = vadd.f32 %v4044, %v3680
    %v4046 = vadd.f32 %v4045, %v3696
    %v4047 = vadd.f32 %v4046, %v3712
    %v4048 = vadd.f32 %v4047, %v3728
    %v4049 = vadd.f32 %v4048, %v3744
    %v4050 = vadd.f32 %v4049, %v3760
    %v4051 = vadd.f32 %v4050, %v3776
    %v4052 = vadd.f32 %v4051, %v3792
    %v4053 = vadd.f32 %v4052, %v3808
    %v4054 = vadd.f32 %v4053, %v3824
    %v4055 = vadd.f32 %v4054, %v3840
    %v4056 = vadd.f32 %v4055, %v3856
    %v4057 = vadd.f32 %v4056, %v3872
    %v4058 = vadd.f32 %v4057, %v3888
    %v4059 = vrot.slane %v4058, 4
    %v4060 = vadd.f32 %v4058, %v4059
    %v4061 = vrot.slane %v4060, 2
    %v4062 = vadd.f32 %v4060, %v4061
    %v4063 = vrot.slane %v4062, 1
    %v4064 = vadd.f32 %v4062, %v4063
    %v4065 = vadd.f32 %v3649, %v3665
    %v4066 = vadd.f32 %v4065, %v3681
    %v4067 = vadd.f32 %v4066, %v3697
    %v4068 = vadd.f32 %v4067, %v3713
    %v4069 = vadd.f32 %v4068, %v3729
    %v4070 = vadd.f32 %v4069, %v3745
    %v4071 = vadd.f32 %v4070, %v3761
    %v4072 = vadd.f32 %v4071, %v3777
    %v4073 = vadd.f32 %v4072, %v3793
    %v4074 = vadd.f32 %v4073, %v3809
    %v4075 = vadd.f32 %v4074, %v3825
    %v4076 = vadd.f32 %v4075, %v3841
    %v4077 = vadd.f32 %v4076, %v3857
    %v4078 = vadd.f32 %v4077, %v3873
    %v4079 = vadd.f32 %v4078, %v3889
    %v4080 = vrot.slane %v4079, 4
    %v4081 = vadd.f32 %v4079, %v4080
    %v4082 = vrot.slane %v4081, 2
    %v4083 = vadd.f32 %v4081, %v4082
    %v4084 = vrot.slane %v4083, 1
    %v4085 = vadd.f32 %v4083, %v4084
    %v4086 = vadd.f32 %v3650, %v3666
    %v4087 = vadd.f32 %v4086, %v3682
    %v4088 = vadd.f32 %v4087, %v3698
    %v4089 = vadd.f32 %v4088, %v3714
    %v4090 = vadd.f32 %v4089, %v3730
    %v4091 = vadd.f32 %v4090, %v3746
    %v4092 = vadd.f32 %v4091, %v3762
    %v4093 = vadd.f32 %v4092, %v3778
    %v4094 = vadd.f32 %v4093, %v3794
    %v4095 = vadd.f32 %v4094, %v3810
    %v4096 = vadd.f32 %v4095, %v3826
    %v4097 = vadd.f32 %v4096, %v3842
    %v4098 = vadd.f32 %v4097, %v3858
    %v4099 = vadd.f32 %v4098, %v3874
    %v4100 = vadd.f32 %v4099, %v3890
    %v4101 = vrot.slane %v4100, 4
    %v4102 = vadd.f32 %v4100, %v4101
    %v4103 = vrot.slane %v4102, 2
    %v4104 = vadd.f32 %v4102, %v4103
    %v4105 = vrot.slane %v4104, 1
    %v4106 = vadd.f32 %v4104, %v4105
    %v4107 = vadd.f32 %v3651, %v3667
    %v4108 = vadd.f32 %v4107, %v3683
    %v4109 = vadd.f32 %v4108, %v3699
    %v4110 = vadd.f32 %v4109, %v3715
    %v4111 = vadd.f32 %v4110, %v3731
    %v4112 = vadd.f32 %v4111, %v3747
    %v4113 = vadd.f32 %v4112, %v3763
    %v4114 = vadd.f32 %v4113, %v3779
    %v4115 = vadd.f32 %v4114, %v3795
    %v4116 = vadd.f32 %v4115, %v3811
    %v4117 = vadd.f32 %v4116, %v3827
    %v4118 = vadd.f32 %v4117, %v3843
    %v4119 = vadd.f32 %v4118, %v3859
    %v4120 = vadd.f32 %v4119, %v3875
    %v4121 = vadd.f32 %v4120, %v3891
    %v4122 = vrot.slane %v4121, 4
    %v4123 = vadd.f32 %v4121, %v4122
    %v4124 = vrot.slane %v4123, 2
    %v4125 = vadd.f32 %v4123, %v4124
    %v4126 = vrot.slane %v4125, 1
    %v4127 = vadd.f32 %v4125, %v4126
    %v4128 = vadd.f32 %v3652, %v3668
    %v4129 = vadd.f32 %v4128, %v3684
    %v4130 = vadd.f32 %v4129, %v3700
    %v4131 = vadd.f32 %v4130, %v3716
    %v4132 = vadd.f32 %v4131, %v3732
    %v4133 = vadd.f32 %v4132, %v3748
    %v4134 = vadd.f32 %v4133, %v3764
    %v4135 = vadd.f32 %v4134, %v3780
    %v4136 = vadd.f32 %v4135, %v3796
    %v4137 = vadd.f32 %v4136, %v3812
    %v4138 = vadd.f32 %v4137, %v3828
    %v4139 = vadd.f32 %v4138, %v3844
    %v4140 = vadd.f32 %v4139, %v3860
    %v4141 = vadd.f32 %v4140, %v3876
    %v4142 = vadd.f32 %v4141, %v3892
    %v4143 = vrot.slane %v4142, 4
    %v4144 = vadd.f32 %v4142, %v4143
    %v4145 = vrot.slane %v4144, 2
    %v4146 = vadd.f32 %v4144, %v4145
    %v4147 = vrot.slane %v4146, 1
    %v4148 = vadd.f32 %v4146, %v4147
    %v4149 = vadd.f32 %v3653, %v3669
    %v4150 = vadd.f32 %v4149, %v3685
    %v4151 = vadd.f32 %v4150, %v3701
    %v4152 = vadd.f32 %v4151, %v3717
    %v4153 = vadd.f32 %v4152, %v3733
    %v4154 = vadd.f32 %v4153, %v3749
    %v4155 = vadd.f32 %v4154, %v3765
    %v4156 = vadd.f32 %v4155, %v3781
    %v4157 = vadd.f32 %v4156, %v3797
    %v4158 = vadd.f32 %v4157, %v3813
    %v4159 = vadd.f32 %v4158, %v3829
    %v4160 = vadd.f32 %v4159, %v3845
    %v4161 = vadd.f32 %v4160, %v3861
    %v4162 = vadd.f32 %v4161, %v3877
    %v4163 = vadd.f32 %v4162, %v3893
    %v4164 = vrot.slane %v4163, 4
    %v4165 = vadd.f32 %v4163, %v4164
    %v4166 = vrot.slane %v4165, 2
    %v4167 = vadd.f32 %v4165, %v4166
    %v4168 = vrot.slane %v4167, 1
    %v4169 = vadd.f32 %v4167, %v4168
    %v4170 = vadd.f32 %v3654, %v3670
    %v4171 = vadd.f32 %v4170, %v3686
    %v4172 = vadd.f32 %v4171, %v3702
    %v4173 = vadd.f32 %v4172, %v3718
    %v4174 = vadd.f32 %v4173, %v3734
    %v4175 = vadd.f32 %v4174, %v3750
    %v4176 = vadd.f32 %v4175, %v3766
    %v4177 = vadd.f32 %v4176, %v3782
    %v4178 = vadd.f32 %v4177, %v3798
    %v4179 = vadd.f32 %v4178, %v3814
    %v4180 = vadd.f32 %v4179, %v3830
    %v4181 = vadd.f32 %v4180, %v3846
    %v4182 = vadd.f32 %v4181, %v3862
    %v4183 = vadd.f32 %v4182, %v3878
    %v4184 = vadd.f32 %v4183, %v3894
    %v4185 = vrot.slane %v4184, 4
    %v4186 = vadd.f32 %v4184, %v4185
    %v4187 = vrot.slane %v4186, 2
    %v4188 = vadd.f32 %v4186, %v4187
    %v4189 = vrot.slane %v4188, 1
    %v4190 = vadd.f32 %v4188, %v4189
    %v4191 = vadd.f32 %v3655, %v3671
    %v4192 = vadd.f32 %v4191, %v3687
    %v4193 = vadd.f32 %v4192, %v3703
    %v4194 = vadd.f32 %v4193, %v3719
    %v4195 = vadd.f32 %v4194, %v3735
    %v4196 = vadd.f32 %v4195, %v3751
    %v4197 = vadd.f32 %v4196, %v3767
    %v4198 = vadd.f32 %v4197, %v3783
    %v4199 = vadd.f32 %v4198, %v3799
    %v4200 = vadd.f32 %v4199, %v3815
    %v4201 = vadd.f32 %v4200, %v3831
    %v4202 = vadd.f32 %v4201, %v3847
    %v4203 = vadd.f32 %v4202, %v3863
    %v4204 = vadd.f32 %v4203, %v3879
    %v4205 = vadd.f32 %v4204, %v3895
    %v4206 = vrot.slane %v4205, 4
    %v4207 = vadd.f32 %v4205, %v4206
    %v4208 = vrot.slane %v4207, 2
    %v4209 = vadd.f32 %v4207, %v4208
    %v4210 = vrot.slane %v4209, 1
    %v4211 = vadd.f32 %v4209, %v4210
    %v4212 = vadd.f32 %v3656, %v3672
    %v4213 = vadd.f32 %v4212, %v3688
    %v4214 = vadd.f32 %v4213, %v3704
    %v4215 = vadd.f32 %v4214, %v3720
    %v4216 = vadd.f32 %v4215, %v3736
    %v4217 = vadd.f32 %v4216, %v3752
    %v4218 = vadd.f32 %v4217, %v3768
    %v4219 = vadd.f32 %v4218, %v3784
    %v4220 = vadd.f32 %v4219, %v3800
    %v4221 = vadd.f32 %v4220, %v3816
    %v4222 = vadd.f32 %v4221, %v3832
    %v4223 = vadd.f32 %v4222, %v3848
    %v4224 = vadd.f32 %v4223, %v3864
    %v4225 = vadd.f32 %v4224, %v3880
    %v4226 = vadd.f32 %v4225, %v3896
    %v4227 = vrot.slane %v4226, 4
    %v4228 = vadd.f32 %v4226, %v4227
    %v4229 = vrot.slane %v4228, 2
    %v4230 = vadd.f32 %v4228, %v4229
    %v4231 = vrot.slane %v4230, 1
    %v4232 = vadd.f32 %v4230, %v4231
    %v4233 = vld [vmem:[%s4] ss:$2 sm:$0xff]
    %s4234 = scalar_lea.vmem %s4, 16
    %v4235 = vld [vmem:[%s4234] ss:$2 sm:$0xff]
    %s4236 = scalar_lea.vmem %s4, 1
    %v4237 = vld [vmem:[%s4236] ss:$2 sm:$0xff]
    %s4238 = scalar_lea.vmem %s4, 17
    %v4239 = vld [vmem:[%s4238] ss:$2 sm:$0xff]
    %v4242 = vlaneseq
    %v4243 = vshrl.u32 %v4242, 7
    %v4244 = vsub.s32 0, %v4243
    %v4245 = vrot.slane %v4233, %v4244
    %v4246 = vlaneseq
    %v4247 = vshrl.u32 %v4246, 7
    %v4248 = vsub.s32 1, %v4247
    %v4249 = vrot.slane %v4233, %v4248
    %v4250 = vlaneseq
    %v4251 = vshrl.u32 %v4250, 7
    %v4252 = vsub.s32 2, %v4251
    %v4253 = vrot.slane %v4233, %v4252
    %v4254 = vlaneseq
    %v4255 = vshrl.u32 %v4254, 7
    %v4256 = vsub.s32 3, %v4255
    %v4257 = vrot.slane %v4233, %v4256
    %v4258 = vlaneseq
    %v4259 = vshrl.u32 %v4258, 7
    %v4260 = vsub.s32 4, %v4259
    %v4261 = vrot.slane %v4233, %v4260
    %v4262 = vlaneseq
    %v4263 = vshrl.u32 %v4262, 7
    %v4264 = vsub.s32 5, %v4263
    %v4265 = vrot.slane %v4233, %v4264
    %v4266 = vlaneseq
    %v4267 = vshrl.u32 %v4266, 7
    %v4268 = vsub.s32 6, %v4267
    %v4269 = vrot.slane %v4233, %v4268
    %v4270 = vlaneseq
    %v4271 = vshrl.u32 %v4270, 7
    %v4272 = vsub.s32 7, %v4271
    %v4273 = vrot.slane %v4233, %v4272
    %v4274 = vlaneseq
    %v4275 = vshrl.u32 %v4274, 7
    %v4276 = vsub.s32 0, %v4275
    %v4277 = vrot.slane %v4235, %v4276
    %v4278 = vlaneseq
    %v4279 = vshrl.u32 %v4278, 7
    %v4280 = vsub.s32 1, %v4279
    %v4281 = vrot.slane %v4235, %v4280
    %v4282 = vlaneseq
    %v4283 = vshrl.u32 %v4282, 7
    %v4284 = vsub.s32 2, %v4283
    %v4285 = vrot.slane %v4235, %v4284
    %v4286 = vlaneseq
    %v4287 = vshrl.u32 %v4286, 7
    %v4288 = vsub.s32 3, %v4287
    %v4289 = vrot.slane %v4235, %v4288
    %v4290 = vlaneseq
    %v4291 = vshrl.u32 %v4290, 7
    %v4292 = vsub.s32 4, %v4291
    %v4293 = vrot.slane %v4235, %v4292
    %v4294 = vlaneseq
    %v4295 = vshrl.u32 %v4294, 7
    %v4296 = vsub.s32 5, %v4295
    %v4297 = vrot.slane %v4235, %v4296
    %v4298 = vlaneseq
    %v4299 = vshrl.u32 %v4298, 7
    %v4300 = vsub.s32 6, %v4299
    %v4301 = vrot.slane %v4235, %v4300
    %v4302 = vlaneseq
    %v4303 = vshrl.u32 %v4302, 7
    %v4304 = vsub.s32 7, %v4303
    %v4305 = vrot.slane %v4235, %v4304
    %v4322 = vadd.f32 %v3917, %v4245
    %v4323 = vadd.f32 %v3938, %v4249
    %v4324 = vadd.f32 %v3959, %v4253
    %v4325 = vadd.f32 %v3980, %v4257
    %v4326 = vadd.f32 %v4001, %v4261
    %v4327 = vadd.f32 %v4022, %v4265
    %v4328 = vadd.f32 %v4043, %v4269
    %v4329 = vadd.f32 %v4064, %v4273
    %v4330 = vadd.f32 %v4085, %v4277
    %v4331 = vadd.f32 %v4106, %v4281
    %v4332 = vadd.f32 %v4127, %v4285
    %v4333 = vadd.f32 %v4148, %v4289
    %v4334 = vadd.f32 %v4169, %v4293
    %v4335 = vadd.f32 %v4190, %v4297
    %v4336 = vadd.f32 %v4211, %v4301
    %v4337 = vadd.f32 %v4232, %v4305
    %v4338 = vld [vmem:[#allocation2] sm:$0xff]
    %v4339 = vld [vmem:[#allocation2 + $0x8] sm:$0xff]
    %v4340 = vmul.f32 %v4322, %v4322
    %v4341 = vmul.f32 %v4323, %v4323
    %v4342 = vmul.f32 %v4324, %v4324
    %v4343 = vmul.f32 %v4325, %v4325
    %v4344 = vmul.f32 %v4326, %v4326
    %v4345 = vmul.f32 %v4327, %v4327
    %v4346 = vmul.f32 %v4328, %v4328
    %v4347 = vmul.f32 %v4329, %v4329
    %v4348 = vmul.f32 %v4330, %v4330
    %v4349 = vmul.f32 %v4331, %v4331
    %v4350 = vmul.f32 %v4332, %v4332
    %v4351 = vmul.f32 %v4333, %v4333
    %v4352 = vmul.f32 %v4334, %v4334
    %v4353 = vmul.f32 %v4335, %v4335
    %v4354 = vmul.f32 %v4336, %v4336
    %v4355 = vmul.f32 %v4337, %v4337
    %v4372 = vcombine.low %v4340, %v4341
    %v4373 = vcombine.low %v4342, %v4343
    %v4374 = vcombine.low %v4344, %v4345
    %v4375 = vcombine.low %v4346, %v4347
    %v4377 = vunpack.c.l.s4 1966171168
    %v4378 = vunpack.c.0.s8 %v4377
    %v4379 = vlaneseq
    %v4380 = vshrl.u32 %v4379, 7
    %v4381 = vsub.s32 %v4378, %v4380
    %v4382 = vrot.slane %v4372, %v4381
    %v4384 = vunpack.c.l.s4 1966171168
    %v4385 = vunpack.c.0.s8 %v4384
    %v4386 = vlaneseq
    %v4387 = vshrl.u32 %v4386, 7
    %v4388 = vsub.s32 %v4385, %v4387
    %v4389 = vrot.slane %v4373, %v4388
    %v4391 = vunpack.c.l.s4 1966171168
    %v4392 = vunpack.c.0.s8 %v4391
    %v4393 = vlaneseq
    %v4394 = vshrl.u32 %v4393, 7
    %v4395 = vsub.s32 %v4392, %v4394
    %v4396 = vrot.slane %v4374, %v4395
    %v4398 = vunpack.c.l.s4 1966171168
    %v4399 = vunpack.c.0.s8 %v4398
    %v4400 = vlaneseq
    %v4401 = vshrl.u32 %v4400, 7
    %v4402 = vsub.s32 %v4399, %v4401
    %v4403 = vrot.slane %v4375, %v4402
    %v4404 = vcombine.low %v4382, %v4389
    %v4405 = vcombine.low %v4396, %v4403
    %v4407 = vunpack.c.l.s4 1966171168
    %v4408 = vunpack.c.0.s8 %v4407
    %v4409 = vlaneseq
    %v4410 = vshrl.u32 %v4409, 7
    %v4411 = vsub.s32 %v4408, %v4410
    %v4412 = vrot.slane %v4404, %v4411
    %v4414 = vunpack.c.l.s4 1966171168
    %v4415 = vunpack.c.0.s8 %v4414
    %v4416 = vlaneseq
    %v4417 = vshrl.u32 %v4416, 7
    %v4418 = vsub.s32 %v4415, %v4417
    %v4419 = vrot.slane %v4405, %v4418
    %v4420 = vcombine.low %v4412, %v4419
    %v4421 = vcombine.low %v4348, %v4349
    %v4422 = vcombine.low %v4350, %v4351
    %v4423 = vcombine.low %v4352, %v4353
    %v4424 = vcombine.low %v4354, %v4355
    %v4426 = vunpack.c.l.s4 1966171168
    %v4427 = vunpack.c.0.s8 %v4426
    %v4428 = vlaneseq
    %v4429 = vshrl.u32 %v4428, 7
    %v4430 = vsub.s32 %v4427, %v4429
    %v4431 = vrot.slane %v4421, %v4430
    %v4433 = vunpack.c.l.s4 1966171168
    %v4434 = vunpack.c.0.s8 %v4433
    %v4435 = vlaneseq
    %v4436 = vshrl.u32 %v4435, 7
    %v4437 = vsub.s32 %v4434, %v4436
    %v4438 = vrot.slane %v4422, %v4437
    %v4440 = vunpack.c.l.s4 1966171168
    %v4441 = vunpack.c.0.s8 %v4440
    %v4442 = vlaneseq
    %v4443 = vshrl.u32 %v4442, 7
    %v4444 = vsub.s32 %v4441, %v4443
    %v4445 = vrot.slane %v4423, %v4444
    %v4447 = vunpack.c.l.s4 1966171168
    %v4448 = vunpack.c.0.s8 %v4447
    %v4449 = vlaneseq
    %v4450 = vshrl.u32 %v4449, 7
    %v4451 = vsub.s32 %v4448, %v4450
    %v4452 = vrot.slane %v4424, %v4451
    %v4453 = vcombine.low %v4431, %v4438
    %v4454 = vcombine.low %v4445, %v4452
    %v4456 = vunpack.c.l.s4 1966171168
    %v4457 = vunpack.c.0.s8 %v4456
    %v4458 = vlaneseq
    %v4459 = vshrl.u32 %v4458, 7
    %v4460 = vsub.s32 %v4457, %v4459
    %v4461 = vrot.slane %v4453, %v4460
    %v4463 = vunpack.c.l.s4 1966171168
    %v4464 = vunpack.c.0.s8 %v4463
    %v4465 = vlaneseq
    %v4466 = vshrl.u32 %v4465, 7
    %v4467 = vsub.s32 %v4464, %v4466
    %v4468 = vrot.slane %v4454, %v4467
    %v4469 = vcombine.low %v4461, %v4468
    %v4472 = vmul.f32 %v4237, %v4420
    %v4473 = vmul.f32 %v4239, %v4469
    %v4474 = vadd.f32 %v4338, %v4472
    %v4475 = vadd.f32 %v4339, %v4473
    %4476 = vst [vmem:[#allocation2] sm:$0xff] %v4474
    %4477 = vst [vmem:[#allocation2 + $0x8] sm:$0xff] %v4475
    // Predicated region
    $region26: #{glove_loss.1} parent=1 // pred_check
      %p4478 = pneg %p3635
    $region27: #{glove_loss.1} parent=1 // pred_check_branch
      %4480 = sbr.rel (%p4478) target = $region29
    $region28: #{glove_loss.1} parent=1 // pred_region
      %v4481 = vld [vmem:[#allocation2] sm:$0xff]
      %v4482 = vld [vmem:[#allocation2 + $0x8] sm:$0xff]
      %v4485 = vlaneseq
      %v4486 = vshrl.u32 %v4485, 7
      %v4487 = vsub.s32 0, %v4486
      %v4488 = vrot.slane %v4481, %v4487
      %v4489 = vlaneseq
      %v4490 = vshrl.u32 %v4489, 7
      %v4491 = vsub.s32 1, %v4490
      %v4492 = vrot.slane %v4481, %v4491
      %v4493 = vlaneseq
      %v4494 = vshrl.u32 %v4493, 7
      %v4495 = vsub.s32 2, %v4494
      %v4496 = vrot.slane %v4481, %v4495
      %v4497 = vlaneseq
      %v4498 = vshrl.u32 %v4497, 7
      %v4499 = vsub.s32 3, %v4498
      %v4500 = vrot.slane %v4481, %v4499
      %v4501 = vlaneseq
      %v4502 = vshrl.u32 %v4501, 7
      %v4503 = vsub.s32 4, %v4502
      %v4504 = vrot.slane %v4481, %v4503
      %v4505 = vlaneseq
      %v4506 = vshrl.u32 %v4505, 7
      %v4507 = vsub.s32 5, %v4506
      %v4508 = vrot.slane %v4481, %v4507
      %v4509 = vlaneseq
      %v4510 = vshrl.u32 %v4509, 7
      %v4511 = vsub.s32 6, %v4510
      %v4512 = vrot.slane %v4481, %v4511
      %v4513 = vlaneseq
      %v4514 = vshrl.u32 %v4513, 7
      %v4515 = vsub.s32 7, %v4514
      %v4516 = vrot.slane %v4481, %v4515
      %v4517 = vlaneseq
      %v4518 = vshrl.u32 %v4517, 7
      %v4519 = vsub.s32 0, %v4518
      %v4520 = vrot.slane %v4482, %v4519
      %v4521 = vlaneseq
      %v4522 = vshrl.u32 %v4521, 7
      %v4523 = vsub.s32 1, %v4522
      %v4524 = vrot.slane %v4482, %v4523
      %v4525 = vlaneseq
      %v4526 = vshrl.u32 %v4525, 7
      %v4527 = vsub.s32 2, %v4526
      %v4528 = vrot.slane %v4482, %v4527
      %v4529 = vlaneseq
      %v4530 = vshrl.u32 %v4529, 7
      %v4531 = vsub.s32 3, %v4530
      %v4532 = vrot.slane %v4482, %v4531
      %v4533 = vlaneseq
      %v4534 = vshrl.u32 %v4533, 7
      %v4535 = vsub.s32 4, %v4534
      %v4536 = vrot.slane %v4482, %v4535
      %v4537 = vlaneseq
      %v4538 = vshrl.u32 %v4537, 7
      %v4539 = vsub.s32 5, %v4538
      %v4540 = vrot.slane %v4482, %v4539
      %v4541 = vlaneseq
      %v4542 = vshrl.u32 %v4541, 7
      %v4543 = vsub.s32 6, %v4542
      %v4544 = vrot.slane %v4482, %v4543
      %v4545 = vlaneseq
      %v4546 = vshrl.u32 %v4545, 7
      %v4547 = vsub.s32 7, %v4546
      %v4548 = vrot.slane %v4482, %v4547
      %vm4565 = vcmask 1040384
      %v4566 = vsel %vm4565, %v4488, 0.0
      %v4567 = vsel %vm4565, %v4492, 0.0
      %v4568 = vadd.f32 %v4566, %v4567
      %v4569 = vsel %vm4565, %v4496, 0.0
      %v4570 = vadd.f32 %v4568, %v4569
      %v4571 = vsel %vm4565, %v4500, 0.0
      %v4572 = vadd.f32 %v4570, %v4571
      %v4573 = vsel %vm4565, %v4504, 0.0
      %v4574 = vadd.f32 %v4572, %v4573
      %v4575 = vsel %vm4565, %v4508, 0.0
      %v4576 = vadd.f32 %v4574, %v4575
      %v4577 = vsel %vm4565, %v4512, 0.0
      %v4578 = vadd.f32 %v4576, %v4577
      %v4579 = vsel %vm4565, %v4516, 0.0
      %v4580 = vadd.f32 %v4578, %v4579
      %v4581 = vsel %vm4565, %v4520, 0.0
      %v4582 = vadd.f32 %v4580, %v4581
      %v4583 = vsel %vm4565, %v4524, 0.0
      %v4584 = vadd.f32 %v4582, %v4583
      %v4585 = vsel %vm4565, %v4528, 0.0
      %v4586 = vadd.f32 %v4584, %v4585
      %v4587 = vsel %vm4565, %v4532, 0.0
      %v4588 = vadd.f32 %v4586, %v4587
      %v4589 = vsel %vm4565, %v4536, 0.0
      %v4590 = vadd.f32 %v4588, %v4589
      %v4591 = vsel %vm4565, %v4540, 0.0
      %v4592 = vadd.f32 %v4590, %v4591
      %v4593 = vsel %vm4565, %v4544, 0.0
      %v4594 = vadd.f32 %v4592, %v4593
      %v4595 = vsel %vm4565, %v4548, 0.0
      %v4596 = vadd.f32 %v4594, %v4595
      %4597 = vadd.xlane.f32.xlu0 %v4596
      %v4598 = vpop.xlane.xlu0 %4597
      %v4599 = vrot.slane %v4598, 4
      %v4600 = vadd.f32 %v4598, %v4599
      %v4601 = vrot.slane %v4600, 2
      %v4602 = vadd.f32 %v4600, %v4601
      %v4603 = vrot.slane %v4602, 1
      %v4604 = vadd.f32 %v4602, %v4603
      %s4605 = vtos %v4604
      %v4606 = vstv %s4605
      %vm4607 = vcmask 0
      %4608 = vst.msk [vmem:[#allocation3] sm:$0x1] %vm4607, %v4606
    $region29: #{glove_loss.1} parent=1 // pred_fallthru
      _
    // Predicated region
    $region30: #{glove_loss.1} parent=1 // pred_check
      _
    $region31: #{glove_loss.1} parent=1 // pred_check_branch
      %4610 = sbr.rel (0) target = $region33
    $region32: #{glove_loss.1} parent=1 // pred_region
      %s4612 = ssub.s32 16, 16
      %4613 = vsyncadd [#allocation4], %s4612
      %s4615 = sshll.u32 [#allocation3], 4
      %s4616 = int_to_ptr.vmem [resolvable:$true] %s4615
      %4618 = dma.vmem_to_hbm [thread:$0]  %s4616, 16, %s5, [#allocation4]
    $region33: #{glove_loss.1} parent=1 // pred_fallthru
      _
    // Predicated region
    $region34: #{glove_loss.1} parent=1 // pred_check
      _
    $region35: #{glove_loss.1} parent=1 // pred_check_branch
      %4620 = sbr.rel (0) target = $region37
    $region36: #{glove_loss.1} parent=1 // pred_region
      %4621 = dma.done [#allocation4], 16
    $region37: #{glove_loss.1} parent=1 // pred_fallthru
      _
    %4622 = vsyncpa [#allocation4], 1

</llo_original>
